<compile_context>
chip_gen: v7x
topology: tpu7x:2x2x1
jax: 0.10.0
libtpu: 0.0.40
codegen_flags: <defaults>
</compile_context>

<pallas_src>
import functools

import jax
import jax.numpy as jnp
from jax import lax
from jax.experimental import pallas as pl
from jax.experimental.pallas import tpu as pltpu


def _proto_net_loss_kernel(x_ref, y_ref, w1_ref, gamma_ref, beta_ref, w2_ref,
                           out_ref, *, n_x, n_y):
    eps = 1e-5
    hi = lax.Precision.HIGHEST
    gamma = gamma_ref[...]
    beta = beta_ref[...]
    w1 = w1_ref[...]
    w2 = w2_ref[...]

    def project(x, n_rows):
        # ---- Linear 1 (MXU) --------------------------------------------------
        h = jnp.dot(x, w1, preferred_element_type=jnp.float32, precision=hi)

        # ---- training-mode BatchNorm1d stats on the MXU ------------------------
        # (1, n_rows) row of 1/n contracted against h keeps mean / var lane-dense
        # and off the sublane (XLU) reduction path.  Two-pass (centered) variance
        # for stability; result is the biased batch variance, as in torch BN.
        row_avg = jnp.full((1, n_rows), 1.0 / n_rows, dtype=jnp.float32)
        mean = jnp.dot(row_avg, h, preferred_element_type=jnp.float32,
                       precision=hi)                                  # (1, metric)
        hc = h - mean
        var = jnp.dot(row_avg, hc * hc, preferred_element_type=jnp.float32,
                      precision=hi)                                   # (1, metric)

        # Folded BN + ReLU: 2 VALU ops / element, rsqrt goes to the EUP slot.
        scale = gamma * lax.rsqrt(var + eps)
        shift = beta - mean * scale
        hn = jnp.maximum(h * scale + shift, 0.0)

        # ---- Linear 2 (MXU) --------------------------------------------------
        return jnp.dot(hn, w2, preferred_element_type=jnp.float32, precision=hi)

    z1 = project(x_ref[...], n_x)                                     # (n_x, metric)
    z2 = project(y_ref[...], n_y)                                     # (n_y, metric)

    # ---- pairwise squared L2 via Gram matrix on the MXU -----------------------
    # precision=HIGHEST: n1 + n2 - 2*gram suffers cancellation for nearby rows,
    # so bf16-rounded dots would blow past 1e-4 relative error for small dists.
    gram = lax.dot_general(z1, z2, (((1,), (1,)), ((), ())),
                           preferred_element_type=jnp.float32,
                           precision=hi)                              # (n_x, n_y)
    metric = z1.shape[1]
    n1 = jnp.dot(z1 * z1, jnp.ones((metric, 1), jnp.float32),
                 preferred_element_type=jnp.float32, precision=hi)    # (n_x, 1)
    n2 = lax.dot_general(jnp.ones((1, metric), jnp.float32), z2 * z2,
                         (((1,), (1,)), ((), ())),
                         preferred_element_type=jnp.float32,
                         precision=hi)                                # (1, n_y)

    # Clamp: cancellation in the Gram form can yield tiny negatives.
    out_ref[...] = jnp.maximum(n1 + n2 - 2.0 * gram, 0.0)


def proto_net_loss(variations, exemplar, w1, gamma, beta, w2):
    """variations: (n_x, latent), exemplar: (n_y, latent) -> (n_x, n_y) f32."""
    n_x, latent = variations.shape
    n_y = exemplar.shape[0]
    metric = w1.shape[1]

    flops = 2 * ((n_x + n_y) * latent * metric          # Linear 1 (both sets)
                 + (n_x + n_y) * metric * metric        # Linear 2 (both sets)
                 + n_x * n_y * metric)                  # Gram matrix
    bytes_accessed = 4 * ((n_x + n_y) * latent + latent * metric
                          + metric * metric + 2 * metric + n_x * n_y)

    vmem = pl.BlockSpec(memory_space=pltpu.MemorySpace.VMEM)
    kernel = functools.partial(_proto_net_loss_kernel, n_x=n_x, n_y=n_y)

    # TODO(synk): if this loss runs once per episode in a training loop, batch B
    # episodes into ONE pallas_call with grid=(B,) marked "parallel" (weights
    # stay VMEM-resident via constant index_maps; feeds both v7x TensorCores and
    # amortizes launch overhead).  Note: row-tiling n_x/n_y *within* an episode
    # would break training-mode BN statistics — any such tiling needs a two-pass
    # stats structure; also keep any future n_y output tile a multiple of 128
    # (lane-dense stores) and size VMEM against v7x's 64 MiB, not v6e's 128 MiB.
    return pl.pallas_call(
        kernel,
        out_shape=jax.ShapeDtypeStruct((n_x, n_y), jnp.float32),
        in_specs=[vmem] * 6,
        out_specs=vmem,
        cost_estimate=pl.CostEstimate(flops=flops, transcendentals=0,
                                      bytes_accessed=bytes_accessed),
        compiler_params=pltpu.CompilerParams(
            vmem_limit_bytes=32 * 1024 * 1024),
    )(variations, exemplar, w1, gamma, beta, w2)


def _reference(variations, exemplar, w1, gamma, beta, w2):
    """Pure-JAX reference mirroring the PyTorch forward (training-mode BN)."""
    eps = 1e-5
    hi = lax.Precision.HIGHEST

    def project(x):
        h = jnp.dot(x, w1, precision=hi)
        mean = jnp.mean(h, axis=0, keepdims=True)
        var = jnp.mean((h - mean) ** 2, axis=0, keepdims=True)
        hn = (h - mean) / jnp.sqrt(var + eps) * gamma + beta
        hn = jnp.maximum(hn, 0.0)
        return jnp.dot(hn, w2, precision=hi)

    z1 = project(variations)
    z2 = project(exemplar)
    return jnp.sum((z1[:, None, :] - z2[None, :, :]) ** 2, axis=2)


if __name__ == "__main__":
    latent_size = 32
    metric_layer_size = 128
    n_x = 8   # variations batch
    n_y = 8   # exemplar batch

    key = jax.random.PRNGKey(0)
    k_var, k_ex, k_w1, k_w2 = jax.random.split(key, 4)

    variations = jax.random.normal(k_var, (n_x, latent_size), dtype=jnp.float32)
    exemplar = jax.random.normal(k_ex, (n_y, latent_size), dtype=jnp.float32)

    # Deterministic parameter init (kaiming-uniform-like scale), stored as
    # (in_features, out_features).
    bound1 = 1.0 / (latent_size ** 0.5)
    w1 = jax.random.uniform(k_w1, (latent_size, metric_layer_size),
                            minval=-bound1, maxval=bound1, dtype=jnp.float32)
    bound2 = 1.0 / (metric_layer_size ** 0.5)
    w2 = jax.random.uniform(k_w2, (metric_layer_size, metric_layer_size),
                            minval=-bound2, maxval=bound2, dtype=jnp.float32)
    gamma = jnp.ones((1, metric_layer_size), dtype=jnp.float32)  # BN weight
    beta = jnp.zeros((1, metric_layer_size), dtype=jnp.float32)  # BN bias

    out = proto_net_loss(variations, exemplar, w1, gamma, beta, w2)
    out = jax.block_until_ready(out)

    ref = _reference(variations, exemplar, w1, gamma, beta, w2)
    assert out.shape == (n_x, n_y)
    assert jnp.allclose(out, ref, rtol=1e-4, atol=1e-4), "mismatch vs reference"

    print("KERNEL_OK")
</pallas_src>

<mosaic_0001>
module attributes {stable_mosaic.version = 11 : i64} {
  func.func @_proto_net_loss_kernel(%arg0: memref<8x32xf32, #tpu.memory_space<vmem>>, %arg1: memref<8x32xf32, #tpu.memory_space<vmem>>, %arg2: memref<32x128xf32, #tpu.memory_space<vmem>>, %arg3: memref<1x128xf32, #tpu.memory_space<vmem>>, %arg4: memref<1x128xf32, #tpu.memory_space<vmem>>, %arg5: memref<128x128xf32, #tpu.memory_space<vmem>>, %arg6: memref<8x8xf32, #tpu.memory_space<vmem>>) attributes {dimension_semantics = [], scalar_prefetch = 0 : i64, scratch_operands = 0 : i64, tpu.core_type = #tpu.core_type<tc>} {
    %c0 = arith.constant 0 : index
    %c0_0 = arith.constant 0 : index
    %0 = vector.load %arg3[%c0, %c0_0] : memref<1x128xf32, #tpu.memory_space<vmem>>, vector<1x128xf32>
    %c0_1 = arith.constant 0 : index
    %c0_2 = arith.constant 0 : index
    %1 = vector.load %arg4[%c0_1, %c0_2] : memref<1x128xf32, #tpu.memory_space<vmem>>, vector<1x128xf32>
    %c0_3 = arith.constant 0 : index
    %c0_4 = arith.constant 0 : index
    %2 = vector.load %arg2[%c0_3, %c0_4] : memref<32x128xf32, #tpu.memory_space<vmem>>, vector<32x128xf32>
    %c0_5 = arith.constant 0 : index
    %c0_6 = arith.constant 0 : index
    %3 = vector.load %arg5[%c0_5, %c0_6] : memref<128x128xf32, #tpu.memory_space<vmem>>, vector<128x128xf32>
    %c0_7 = arith.constant 0 : index
    %c0_8 = arith.constant 0 : index
    %4 = vector.load %arg0[%c0_7, %c0_8] : memref<8x32xf32, #tpu.memory_space<vmem>>, vector<8x32xf32>
    %cst = arith.constant dense<0.000000e+00> : vector<8x128xf32>
    %5 = tpu.matmul %4, %2, %cst {dimension_numbers = #tpu.dot_dimension_numbers<[1], [0], [0], [1], [0, 0, 1, 1], [], []>, precision = #tpu.contract_precision<fp32>} : vector<8x32xf32>, vector<32x128xf32>, vector<8x128xf32> -> vector<8x128xf32>
    %cst_9 = arith.constant 1.250000e-01 : f32
    %6 = vector.broadcast %cst_9 : f32 to vector<1x8xf32>
    %cst_10 = arith.constant dense<0.000000e+00> : vector<1x128xf32>
    %7 = tpu.matmul %6, %5, %cst_10 {dimension_numbers = #tpu.dot_dimension_numbers<[1], [0], [0], [1], [0, 0, 1, 1], [], []>, precision = #tpu.contract_precision<fp32>} : vector<1x8xf32>, vector<8x128xf32>, vector<1x128xf32> -> vector<1x128xf32>
    %8 = vector.broadcast %7 : vector<1x128xf32> to vector<8x128xf32>
    %9 = arith.subf %5, %8 : vector<8x128xf32>
    %10 = arith.mulf %9, %9 : vector<8x128xf32>
    %cst_11 = arith.constant dense<0.000000e+00> : vector<1x128xf32>
    %11 = tpu.matmul %6, %10, %cst_11 {dimension_numbers = #tpu.dot_dimension_numbers<[1], [0], [0], [1], [0, 0, 1, 1], [], []>, precision = #tpu.contract_precision<fp32>} : vector<1x8xf32>, vector<8x128xf32>, vector<1x128xf32> -> vector<1x128xf32>
    %cst_12 = arith.constant 9.99999974E-6 : f32
    %12 = vector.broadcast %cst_12 : f32 to vector<1x128xf32>
    %13 = arith.addf %11, %12 : vector<1x128xf32>
    %14 = math.rsqrt %13 : vector<1x128xf32>
    %15 = arith.mulf %0, %14 : vector<1x128xf32>
    %16 = arith.mulf %7, %15 : vector<1x128xf32>
    %17 = arith.subf %1, %16 : vector<1x128xf32>
    %18 = vector.broadcast %15 : vector<1x128xf32> to vector<8x128xf32>
    %19 = arith.mulf %5, %18 : vector<8x128xf32>
    %20 = vector.broadcast %17 : vector<1x128xf32> to vector<8x128xf32>
    %21 = arith.addf %19, %20 : vector<8x128xf32>
    %cst_13 = arith.constant 0.000000e+00 : f32
    %22 = vector.broadcast %cst_13 : f32 to vector<8x128xf32>
    %23 = arith.maximumf %21, %22 : vector<8x128xf32>
    %cst_14 = arith.constant dense<0.000000e+00> : vector<8x128xf32>
    %24 = tpu.matmul %23, %3, %cst_14 {dimension_numbers = #tpu.dot_dimension_numbers<[1], [0], [0], [1], [0, 0, 1, 1], [], []>, precision = #tpu.contract_precision<fp32>} : vector<8x128xf32>, vector<128x128xf32>, vector<8x128xf32> -> vector<8x128xf32>
    %c0_15 = arith.constant 0 : index
    %c0_16 = arith.constant 0 : index
    %25 = vector.load %arg1[%c0_15, %c0_16] : memref<8x32xf32, #tpu.memory_space<vmem>>, vector<8x32xf32>
    %cst_17 = arith.constant dense<0.000000e+00> : vector<8x128xf32>
    %26 = tpu.matmul %25, %2, %cst_17 {dimension_numbers = #tpu.dot_dimension_numbers<[1], [0], [0], [1], [0, 0, 1, 1], [], []>, precision = #tpu.contract_precision<fp32>} : vector<8x32xf32>, vector<32x128xf32>, vector<8x128xf32> -> vector<8x128xf32>
    %cst_18 = arith.constant 1.250000e-01 : f32
    %27 = vector.broadcast %cst_18 : f32 to vector<1x8xf32>
    %cst_19 = arith.constant dense<0.000000e+00> : vector<1x128xf32>
    %28 = tpu.matmul %27, %26, %cst_19 {dimension_numbers = #tpu.dot_dimension_numbers<[1], [0], [0], [1], [0, 0, 1, 1], [], []>, precision = #tpu.contract_precision<fp32>} : vector<1x8xf32>, vector<8x128xf32>, vector<1x128xf32> -> vector<1x128xf32>
    %29 = vector.broadcast %28 : vector<1x128xf32> to vector<8x128xf32>
    %30 = arith.subf %26, %29 : vector<8x128xf32>
    %31 = arith.mulf %30, %30 : vector<8x128xf32>
    %cst_20 = arith.constant dense<0.000000e+00> : vector<1x128xf32>
    %32 = tpu.matmul %27, %31, %cst_20 {dimension_numbers = #tpu.dot_dimension_numbers<[1], [0], [0], [1], [0, 0, 1, 1], [], []>, precision = #tpu.contract_precision<fp32>} : vector<1x8xf32>, vector<8x128xf32>, vector<1x128xf32> -> vector<1x128xf32>
    %cst_21 = arith.constant 9.99999974E-6 : f32
    %33 = vector.broadcast %cst_21 : f32 to vector<1x128xf32>
    %34 = arith.addf %32, %33 : vector<1x128xf32>
    %35 = math.rsqrt %34 : vector<1x128xf32>
    %36 = arith.mulf %0, %35 : vector<1x128xf32>
    %37 = arith.mulf %28, %36 : vector<1x128xf32>
    %38 = arith.subf %1, %37 : vector<1x128xf32>
    %39 = vector.broadcast %36 : vector<1x128xf32> to vector<8x128xf32>
    %40 = arith.mulf %26, %39 : vector<8x128xf32>
    %41 = vector.broadcast %38 : vector<1x128xf32> to vector<8x128xf32>
    %42 = arith.addf %40, %41 : vector<8x128xf32>
    %cst_22 = arith.constant 0.000000e+00 : f32
    %43 = vector.broadcast %cst_22 : f32 to vector<8x128xf32>
    %44 = arith.maximumf %42, %43 : vector<8x128xf32>
    %cst_23 = arith.constant dense<0.000000e+00> : vector<8x128xf32>
    %45 = tpu.matmul %44, %3, %cst_23 {dimension_numbers = #tpu.dot_dimension_numbers<[1], [0], [0], [1], [0, 0, 1, 1], [], []>, precision = #tpu.contract_precision<fp32>} : vector<8x128xf32>, vector<128x128xf32>, vector<8x128xf32> -> vector<8x128xf32>
    %cst_24 = arith.constant dense<0.000000e+00> : vector<8x8xf32>
    %46 = tpu.matmul %24, %45, %cst_24 {dimension_numbers = #tpu.dot_dimension_numbers<[1], [1], [0], [0], [0, 0, 1, 0], [], []>, precision = #tpu.contract_precision<fp32>} : vector<8x128xf32>, vector<8x128xf32>, vector<8x8xf32> -> vector<8x8xf32>
    %47 = arith.mulf %24, %24 : vector<8x128xf32>
    %cst_25 = arith.constant 1.000000e+00 : f32
    %48 = vector.broadcast %cst_25 : f32 to vector<128x1xf32>
    %cst_26 = arith.constant dense<0.000000e+00> : vector<8x1xf32>
    %49 = tpu.matmul %47, %48, %cst_26 {dimension_numbers = #tpu.dot_dimension_numbers<[1], [0], [0], [1], [0, 0, 1, 1], [], []>, precision = #tpu.contract_precision<fp32>} : vector<8x128xf32>, vector<128x1xf32>, vector<8x1xf32> -> vector<8x1xf32>
    %cst_27 = arith.constant 1.000000e+00 : f32
    %50 = vector.broadcast %cst_27 : f32 to vector<1x128xf32>
    %51 = arith.mulf %45, %45 : vector<8x128xf32>
    %cst_28 = arith.constant dense<0.000000e+00> : vector<1x8xf32>
    %52 = tpu.matmul %50, %51, %cst_28 {dimension_numbers = #tpu.dot_dimension_numbers<[1], [1], [0], [0], [0, 0, 1, 0], [], []>, precision = #tpu.contract_precision<fp32>} : vector<1x128xf32>, vector<8x128xf32>, vector<1x8xf32> -> vector<1x8xf32>
    %53 = vector.broadcast %49 : vector<8x1xf32> to vector<8x8xf32>
    %54 = vector.broadcast %52 : vector<1x8xf32> to vector<8x8xf32>
    %55 = arith.addf %53, %54 : vector<8x8xf32>
    %cst_29 = arith.constant 2.000000e+00 : f32
    %56 = vector.broadcast %cst_29 : f32 to vector<8x8xf32>
    %57 = arith.mulf %56, %46 : vector<8x8xf32>
    %58 = arith.subf %55, %57 : vector<8x8xf32>
    %cst_30 = arith.constant 0.000000e+00 : f32
    %59 = vector.broadcast %cst_30 : f32 to vector<8x8xf32>
    %60 = arith.maximumf %58, %59 : vector<8x8xf32>
    %c0_31 = arith.constant 0 : index
    %c0_32 = arith.constant 0 : index
    %61 = vector.load %arg6[%c0_31, %c0_32] : memref<8x8xf32, #tpu.memory_space<vmem>>, vector<8x8xf32>
    tpu.vector_store %arg6[%c0_31, %c0_32], %60 {strides = array<i32>} : memref<8x8xf32, #tpu.memory_space<vmem>>, vector<8x8xf32>,
    return
  }
}

</mosaic_0001>

<llo_original>
// kernel: tpu_custom_call.1
$region0: #{tpu_custom_call.1}
  #allocation0 [shape = 'u32[]', space=smem, size = 0x4, offset = 0x4, fixed_abs, tag = 'smem constant byte address 0x4 - core index']
  #allocation1 [shape = 'u32[144,128]{1,0:T(1,128)}', space=vmem, size = 0x12000, scoped, tag = 'internal scratch']
  %s0 = inlined_call_operand.hbm [shape: f32[8,32], index: 0, kind: input, shape index: {}]
  %s1 = inlined_call_operand.hbm [shape: f32[8,32], index: 1, kind: input, shape index: {}]
  %s2 = inlined_call_operand.hbm [shape: f32[32,128], index: 2, kind: input, shape index: {}]
  %s3 = inlined_call_operand.vmem [shape: f32[1,128], index: 3, kind: input, shape index: {}]
  %s4 = inlined_call_operand.vmem [shape: f32[1,128], index: 4, kind: input, shape index: {}]
  %s5 = inlined_call_operand.hbm [shape: f32[128,128], index: 5, kind: input, shape index: {}]
  %s6 = inlined_call_operand.hbm [shape: f32[8,8], index: 6, kind: output, shape index: {}]
  %s7 = sld [smem:[#allocation0]]
  $region50: #{tpu_custom_call.1} parent=0
    _
  %s9 = ssub.s32 1, %s7
  %s10 = scalar_select 0, %s9, %s7
  $region1: #{tpu_custom_call.1} parent=0
    #allocation2 [shape = 'u8[4096]{0}', space=vmem, size = 0x1000, scoped, tag = 'input window, operand 0, single buffered']
    #allocation3 [shape = 's32[1]{0}', space=sflag, size = 0x4, scoped, tag = 'scoped memory for tpu_custom_call.1']
    #allocation4 [shape = 's32[1]{0}', space=sflag, size = 0x4, scoped, tag = 'scoped memory for tpu_custom_call.1']
    #allocation5 [shape = 'u8[4096]{0}', space=vmem, size = 0x1000, scoped, tag = 'input window, operand 1, single buffered']
    #allocation6 [shape = 's32[1]{0}', space=sflag, size = 0x4, scoped, tag = 'scoped memory for tpu_custom_call.1']
    #allocation7 [shape = 'u8[16384]{0}', space=vmem, size = 0x4000, scoped, tag = 'input window, operand 2, single buffered']
    #allocation8 [shape = 'u8[65536]{0}', space=vmem, size = 0x10000, scoped, tag = 'input window, operand 5, single buffered']
    #allocation9 [shape = 's32[1]{0}', space=sflag, size = 0x4, scoped, tag = 'scoped memory for tpu_custom_call.1']
    #allocation10 [shape = 'u8[4096]{0}', space=vmem, size = 0x1000, scoped, tag = 'output window, operand 0, single buffered']
    %11 = vsyncpa [#allocation3], 0
    %12 = vsyncpa [#allocation6], 0
    %13 = vsyncpa [#allocation9], 0
    %14 = vsyncpa [#allocation4], 0
    // Predicated region
    $region2: #{tpu_custom_call.1} parent=1 // pred_check
      _
    $region3: #{tpu_custom_call.1} parent=1 // pred_check_branch
      %16 = sbr.rel (0) target = $region5
    $region4: #{tpu_custom_call.1} parent=1 // pred_region
      %s18 = ssub.s32 128, 128
      %19 = vsyncadd [#allocation3], %s18
      %s21 = sshll.u32 [#allocation2], 4
      %s22 = int_to_ptr.vmem [resolvable:$true] %s21
      %24 = dma.hbm_to_vmem [thread:$0]  %s0, 128, %s22, [#allocation3]
    $region5: #{tpu_custom_call.1} parent=1 // pred_fallthru
      _
    // Predicated region
    $region6: #{tpu_custom_call.1} parent=1 // pred_check
      _
    $region7: #{tpu_custom_call.1} parent=1 // pred_check_branch
      %26 = sbr.rel (0) target = $region9
    $region8: #{tpu_custom_call.1} parent=1 // pred_region
      %s28 = ssub.s32 128, 128
      %29 = vsyncadd [#allocation6], %s28
      %s31 = sshll.u32 [#allocation5], 4
      %s32 = int_to_ptr.vmem [resolvable:$true] %s31
      %34 = dma.hbm_to_vmem [thread:$0]  %s1, 128, %s32, [#allocation6]
    $region9: #{tpu_custom_call.1} parent=1 // pred_fallthru
      _
    // Predicated region
    $region10: #{tpu_custom_call.1} parent=1 // pred_check
      _
    $region11: #{tpu_custom_call.1} parent=1 // pred_check_branch
      %36 = sbr.rel (0) target = $region13
    $region12: #{tpu_custom_call.1} parent=1 // pred_region
      %s38 = ssub.s32 512, 512
      %39 = vsyncadd [#allocation6], %s38
      %s40 = sshll.u32 [#allocation7], 4
      %s41 = int_to_ptr.vmem [resolvable:$true] %s40
      %46 = dma.hbm_to_vmem [thread:$0]  %s2, 512, %s41, [#allocation6], 128, 128, 8
    $region13: #{tpu_custom_call.1} parent=1 // pred_fallthru
      _
    // Predicated region
    $region14: #{tpu_custom_call.1} parent=1 // pred_check
      _
    $region15: #{tpu_custom_call.1} parent=1 // pred_check_branch
      %48 = sbr.rel (0) target = $region17
    $region16: #{tpu_custom_call.1} parent=1 // pred_region
      _
    $region17: #{tpu_custom_call.1} parent=1 // pred_fallthru
      _
    // Predicated region
    $region18: #{tpu_custom_call.1} parent=1 // pred_check
      _
    $region19: #{tpu_custom_call.1} parent=1 // pred_check_branch
      %50 = sbr.rel (0) target = $region21
    $region20: #{tpu_custom_call.1} parent=1 // pred_region
      _
    $region21: #{tpu_custom_call.1} parent=1 // pred_fallthru
      _
    // Predicated region
    $region22: #{tpu_custom_call.1} parent=1 // pred_check
      _
    $region23: #{tpu_custom_call.1} parent=1 // pred_check_branch
      %52 = sbr.rel (0) target = $region25
    $region24: #{tpu_custom_call.1} parent=1 // pred_region
      %s54 = ssub.s32 2048, 2048
      %55 = vsyncadd [#allocation9], %s54
      %s56 = sshll.u32 [#allocation8], 4
      %s57 = int_to_ptr.vmem [resolvable:$true] %s56
      %62 = dma.hbm_to_vmem [thread:$0]  %s5, 2048, %s57, [#allocation9], 128, 128, 8
    $region25: #{tpu_custom_call.1} parent=1 // pred_fallthru
      _
    // Predicated region
    $region26: #{tpu_custom_call.1} parent=1 // pred_check
      _
    $region27: #{tpu_custom_call.1} parent=1 // pred_check_branch
      %64 = sbr.rel (0) target = $region29
    $region28: #{tpu_custom_call.1} parent=1 // pred_region
      %65 = dma.done [#allocation3], 128
    $region29: #{tpu_custom_call.1} parent=1 // pred_fallthru
      _
    // Predicated region
    $region30: #{tpu_custom_call.1} parent=1 // pred_check
      _
    $region31: #{tpu_custom_call.1} parent=1 // pred_check_branch
      %67 = sbr.rel (0) target = $region33
    $region32: #{tpu_custom_call.1} parent=1 // pred_region
      %68 = dma.done [#allocation6], 128
    $region33: #{tpu_custom_call.1} parent=1 // pred_fallthru
      _
    // Predicated region
    $region34: #{tpu_custom_call.1} parent=1 // pred_check
      _
    $region35: #{tpu_custom_call.1} parent=1 // pred_check_branch
      %70 = sbr.rel (0) target = $region37
    $region36: #{tpu_custom_call.1} parent=1 // pred_region
      %71 = dma.done [#allocation6], 512
    $region37: #{tpu_custom_call.1} parent=1 // pred_fallthru
      _
    // Predicated region
    $region38: #{tpu_custom_call.1} parent=1 // pred_check
      _
    $region39: #{tpu_custom_call.1} parent=1 // pred_check_branch
      %73 = sbr.rel (0) target = $region41
    $region40: #{tpu_custom_call.1} parent=1 // pred_region
      %74 = dma.done [#allocation9], 2048
    $region41: #{tpu_custom_call.1} parent=1 // pred_fallthru
      _
    %v75 = vld [vmem:[%s3] sm:$0x1]
    %v76 = vld [vmem:[%s4] sm:$0x1]
    %v77 = vld [vmem:[#allocation7] sm:$0xff]
    %v78 = vld [vmem:[#allocation7 + $0x8] sm:$0xff]
    %v79 = vld [vmem:[#allocation7 + $0x10] sm:$0xff]
    %v80 = vld [vmem:[#allocation7 + $0x18] sm:$0xff]
    %v81 = vld [vmem:[#allocation8] sm:$0xff]
    %v82 = vld [vmem:[#allocation8 + $0x8] sm:$0xff]
    %v83 = vld [vmem:[#allocation8 + $0x10] sm:$0xff]
    %v84 = vld [vmem:[#allocation8 + $0x18] sm:$0xff]
    %v85 = vld [vmem:[#allocation8 + $0x20] sm:$0xff]
    %v86 = vld [vmem:[#allocation8 + $0x28] sm:$0xff]
    %v87 = vld [vmem:[#allocation8 + $0x30] sm:$0xff]
    %v88 = vld [vmem:[#allocation8 + $0x38] sm:$0xff]
    %v89 = vld [vmem:[#allocation8 + $0x40] sm:$0xff]
    %v90 = vld [vmem:[#allocation8 + $0x48] sm:$0xff]
    %v91 = vld [vmem:[#allocation8 + $0x50] sm:$0xff]
    %v92 = vld [vmem:[#allocation8 + $0x58] sm:$0xff]
    %v93 = vld [vmem:[#allocation8 + $0x60] sm:$0xff]
    %v94 = vld [vmem:[#allocation8 + $0x68] sm:$0xff]
    %v95 = vld [vmem:[#allocation8 + $0x70] sm:$0xff]
    %v96 = vld [vmem:[#allocation8 + $0x78] sm:$0xff]
    %v97 = vld [vmem:[#allocation2] sm:$0xff]
    %vm98 = vcmask 261120
    %v100 = vsel %vm98, %v97, 0
    %102 = vmatprep.subr.mxu0 0.0
    %v103 = vand.u32 %v77, 4294901760
    %104 = vmatpush1.msra.mxu0 %v103
    %105 = vmatprep.subr.mxu0 0.0
    %v106 = vand.u32 %v78, 4294901760
    %107 = vmatpush1.msra.mxu0 %v106
    %108 = vmatprep.subr.mxu0 0.0
    %v109 = vand.u32 %v79, 4294901760
    %110 = vmatpush1.msra.mxu0 %v109
    %111 = vmatprep.subr.mxu0 0.0
    %v112 = vand.u32 %v80, 4294901760
    %113 = vmatpush1.msra.mxu0 %v112
    %114 = vmatprep.subr.mxu0 0.0
    %115 = vmatpush1.msra.mxu0 0.0
    %116 = vmatprep.subr.mxu0 0.0
    %117 = vmatpush1.msra.mxu0 0.0
    %118 = vmatprep.subr.mxu0 0.0
    %119 = vmatpush1.msra.mxu0 0.0
    %120 = vmatprep.subr.mxu0 0.0
    %121 = vmatpush1.msra.mxu0 0.0
    %122 = vmatprep.subr.mxu0 0.0
    %123 = vmatpush1.msra.mxu0 0.0
    %124 = vmatprep.subr.mxu0 0.0
    %125 = vmatpush1.msra.mxu0 0.0
    %126 = vmatprep.subr.mxu0 0.0
    %127 = vmatpush1.msra.mxu0 0.0
    %128 = vmatprep.subr.mxu0 0.0
    %129 = vmatpush1.msra.mxu0 0.0
    %130 = vmatprep.subr.mxu0 0.0
    %131 = vmatpush1.msra.mxu0 0.0
    %132 = vmatprep.subr.mxu0 0.0
    %133 = vmatpush1.msra.mxu0 0.0
    %134 = vmatprep.subr.mxu0 0.0
    %135 = vmatpush1.msra.mxu0 0.0
    %136 = vmatprep.subr.mxu0 0.0
    %137 = vmatpush1.msra.mxu0 0.0
    %138 = vmatprep.subr.mxu0 0.0
    %139 = vmatpush1.msra.mxu0 0.0
    %140 = vmatprep.subr.mxu0 0.0
    %141 = vmatpush1.msra.mxu0 0.0
    %142 = vmatprep.subr.mxu0 0.0
    %143 = vmatpush1.msra.mxu0 0.0
    %144 = vmatprep.subr.mxu0 0.0
    %145 = vmatpush1.msra.mxu0 0.0
    %146 = vmatprep.subr.mxu0 0.0
    %147 = vmatpush1.msra.mxu0 0.0
    %148 = vmatprep.subr.mxu0 0.0
    %149 = vmatpush1.msra.mxu0 0.0
    %150 = vmatprep.subr.mxu0 0.0
    %151 = vmatpush1.msra.mxu0 0.0
    %152 = vmatprep.subr.mxu0 0.0
    %153 = vmatpush1.msra.mxu0 0.0
    %154 = vmatprep.subr.mxu0 0.0
    %155 = vmatpush1.msra.mxu0 0.0
    %156 = vmatprep.subr.mxu0 0.0
    %157 = vmatpush1.msra.mxu0 0.0
    %158 = vmatprep.subr.mxu0 0.0
    %159 = vmatpush1.msra.mxu0 0.0
    %160 = vmatprep.subr.mxu0 0.0
    %161 = vmatpush1.msra.mxu0 0.0
    %162 = vmatprep.subr.mxu0 0.0
    %163 = vmatpush1.msra.mxu0 0.0
    %164 = vmatprep.subr.mxu0 0.0
    %165 = vmatpush1.msra.mxu0 0.0
    %166 = vmatprep.subr.mxu0 0.0
    %167 = vmatpush1.msra.mxu0 0.0
    %168 = vmatprep.subr.mxu0 0.0
    %169 = vmatpush1.msra.mxu0 0.0
    %170 = vmatprep.mubr.f32.mxu0 0.0
    %v171 = vand.u32 %v100, 4294901760
    %v172 = vsub.f32 %v100, %v171
    %v173 = vand.u32 %v172, 4294901760
    %v174 = vsub.f32 %v172, %v173
    %v175 = vand.u32 %v174, 4294901760
    %176 = vmatmul.mubr.f32.gmra.mrb[0].mxu0 %v175
    %v177 = vpop.f32.mrb[0].mxu0
    %v178 = vadd.f32 0.0, %v177
    %v179 = vpop.f32.mrb[0].mxu0
    %180 = vdwg.mxu0
    %181 = vmatprep.subr.mxu0 0.0
    %v182 = vand.u32 %v77, 4294901760
    %v183 = vsub.f32 %v77, %v182
    %v184 = vand.u32 %v183, 4294901760
    %v185 = vsub.f32 %v183, %v184
    %v186 = vand.u32 %v185, 4294901760
    %187 = vmatpush1.msra.mxu0 %v186
    %188 = vmatprep.subr.mxu0 0.0
    %v189 = vand.u32 %v78, 4294901760
    %v190 = vsub.f32 %v78, %v189
    %v191 = vand.u32 %v190, 4294901760
    %v192 = vsub.f32 %v190, %v191
    %v193 = vand.u32 %v192, 4294901760
    %194 = vmatpush1.msra.mxu0 %v193
    %195 = vmatprep.subr.mxu0 0.0
    %v196 = vand.u32 %v79, 4294901760
    %v197 = vsub.f32 %v79, %v196
    %v198 = vand.u32 %v197, 4294901760
    %v199 = vsub.f32 %v197, %v198
    %v200 = vand.u32 %v199, 4294901760
    %201 = vmatpush1.msra.mxu0 %v200
    %202 = vmatprep.subr.mxu0 0.0
    %v203 = vand.u32 %v80, 4294901760
    %v204 = vsub.f32 %v80, %v203
    %v205 = vand.u32 %v204, 4294901760
    %v206 = vsub.f32 %v204, %v205
    %v207 = vand.u32 %v206, 4294901760
    %208 = vmatpush1.msra.mxu0 %v207
    %209 = vmatprep.subr.mxu0 0.0
    %210 = vmatpush1.msra.mxu0 0.0
    %211 = vmatprep.subr.mxu0 0.0
    %212 = vmatpush1.msra.mxu0 0.0
    %213 = vmatprep.subr.mxu0 0.0
    %214 = vmatpush1.msra.mxu0 0.0
    %215 = vmatprep.subr.mxu0 0.0
    %216 = vmatpush1.msra.mxu0 0.0
    %217 = vmatprep.subr.mxu0 0.0
    %218 = vmatpush1.msra.mxu0 0.0
    %219 = vmatprep.subr.mxu0 0.0
    %220 = vmatpush1.msra.mxu0 0.0
    %221 = vmatprep.subr.mxu0 0.0
    %222 = vmatpush1.msra.mxu0 0.0
    %223 = vmatprep.subr.mxu0 0.0
    %224 = vmatpush1.msra.mxu0 0.0
    %225 = vmatprep.subr.mxu0 0.0
    %226 = vmatpush1.msra.mxu0 0.0
    %227 = vmatprep.subr.mxu0 0.0
    %228 = vmatpush1.msra.mxu0 0.0
    %229 = vmatprep.subr.mxu0 0.0
    %230 = vmatpush1.msra.mxu0 0.0
    %231 = vmatprep.subr.mxu0 0.0
    %232 = vmatpush1.msra.mxu0 0.0
    %233 = vmatprep.subr.mxu0 0.0
    %234 = vmatpush1.msra.mxu0 0.0
    %235 = vmatprep.subr.mxu0 0.0
    %236 = vmatpush1.msra.mxu0 0.0
    %237 = vmatprep.subr.mxu0 0.0
    %238 = vmatpush1.msra.mxu0 0.0
    %239 = vmatprep.subr.mxu0 0.0
    %240 = vmatpush1.msra.mxu0 0.0
    %241 = vmatprep.subr.mxu0 0.0
    %242 = vmatpush1.msra.mxu0 0.0
    %243 = vmatprep.subr.mxu0 0.0
    %244 = vmatpush1.msra.mxu0 0.0
    %245 = vmatprep.subr.mxu0 0.0
    %246 = vmatpush1.msra.mxu0 0.0
    %247 = vmatprep.subr.mxu0 0.0
    %248 = vmatpush1.msra.mxu0 0.0
    %249 = vmatprep.subr.mxu0 0.0
    %250 = vmatpush1.msra.mxu0 0.0
    %251 = vmatprep.subr.mxu0 0.0
    %252 = vmatpush1.msra.mxu0 0.0
    %253 = vmatprep.subr.mxu0 0.0
    %254 = vmatpush1.msra.mxu0 0.0
    %255 = vmatprep.subr.mxu0 0.0
    %256 = vmatpush1.msra.mxu0 0.0
    %257 = vmatprep.subr.mxu0 0.0
    %258 = vmatpush1.msra.mxu0 0.0
    %259 = vmatprep.subr.mxu0 0.0
    %260 = vmatpush1.msra.mxu0 0.0
    %261 = vmatprep.subr.mxu0 0.0
    %262 = vmatpush1.msra.mxu0 0.0
    %263 = vmatprep.subr.mxu0 0.0
    %264 = vmatpush1.msra.mxu0 0.0
    %265 = vmatprep.mubr.f32.mxu0 0.0
    %v266 = vand.u32 %v100, 4294901760
    %267 = vmatmul.mubr.f32.gmra.mrb[0].mxu0 %v266
    %v268 = vpop.f32.mrb[0].mxu0
    %v269 = vadd.f32 %v178, %v268
    %v270 = vpop.f32.mrb[0].mxu0
    %271 = vdwg.mxu0
    %272 = vmatprep.subr.mxu0 0.0
    %v273 = vand.u32 %v77, 4294901760
    %v274 = vsub.f32 %v77, %v273
    %275 = vmatpush1.msra.mxu0 %v274
    %276 = vmatprep.subr.mxu0 0.0
    %v277 = vand.u32 %v78, 4294901760
    %v278 = vsub.f32 %v78, %v277
    %279 = vmatpush1.msra.mxu0 %v278
    %280 = vmatprep.subr.mxu0 0.0
    %v281 = vand.u32 %v79, 4294901760
    %v282 = vsub.f32 %v79, %v281
    %283 = vmatpush1.msra.mxu0 %v282
    %284 = vmatprep.subr.mxu0 0.0
    %v285 = vand.u32 %v80, 4294901760
    %v286 = vsub.f32 %v80, %v285
    %287 = vmatpush1.msra.mxu0 %v286
    %288 = vmatprep.subr.mxu0 0.0
    %289 = vmatpush1.msra.mxu0 0.0
    %290 = vmatprep.subr.mxu0 0.0
    %291 = vmatpush1.msra.mxu0 0.0
    %292 = vmatprep.subr.mxu0 0.0
    %293 = vmatpush1.msra.mxu0 0.0
    %294 = vmatprep.subr.mxu0 0.0
    %295 = vmatpush1.msra.mxu0 0.0
    %296 = vmatprep.subr.mxu0 0.0
    %297 = vmatpush1.msra.mxu0 0.0
    %298 = vmatprep.subr.mxu0 0.0
    %299 = vmatpush1.msra.mxu0 0.0
    %300 = vmatprep.subr.mxu0 0.0
    %301 = vmatpush1.msra.mxu0 0.0
    %302 = vmatprep.subr.mxu0 0.0
    %303 = vmatpush1.msra.mxu0 0.0
    %304 = vmatprep.subr.mxu0 0.0
    %305 = vmatpush1.msra.mxu0 0.0
    %306 = vmatprep.subr.mxu0 0.0
    %307 = vmatpush1.msra.mxu0 0.0
    %308 = vmatprep.subr.mxu0 0.0
    %309 = vmatpush1.msra.mxu0 0.0
    %310 = vmatprep.subr.mxu0 0.0
    %311 = vmatpush1.msra.mxu0 0.0
    %312 = vmatprep.subr.mxu0 0.0
    %313 = vmatpush1.msra.mxu0 0.0
    %314 = vmatprep.subr.mxu0 0.0
    %315 = vmatpush1.msra.mxu0 0.0
    %316 = vmatprep.subr.mxu0 0.0
    %317 = vmatpush1.msra.mxu0 0.0
    %318 = vmatprep.subr.mxu0 0.0
    %319 = vmatpush1.msra.mxu0 0.0
    %320 = vmatprep.subr.mxu0 0.0
    %321 = vmatpush1.msra.mxu0 0.0
    %322 = vmatprep.subr.mxu0 0.0
    %323 = vmatpush1.msra.mxu0 0.0
    %324 = vmatprep.subr.mxu0 0.0
    %325 = vmatpush1.msra.mxu0 0.0
    %326 = vmatprep.subr.mxu0 0.0
    %327 = vmatpush1.msra.mxu0 0.0
    %328 = vmatprep.subr.mxu0 0.0
    %329 = vmatpush1.msra.mxu0 0.0
    %330 = vmatprep.subr.mxu0 0.0
    %331 = vmatpush1.msra.mxu0 0.0
    %332 = vmatprep.subr.mxu0 0.0
    %333 = vmatpush1.msra.mxu0 0.0
    %334 = vmatprep.subr.mxu0 0.0
    %335 = vmatpush1.msra.mxu0 0.0
    %336 = vmatprep.subr.mxu0 0.0
    %337 = vmatpush1.msra.mxu0 0.0
    %338 = vmatprep.subr.mxu0 0.0
    %339 = vmatpush1.msra.mxu0 0.0
    %340 = vmatprep.subr.mxu0 0.0
    %341 = vmatpush1.msra.mxu0 0.0
    %342 = vmatprep.subr.mxu0 0.0
    %343 = vmatpush1.msra.mxu0 0.0
    %344 = vmatprep.mubr.f32.mxu0 0.0
    %v345 = vand.u32 %v100, 4294901760
    %v346 = vsub.f32 %v100, %v345
    %347 = vmatmul.mubr.f32.gmra.mrb[0].mxu0 %v346
    %v348 = vpop.f32.mrb[0].mxu0
    %v349 = vadd.f32 %v269, %v348
    %v350 = vpop.f32.mrb[0].mxu0
    %351 = vdwg.mxu0
    %352 = vmatprep.subr.mxu0 0.0
    %v353 = vand.u32 %v77, 4294901760
    %354 = vmatpush1.msra.mxu0 %v353
    %355 = vmatprep.subr.mxu0 0.0
    %v356 = vand.u32 %v78, 4294901760
    %357 = vmatpush1.msra.mxu0 %v356
    %358 = vmatprep.subr.mxu0 0.0
    %v359 = vand.u32 %v79, 4294901760
    %360 = vmatpush1.msra.mxu0 %v359
    %361 = vmatprep.subr.mxu0 0.0
    %v362 = vand.u32 %v80, 4294901760
    %363 = vmatpush1.msra.mxu0 %v362
    %364 = vmatprep.subr.mxu0 0.0
    %365 = vmatpush1.msra.mxu0 0.0
    %366 = vmatprep.subr.mxu0 0.0
    %367 = vmatpush1.msra.mxu0 0.0
    %368 = vmatprep.subr.mxu0 0.0
    %369 = vmatpush1.msra.mxu0 0.0
    %370 = vmatprep.subr.mxu0 0.0
    %371 = vmatpush1.msra.mxu0 0.0
    %372 = vmatprep.subr.mxu0 0.0
    %373 = vmatpush1.msra.mxu0 0.0
    %374 = vmatprep.subr.mxu0 0.0
    %375 = vmatpush1.msra.mxu0 0.0
    %376 = vmatprep.subr.mxu0 0.0
    %377 = vmatpush1.msra.mxu0 0.0
    %378 = vmatprep.subr.mxu0 0.0
    %379 = vmatpush1.msra.mxu0 0.0
    %380 = vmatprep.subr.mxu0 0.0
    %381 = vmatpush1.msra.mxu0 0.0
    %382 = vmatprep.subr.mxu0 0.0
    %383 = vmatpush1.msra.mxu0 0.0
    %384 = vmatprep.subr.mxu0 0.0
    %385 = vmatpush1.msra.mxu0 0.0
    %386 = vmatprep.subr.mxu0 0.0
    %387 = vmatpush1.msra.mxu0 0.0
    %388 = vmatprep.subr.mxu0 0.0
    %389 = vmatpush1.msra.mxu0 0.0
    %390 = vmatprep.subr.mxu0 0.0
    %391 = vmatpush1.msra.mxu0 0.0
    %392 = vmatprep.subr.mxu0 0.0
    %393 = vmatpush1.msra.mxu0 0.0
    %394 = vmatprep.subr.mxu0 0.0
    %395 = vmatpush1.msra.mxu0 0.0
    %396 = vmatprep.subr.mxu0 0.0
    %397 = vmatpush1.msra.mxu0 0.0
    %398 = vmatprep.subr.mxu0 0.0
    %399 = vmatpush1.msra.mxu0 0.0
    %400 = vmatprep.subr.mxu0 0.0
    %401 = vmatpush1.msra.mxu0 0.0
    %402 = vmatprep.subr.mxu0 0.0
    %403 = vmatpush1.msra.mxu0 0.0
    %404 = vmatprep.subr.mxu0 0.0
    %405 = vmatpush1.msra.mxu0 0.0
    %406 = vmatprep.subr.mxu0 0.0
    %407 = vmatpush1.msra.mxu0 0.0
    %408 = vmatprep.subr.mxu0 0.0
    %409 = vmatpush1.msra.mxu0 0.0
    %410 = vmatprep.subr.mxu0 0.0
    %411 = vmatpush1.msra.mxu0 0.0
    %412 = vmatprep.subr.mxu0 0.0
    %413 = vmatpush1.msra.mxu0 0.0
    %414 = vmatprep.subr.mxu0 0.0
    %415 = vmatpush1.msra.mxu0 0.0
    %416 = vmatprep.subr.mxu0 0.0
    %417 = vmatpush1.msra.mxu0 0.0
    %418 = vmatprep.subr.mxu0 0.0
    %419 = vmatpush1.msra.mxu0 0.0
    %420 = vmatprep.mubr.f32.mxu0 0.0
    %v421 = vand.u32 %v100, 4294901760
    %v422 = vsub.f32 %v100, %v421
    %v423 = vand.u32 %v422, 4294901760
    %424 = vmatmul.mubr.f32.gmra.mrb[0].mxu0 %v423
    %v425 = vpop.f32.mrb[0].mxu0
    %v426 = vadd.f32 %v349, %v425
    %v427 = vpop.f32.mrb[0].mxu0
    %428 = vdwg.mxu0
    %429 = vmatprep.subr.mxu0 0.0
    %v430 = vand.u32 %v77, 4294901760
    %v431 = vsub.f32 %v77, %v430
    %v432 = vand.u32 %v431, 4294901760
    %433 = vmatpush1.msra.mxu0 %v432
    %434 = vmatprep.subr.mxu0 0.0
    %v435 = vand.u32 %v78, 4294901760
    %v436 = vsub.f32 %v78, %v435
    %v437 = vand.u32 %v436, 4294901760
    %438 = vmatpush1.msra.mxu0 %v437
    %439 = vmatprep.subr.mxu0 0.0
    %v440 = vand.u32 %v79, 4294901760
    %v441 = vsub.f32 %v79, %v440
    %v442 = vand.u32 %v441, 4294901760
    %443 = vmatpush1.msra.mxu0 %v442
    %444 = vmatprep.subr.mxu0 0.0
    %v445 = vand.u32 %v80, 4294901760
    %v446 = vsub.f32 %v80, %v445
    %v447 = vand.u32 %v446, 4294901760
    %448 = vmatpush1.msra.mxu0 %v447
    %449 = vmatprep.subr.mxu0 0.0
    %450 = vmatpush1.msra.mxu0 0.0
    %451 = vmatprep.subr.mxu0 0.0
    %452 = vmatpush1.msra.mxu0 0.0
    %453 = vmatprep.subr.mxu0 0.0
    %454 = vmatpush1.msra.mxu0 0.0
    %455 = vmatprep.subr.mxu0 0.0
    %456 = vmatpush1.msra.mxu0 0.0
    %457 = vmatprep.subr.mxu0 0.0
    %458 = vmatpush1.msra.mxu0 0.0
    %459 = vmatprep.subr.mxu0 0.0
    %460 = vmatpush1.msra.mxu0 0.0
    %461 = vmatprep.subr.mxu0 0.0
    %462 = vmatpush1.msra.mxu0 0.0
    %463 = vmatprep.subr.mxu0 0.0
    %464 = vmatpush1.msra.mxu0 0.0
    %465 = vmatprep.subr.mxu0 0.0
    %466 = vmatpush1.msra.mxu0 0.0
    %467 = vmatprep.subr.mxu0 0.0
    %468 = vmatpush1.msra.mxu0 0.0
    %469 = vmatprep.subr.mxu0 0.0
    %470 = vmatpush1.msra.mxu0 0.0
    %471 = vmatprep.subr.mxu0 0.0
    %472 = vmatpush1.msra.mxu0 0.0
    %473 = vmatprep.subr.mxu0 0.0
    %474 = vmatpush1.msra.mxu0 0.0
    %475 = vmatprep.subr.mxu0 0.0
    %476 = vmatpush1.msra.mxu0 0.0
    %477 = vmatprep.subr.mxu0 0.0
    %478 = vmatpush1.msra.mxu0 0.0
    %479 = vmatprep.subr.mxu0 0.0
    %480 = vmatpush1.msra.mxu0 0.0
    %481 = vmatprep.subr.mxu0 0.0
    %482 = vmatpush1.msra.mxu0 0.0
    %483 = vmatprep.subr.mxu0 0.0
    %484 = vmatpush1.msra.mxu0 0.0
    %485 = vmatprep.subr.mxu0 0.0
    %486 = vmatpush1.msra.mxu0 0.0
    %487 = vmatprep.subr.mxu0 0.0
    %488 = vmatpush1.msra.mxu0 0.0
    %489 = vmatprep.subr.mxu0 0.0
    %490 = vmatpush1.msra.mxu0 0.0
    %491 = vmatprep.subr.mxu0 0.0
    %492 = vmatpush1.msra.mxu0 0.0
    %493 = vmatprep.subr.mxu0 0.0
    %494 = vmatpush1.msra.mxu0 0.0
    %495 = vmatprep.subr.mxu0 0.0
    %496 = vmatpush1.msra.mxu0 0.0
    %497 = vmatprep.subr.mxu0 0.0
    %498 = vmatpush1.msra.mxu0 0.0
    %499 = vmatprep.subr.mxu0 0.0
    %500 = vmatpush1.msra.mxu0 0.0
    %501 = vmatprep.subr.mxu0 0.0
    %502 = vmatpush1.msra.mxu0 0.0
    %503 = vmatprep.subr.mxu0 0.0
    %504 = vmatpush1.msra.mxu0 0.0
    %505 = vmatprep.mubr.f32.mxu0 0.0
    %v506 = vand.u32 %v100, 4294901760
    %507 = vmatmul.mubr.f32.gmra.mrb[0].mxu0 %v506
    %v508 = vpop.f32.mrb[0].mxu0
    %v509 = vadd.f32 %v426, %v508
    %v510 = vpop.f32.mrb[0].mxu0
    %511 = vdwg.mxu0
    %512 = vmatprep.subr.mxu0 0.0
    %v513 = vand.u32 %v77, 4294901760
    %514 = vmatpush1.msra.mxu0 %v513
    %515 = vmatprep.subr.mxu0 0.0
    %v516 = vand.u32 %v78, 4294901760
    %517 = vmatpush1.msra.mxu0 %v516
    %518 = vmatprep.subr.mxu0 0.0
    %v519 = vand.u32 %v79, 4294901760
    %520 = vmatpush1.msra.mxu0 %v519
    %521 = vmatprep.subr.mxu0 0.0
    %v522 = vand.u32 %v80, 4294901760
    %523 = vmatpush1.msra.mxu0 %v522
    %524 = vmatprep.subr.mxu0 0.0
    %525 = vmatpush1.msra.mxu0 0.0
    %526 = vmatprep.subr.mxu0 0.0
    %527 = vmatpush1.msra.mxu0 0.0
    %528 = vmatprep.subr.mxu0 0.0
    %529 = vmatpush1.msra.mxu0 0.0
    %530 = vmatprep.subr.mxu0 0.0
    %531 = vmatpush1.msra.mxu0 0.0
    %532 = vmatprep.subr.mxu0 0.0
    %533 = vmatpush1.msra.mxu0 0.0
    %534 = vmatprep.subr.mxu0 0.0
    %535 = vmatpush1.msra.mxu0 0.0
    %536 = vmatprep.subr.mxu0 0.0
    %537 = vmatpush1.msra.mxu0 0.0
    %538 = vmatprep.subr.mxu0 0.0
    %539 = vmatpush1.msra.mxu0 0.0
    %540 = vmatprep.subr.mxu0 0.0
    %541 = vmatpush1.msra.mxu0 0.0
    %542 = vmatprep.subr.mxu0 0.0
    %543 = vmatpush1.msra.mxu0 0.0
    %544 = vmatprep.subr.mxu0 0.0
    %545 = vmatpush1.msra.mxu0 0.0
    %546 = vmatprep.subr.mxu0 0.0
    %547 = vmatpush1.msra.mxu0 0.0
    %548 = vmatprep.subr.mxu0 0.0
    %549 = vmatpush1.msra.mxu0 0.0
    %550 = vmatprep.subr.mxu0 0.0
    %551 = vmatpush1.msra.mxu0 0.0
    %552 = vmatprep.subr.mxu0 0.0
    %553 = vmatpush1.msra.mxu0 0.0
    %554 = vmatprep.subr.mxu0 0.0
    %555 = vmatpush1.msra.mxu0 0.0
    %556 = vmatprep.subr.mxu0 0.0
    %557 = vmatpush1.msra.mxu0 0.0
    %558 = vmatprep.subr.mxu0 0.0
    %559 = vmatpush1.msra.mxu0 0.0
    %560 = vmatprep.subr.mxu0 0.0
    %561 = vmatpush1.msra.mxu0 0.0
    %562 = vmatprep.subr.mxu0 0.0
    %563 = vmatpush1.msra.mxu0 0.0
    %564 = vmatprep.subr.mxu0 0.0
    %565 = vmatpush1.msra.mxu0 0.0
    %566 = vmatprep.subr.mxu0 0.0
    %567 = vmatpush1.msra.mxu0 0.0
    %568 = vmatprep.subr.mxu0 0.0
    %569 = vmatpush1.msra.mxu0 0.0
    %570 = vmatprep.subr.mxu0 0.0
    %571 = vmatpush1.msra.mxu0 0.0
    %572 = vmatprep.subr.mxu0 0.0
    %573 = vmatpush1.msra.mxu0 0.0
    %574 = vmatprep.subr.mxu0 0.0
    %575 = vmatpush1.msra.mxu0 0.0
    %576 = vmatprep.subr.mxu0 0.0
    %577 = vmatpush1.msra.mxu0 0.0
    %578 = vmatprep.subr.mxu0 0.0
    %579 = vmatpush1.msra.mxu0 0.0
    %580 = vmatprep.mubr.f32.mxu0 0.0
    %v581 = vand.u32 %v100, 4294901760
    %582 = vmatmul.mubr.f32.gmra.mrb[0].mxu0 %v581
    %v583 = vpop.f32.mrb[0].mxu0
    %v584 = vadd.f32 %v509, %v583
    %v585 = vpop.f32.mrb[0].mxu0
    %586 = vdwg.mxu0
    %vm587 = vcmask 64512
    %v589 = vsel %vm587, 0.125, 0
    %591 = vmatprep.subr.mxu0 0.0
    %v592 = vand.u32 %v584, 4294901760
    %593 = vmatpush1.msra.mxu0 %v592
    %594 = vmatprep.subr.mxu0 0.0
    %595 = vmatpush1.msra.mxu0 0.0
    %596 = vmatprep.subr.mxu0 0.0
    %597 = vmatpush1.msra.mxu0 0.0
    %598 = vmatprep.subr.mxu0 0.0
    %599 = vmatpush1.msra.mxu0 0.0
    %600 = vmatprep.subr.mxu0 0.0
    %601 = vmatpush1.msra.mxu0 0.0
    %602 = vmatprep.subr.mxu0 0.0
    %603 = vmatpush1.msra.mxu0 0.0
    %604 = vmatprep.subr.mxu0 0.0
    %605 = vmatpush1.msra.mxu0 0.0
    %606 = vmatprep.subr.mxu0 0.0
    %607 = vmatpush1.msra.mxu0 0.0
    %608 = vmatprep.subr.mxu0 0.0
    %609 = vmatpush1.msra.mxu0 0.0
    %610 = vmatprep.subr.mxu0 0.0
    %611 = vmatpush1.msra.mxu0 0.0
    %612 = vmatprep.subr.mxu0 0.0
    %613 = vmatpush1.msra.mxu0 0.0
    %614 = vmatprep.subr.mxu0 0.0
    %615 = vmatpush1.msra.mxu0 0.0
    %616 = vmatprep.subr.mxu0 0.0
    %617 = vmatpush1.msra.mxu0 0.0
    %618 = vmatprep.subr.mxu0 0.0
    %619 = vmatpush1.msra.mxu0 0.0
    %620 = vmatprep.subr.mxu0 0.0
    %621 = vmatpush1.msra.mxu0 0.0
    %622 = vmatprep.subr.mxu0 0.0
    %623 = vmatpush1.msra.mxu0 0.0
    %624 = vmatprep.subr.mxu0 0.0
    %625 = vmatpush1.msra.mxu0 0.0
    %626 = vmatprep.subr.mxu0 0.0
    %627 = vmatpush1.msra.mxu0 0.0
    %628 = vmatprep.subr.mxu0 0.0
    %629 = vmatpush1.msra.mxu0 0.0
    %630 = vmatprep.subr.mxu0 0.0
    %631 = vmatpush1.msra.mxu0 0.0
    %632 = vmatprep.subr.mxu0 0.0
    %633 = vmatpush1.msra.mxu0 0.0
    %634 = vmatprep.subr.mxu0 0.0
    %635 = vmatpush1.msra.mxu0 0.0
    %636 = vmatprep.subr.mxu0 0.0
    %637 = vmatpush1.msra.mxu0 0.0
    %638 = vmatprep.subr.mxu0 0.0
    %639 = vmatpush1.msra.mxu0 0.0
    %640 = vmatprep.subr.mxu0 0.0
    %641 = vmatpush1.msra.mxu0 0.0
    %642 = vmatprep.subr.mxu0 0.0
    %643 = vmatpush1.msra.mxu0 0.0
    %644 = vmatprep.subr.mxu0 0.0
    %645 = vmatpush1.msra.mxu0 0.0
    %646 = vmatprep.subr.mxu0 0.0
    %647 = vmatpush1.msra.mxu0 0.0
    %648 = vmatprep.subr.mxu0 0.0
    %649 = vmatpush1.msra.mxu0 0.0
    %650 = vmatprep.subr.mxu0 0.0
    %651 = vmatpush1.msra.mxu0 0.0
    %652 = vmatprep.subr.mxu0 0.0
    %653 = vmatpush1.msra.mxu0 0.0
    %654 = vmatprep.subr.mxu0 0.0
    %655 = vmatpush1.msra.mxu0 0.0
    %656 = vmatprep.mubr.f32.mxu0 0.0
    %v657 = vand.u32 %v589, 4294901760
    %v658 = vsub.f32 %v589, %v657
    %v659 = vand.u32 %v658, 4294901760
    %v660 = vsub.f32 %v658, %v659
    %v661 = vand.u32 %v660, 4294901760
    %662 = vmatmul.mubr.f32.gmra.mrb[0].mxu0 %v661
    %v663 = vpop.f32.mrb[0].mxu0
    %v664 = vadd.f32 0.0, %v663
    %v665 = vpop.f32.mrb[0].mxu0
    %666 = vdwg.mxu0
    %667 = vmatprep.subr.mxu0 0.0
    %v668 = vand.u32 %v584, 4294901760
    %v669 = vsub.f32 %v584, %v668
    %v670 = vand.u32 %v669, 4294901760
    %v671 = vsub.f32 %v669, %v670
    %v672 = vand.u32 %v671, 4294901760
    %673 = vmatpush1.msra.mxu0 %v672
    %674 = vmatprep.subr.mxu0 0.0
    %675 = vmatpush1.msra.mxu0 0.0
    %676 = vmatprep.subr.mxu0 0.0
    %677 = vmatpush1.msra.mxu0 0.0
    %678 = vmatprep.subr.mxu0 0.0
    %679 = vmatpush1.msra.mxu0 0.0
    %680 = vmatprep.subr.mxu0 0.0
    %681 = vmatpush1.msra.mxu0 0.0
    %682 = vmatprep.subr.mxu0 0.0
    %683 = vmatpush1.msra.mxu0 0.0
    %684 = vmatprep.subr.mxu0 0.0
    %685 = vmatpush1.msra.mxu0 0.0
    %686 = vmatprep.subr.mxu0 0.0
    %687 = vmatpush1.msra.mxu0 0.0
    %688 = vmatprep.subr.mxu0 0.0
    %689 = vmatpush1.msra.mxu0 0.0
    %690 = vmatprep.subr.mxu0 0.0
    %691 = vmatpush1.msra.mxu0 0.0
    %692 = vmatprep.subr.mxu0 0.0
    %693 = vmatpush1.msra.mxu0 0.0
    %694 = vmatprep.subr.mxu0 0.0
    %695 = vmatpush1.msra.mxu0 0.0
    %696 = vmatprep.subr.mxu0 0.0
    %697 = vmatpush1.msra.mxu0 0.0
    %698 = vmatprep.subr.mxu0 0.0
    %699 = vmatpush1.msra.mxu0 0.0
    %700 = vmatprep.subr.mxu0 0.0
    %701 = vmatpush1.msra.mxu0 0.0
    %702 = vmatprep.subr.mxu0 0.0
    %703 = vmatpush1.msra.mxu0 0.0
    %704 = vmatprep.subr.mxu0 0.0
    %705 = vmatpush1.msra.mxu0 0.0
    %706 = vmatprep.subr.mxu0 0.0
    %707 = vmatpush1.msra.mxu0 0.0
    %708 = vmatprep.subr.mxu0 0.0
    %709 = vmatpush1.msra.mxu0 0.0
    %710 = vmatprep.subr.mxu0 0.0
    %711 = vmatpush1.msra.mxu0 0.0
    %712 = vmatprep.subr.mxu0 0.0
    %713 = vmatpush1.msra.mxu0 0.0
    %714 = vmatprep.subr.mxu0 0.0
    %715 = vmatpush1.msra.mxu0 0.0
    %716 = vmatprep.subr.mxu0 0.0
    %717 = vmatpush1.msra.mxu0 0.0
    %718 = vmatprep.subr.mxu0 0.0
    %719 = vmatpush1.msra.mxu0 0.0
    %720 = vmatprep.subr.mxu0 0.0
    %721 = vmatpush1.msra.mxu0 0.0
    %722 = vmatprep.subr.mxu0 0.0
    %723 = vmatpush1.msra.mxu0 0.0
    %724 = vmatprep.subr.mxu0 0.0
    %725 = vmatpush1.msra.mxu0 0.0
    %726 = vmatprep.subr.mxu0 0.0
    %727 = vmatpush1.msra.mxu0 0.0
    %728 = vmatprep.subr.mxu0 0.0
    %729 = vmatpush1.msra.mxu0 0.0
    %730 = vmatprep.subr.mxu0 0.0
    %731 = vmatpush1.msra.mxu0 0.0
    %732 = vmatprep.subr.mxu0 0.0
    %733 = vmatpush1.msra.mxu0 0.0
    %734 = vmatprep.subr.mxu0 0.0
    %735 = vmatpush1.msra.mxu0 0.0
    %736 = vmatprep.mubr.f32.mxu0 0.0
    %v737 = vand.u32 %v589, 4294901760
    %738 = vmatmul.mubr.f32.gmra.mrb[0].mxu0 %v737
    %v739 = vpop.f32.mrb[0].mxu0
    %v740 = vadd.f32 %v664, %v739
    %v741 = vpop.f32.mrb[0].mxu0
    %742 = vdwg.mxu0
    %743 = vmatprep.subr.mxu0 0.0
    %v744 = vand.u32 %v584, 4294901760
    %v745 = vsub.f32 %v584, %v744
    %746 = vmatpush1.msra.mxu0 %v745
    %747 = vmatprep.subr.mxu0 0.0
    %748 = vmatpush1.msra.mxu0 0.0
    %749 = vmatprep.subr.mxu0 0.0
    %750 = vmatpush1.msra.mxu0 0.0
    %751 = vmatprep.subr.mxu0 0.0
    %752 = vmatpush1.msra.mxu0 0.0
    %753 = vmatprep.subr.mxu0 0.0
    %754 = vmatpush1.msra.mxu0 0.0
    %755 = vmatprep.subr.mxu0 0.0
    %756 = vmatpush1.msra.mxu0 0.0
    %757 = vmatprep.subr.mxu0 0.0
    %758 = vmatpush1.msra.mxu0 0.0
    %759 = vmatprep.subr.mxu0 0.0
    %760 = vmatpush1.msra.mxu0 0.0
    %761 = vmatprep.subr.mxu0 0.0
    %762 = vmatpush1.msra.mxu0 0.0
    %763 = vmatprep.subr.mxu0 0.0
    %764 = vmatpush1.msra.mxu0 0.0
    %765 = vmatprep.subr.mxu0 0.0
    %766 = vmatpush1.msra.mxu0 0.0
    %767 = vmatprep.subr.mxu0 0.0
    %768 = vmatpush1.msra.mxu0 0.0
    %769 = vmatprep.subr.mxu0 0.0
    %770 = vmatpush1.msra.mxu0 0.0
    %771 = vmatprep.subr.mxu0 0.0
    %772 = vmatpush1.msra.mxu0 0.0
    %773 = vmatprep.subr.mxu0 0.0
    %774 = vmatpush1.msra.mxu0 0.0
    %775 = vmatprep.subr.mxu0 0.0
    %776 = vmatpush1.msra.mxu0 0.0
    %777 = vmatprep.subr.mxu0 0.0
    %778 = vmatpush1.msra.mxu0 0.0
    %779 = vmatprep.subr.mxu0 0.0
    %780 = vmatpush1.msra.mxu0 0.0
    %781 = vmatprep.subr.mxu0 0.0
    %782 = vmatpush1.msra.mxu0 0.0
    %783 = vmatprep.subr.mxu0 0.0
    %784 = vmatpush1.msra.mxu0 0.0
    %785 = vmatprep.subr.mxu0 0.0
    %786 = vmatpush1.msra.mxu0 0.0
    %787 = vmatprep.subr.mxu0 0.0
    %788 = vmatpush1.msra.mxu0 0.0
    %789 = vmatprep.subr.mxu0 0.0
    %790 = vmatpush1.msra.mxu0 0.0
    %791 = vmatprep.subr.mxu0 0.0
    %792 = vmatpush1.msra.mxu0 0.0
    %793 = vmatprep.subr.mxu0 0.0
    %794 = vmatpush1.msra.mxu0 0.0
    %795 = vmatprep.subr.mxu0 0.0
    %796 = vmatpush1.msra.mxu0 0.0
    %797 = vmatprep.subr.mxu0 0.0
    %798 = vmatpush1.msra.mxu0 0.0
    %799 = vmatprep.subr.mxu0 0.0
    %800 = vmatpush1.msra.mxu0 0.0
    %801 = vmatprep.subr.mxu0 0.0
    %802 = vmatpush1.msra.mxu0 0.0
    %803 = vmatprep.subr.mxu0 0.0
    %804 = vmatpush1.msra.mxu0 0.0
    %805 = vmatprep.subr.mxu0 0.0
    %806 = vmatpush1.msra.mxu0 0.0
    %807 = vmatprep.subr.mxu0 0.0
    %808 = vmatpush1.msra.mxu0 0.0
    %809 = vmatprep.mubr.f32.mxu0 0.0
    %v810 = vand.u32 %v589, 4294901760
    %v811 = vsub.f32 %v589, %v810
    %812 = vmatmul.mubr.f32.gmra.mrb[0].mxu0 %v811
    %v813 = vpop.f32.mrb[0].mxu0
    %v814 = vadd.f32 %v740, %v813
    %v815 = vpop.f32.mrb[0].mxu0
    %816 = vdwg.mxu0
    %817 = vmatprep.subr.mxu0 0.0
    %v818 = vand.u32 %v584, 4294901760
    %819 = vmatpush1.msra.mxu0 %v818
    %820 = vmatprep.subr.mxu0 0.0
    %821 = vmatpush1.msra.mxu0 0.0
    %822 = vmatprep.subr.mxu0 0.0
    %823 = vmatpush1.msra.mxu0 0.0
    %824 = vmatprep.subr.mxu0 0.0
    %825 = vmatpush1.msra.mxu0 0.0
    %826 = vmatprep.subr.mxu0 0.0
    %827 = vmatpush1.msra.mxu0 0.0
    %828 = vmatprep.subr.mxu0 0.0
    %829 = vmatpush1.msra.mxu0 0.0
    %830 = vmatprep.subr.mxu0 0.0
    %831 = vmatpush1.msra.mxu0 0.0
    %832 = vmatprep.subr.mxu0 0.0
    %833 = vmatpush1.msra.mxu0 0.0
    %834 = vmatprep.subr.mxu0 0.0
    %835 = vmatpush1.msra.mxu0 0.0
    %836 = vmatprep.subr.mxu0 0.0
    %837 = vmatpush1.msra.mxu0 0.0
    %838 = vmatprep.subr.mxu0 0.0
    %839 = vmatpush1.msra.mxu0 0.0
    %840 = vmatprep.subr.mxu0 0.0
    %841 = vmatpush1.msra.mxu0 0.0
    %842 = vmatprep.subr.mxu0 0.0
    %843 = vmatpush1.msra.mxu0 0.0
    %844 = vmatprep.subr.mxu0 0.0
    %845 = vmatpush1.msra.mxu0 0.0
    %846 = vmatprep.subr.mxu0 0.0
    %847 = vmatpush1.msra.mxu0 0.0
    %848 = vmatprep.subr.mxu0 0.0
    %849 = vmatpush1.msra.mxu0 0.0
    %850 = vmatprep.subr.mxu0 0.0
    %851 = vmatpush1.msra.mxu0 0.0
    %852 = vmatprep.subr.mxu0 0.0
    %853 = vmatpush1.msra.mxu0 0.0
    %854 = vmatprep.subr.mxu0 0.0
    %855 = vmatpush1.msra.mxu0 0.0
    %856 = vmatprep.subr.mxu0 0.0
    %857 = vmatpush1.msra.mxu0 0.0
    %858 = vmatprep.subr.mxu0 0.0
    %859 = vmatpush1.msra.mxu0 0.0
    %860 = vmatprep.subr.mxu0 0.0
    %861 = vmatpush1.msra.mxu0 0.0
    %862 = vmatprep.subr.mxu0 0.0
    %863 = vmatpush1.msra.mxu0 0.0
    %864 = vmatprep.subr.mxu0 0.0
    %865 = vmatpush1.msra.mxu0 0.0
    %866 = vmatprep.subr.mxu0 0.0
    %867 = vmatpush1.msra.mxu0 0.0
    %868 = vmatprep.subr.mxu0 0.0
    %869 = vmatpush1.msra.mxu0 0.0
    %870 = vmatprep.subr.mxu0 0.0
    %871 = vmatpush1.msra.mxu0 0.0
    %872 = vmatprep.subr.mxu0 0.0
    %873 = vmatpush1.msra.mxu0 0.0
    %874 = vmatprep.subr.mxu0 0.0
    %875 = vmatpush1.msra.mxu0 0.0
    %876 = vmatprep.subr.mxu0 0.0
    %877 = vmatpush1.msra.mxu0 0.0
    %878 = vmatprep.subr.mxu0 0.0
    %879 = vmatpush1.msra.mxu0 0.0
    %880 = vmatprep.subr.mxu0 0.0
    %881 = vmatpush1.msra.mxu0 0.0
    %882 = vmatprep.mubr.f32.mxu0 0.0
    %v883 = vand.u32 %v589, 4294901760
    %v884 = vsub.f32 %v589, %v883
    %v885 = vand.u32 %v884, 4294901760
    %886 = vmatmul.mubr.f32.gmra.mrb[0].mxu0 %v885
    %v887 = vpop.f32.mrb[0].mxu0
    %v888 = vadd.f32 %v814, %v887
    %v889 = vpop.f32.mrb[0].mxu0
    %890 = vdwg.mxu0
    %891 = vmatprep.subr.mxu0 0.0
    %v892 = vand.u32 %v584, 4294901760
    %v893 = vsub.f32 %v584, %v892
    %v894 = vand.u32 %v893, 4294901760
    %895 = vmatpush1.msra.mxu0 %v894
    %896 = vmatprep.subr.mxu0 0.0
    %897 = vmatpush1.msra.mxu0 0.0
    %898 = vmatprep.subr.mxu0 0.0
    %899 = vmatpush1.msra.mxu0 0.0
    %900 = vmatprep.subr.mxu0 0.0
    %901 = vmatpush1.msra.mxu0 0.0
    %902 = vmatprep.subr.mxu0 0.0
    %903 = vmatpush1.msra.mxu0 0.0
    %904 = vmatprep.subr.mxu0 0.0
    %905 = vmatpush1.msra.mxu0 0.0
    %906 = vmatprep.subr.mxu0 0.0
    %907 = vmatpush1.msra.mxu0 0.0
    %908 = vmatprep.subr.mxu0 0.0
    %909 = vmatpush1.msra.mxu0 0.0
    %910 = vmatprep.subr.mxu0 0.0
    %911 = vmatpush1.msra.mxu0 0.0
    %912 = vmatprep.subr.mxu0 0.0
    %913 = vmatpush1.msra.mxu0 0.0
    %914 = vmatprep.subr.mxu0 0.0
    %915 = vmatpush1.msra.mxu0 0.0
    %916 = vmatprep.subr.mxu0 0.0
    %917 = vmatpush1.msra.mxu0 0.0
    %918 = vmatprep.subr.mxu0 0.0
    %919 = vmatpush1.msra.mxu0 0.0
    %920 = vmatprep.subr.mxu0 0.0
    %921 = vmatpush1.msra.mxu0 0.0
    %922 = vmatprep.subr.mxu0 0.0
    %923 = vmatpush1.msra.mxu0 0.0
    %924 = vmatprep.subr.mxu0 0.0
    %925 = vmatpush1.msra.mxu0 0.0
    %926 = vmatprep.subr.mxu0 0.0
    %927 = vmatpush1.msra.mxu0 0.0
    %928 = vmatprep.subr.mxu0 0.0
    %929 = vmatpush1.msra.mxu0 0.0
    %930 = vmatprep.subr.mxu0 0.0
    %931 = vmatpush1.msra.mxu0 0.0
    %932 = vmatprep.subr.mxu0 0.0
    %933 = vmatpush1.msra.mxu0 0.0
    %934 = vmatprep.subr.mxu0 0.0
    %935 = vmatpush1.msra.mxu0 0.0
    %936 = vmatprep.subr.mxu0 0.0
    %937 = vmatpush1.msra.mxu0 0.0
    %938 = vmatprep.subr.mxu0 0.0
    %939 = vmatpush1.msra.mxu0 0.0
    %940 = vmatprep.subr.mxu0 0.0
    %941 = vmatpush1.msra.mxu0 0.0
    %942 = vmatprep.subr.mxu0 0.0
    %943 = vmatpush1.msra.mxu0 0.0
    %944 = vmatprep.subr.mxu0 0.0
    %945 = vmatpush1.msra.mxu0 0.0
    %946 = vmatprep.subr.mxu0 0.0
    %947 = vmatpush1.msra.mxu0 0.0
    %948 = vmatprep.subr.mxu0 0.0
    %949 = vmatpush1.msra.mxu0 0.0
    %950 = vmatprep.subr.mxu0 0.0
    %951 = vmatpush1.msra.mxu0 0.0
    %952 = vmatprep.subr.mxu0 0.0
    %953 = vmatpush1.msra.mxu0 0.0
    %954 = vmatprep.subr.mxu0 0.0
    %955 = vmatpush1.msra.mxu0 0.0
    %956 = vmatprep.subr.mxu0 0.0
    %957 = vmatpush1.msra.mxu0 0.0
    %958 = vmatprep.mubr.f32.mxu0 0.0
    %v959 = vand.u32 %v589, 4294901760
    %960 = vmatmul.mubr.f32.gmra.mrb[0].mxu0 %v959
    %v961 = vpop.f32.mrb[0].mxu0
    %v962 = vadd.f32 %v888, %v961
    %v963 = vpop.f32.mrb[0].mxu0
    %964 = vdwg.mxu0
    %965 = vmatprep.subr.mxu0 0.0
    %v966 = vand.u32 %v584, 4294901760
    %967 = vmatpush1.msra.mxu0 %v966
    %968 = vmatprep.subr.mxu0 0.0
    %969 = vmatpush1.msra.mxu0 0.0
    %970 = vmatprep.subr.mxu0 0.0
    %971 = vmatpush1.msra.mxu0 0.0
    %972 = vmatprep.subr.mxu0 0.0
    %973 = vmatpush1.msra.mxu0 0.0
    %974 = vmatprep.subr.mxu0 0.0
    %975 = vmatpush1.msra.mxu0 0.0
    %976 = vmatprep.subr.mxu0 0.0
    %977 = vmatpush1.msra.mxu0 0.0
    %978 = vmatprep.subr.mxu0 0.0
    %979 = vmatpush1.msra.mxu0 0.0
    %980 = vmatprep.subr.mxu0 0.0
    %981 = vmatpush1.msra.mxu0 0.0
    %982 = vmatprep.subr.mxu0 0.0
    %983 = vmatpush1.msra.mxu0 0.0
    %984 = vmatprep.subr.mxu0 0.0
    %985 = vmatpush1.msra.mxu0 0.0
    %986 = vmatprep.subr.mxu0 0.0
    %987 = vmatpush1.msra.mxu0 0.0
    %988 = vmatprep.subr.mxu0 0.0
    %989 = vmatpush1.msra.mxu0 0.0
    %990 = vmatprep.subr.mxu0 0.0
    %991 = vmatpush1.msra.mxu0 0.0
    %992 = vmatprep.subr.mxu0 0.0
    %993 = vmatpush1.msra.mxu0 0.0
    %994 = vmatprep.subr.mxu0 0.0
    %995 = vmatpush1.msra.mxu0 0.0
    %996 = vmatprep.subr.mxu0 0.0
    %997 = vmatpush1.msra.mxu0 0.0
    %998 = vmatprep.subr.mxu0 0.0
    %999 = vmatpush1.msra.mxu0 0.0
    %1000 = vmatprep.subr.mxu0 0.0
    %1001 = vmatpush1.msra.mxu0 0.0
    %1002 = vmatprep.subr.mxu0 0.0
    %1003 = vmatpush1.msra.mxu0 0.0
    %1004 = vmatprep.subr.mxu0 0.0
    %1005 = vmatpush1.msra.mxu0 0.0
    %1006 = vmatprep.subr.mxu0 0.0
    %1007 = vmatpush1.msra.mxu0 0.0
    %1008 = vmatprep.subr.mxu0 0.0
    %1009 = vmatpush1.msra.mxu0 0.0
    %1010 = vmatprep.subr.mxu0 0.0
    %1011 = vmatpush1.msra.mxu0 0.0
    %1012 = vmatprep.subr.mxu0 0.0
    %1013 = vmatpush1.msra.mxu0 0.0
    %1014 = vmatprep.subr.mxu0 0.0
    %1015 = vmatpush1.msra.mxu0 0.0
    %1016 = vmatprep.subr.mxu0 0.0
    %1017 = vmatpush1.msra.mxu0 0.0
    %1018 = vmatprep.subr.mxu0 0.0
    %1019 = vmatpush1.msra.mxu0 0.0
    %1020 = vmatprep.subr.mxu0 0.0
    %1021 = vmatpush1.msra.mxu0 0.0
    %1022 = vmatprep.subr.mxu0 0.0
    %1023 = vmatpush1.msra.mxu0 0.0
    %1024 = vmatprep.subr.mxu0 0.0
    %1025 = vmatpush1.msra.mxu0 0.0
    %1026 = vmatprep.subr.mxu0 0.0
    %1027 = vmatpush1.msra.mxu0 0.0
    %1028 = vmatprep.subr.mxu0 0.0
    %1029 = vmatpush1.msra.mxu0 0.0
    %1030 = vmatprep.mubr.f32.mxu0 0.0
    %v1031 = vand.u32 %v589, 4294901760
    %1032 = vmatmul.mubr.f32.gmra.mrb[0].mxu0 %v1031
    %v1033 = vpop.f32.mrb[0].mxu0
    %v1034 = vadd.f32 %v962, %v1033
    %v1035 = vpop.f32.mrb[0].mxu0
    %1036 = vdwg.mxu0
    %v1037 = vlaneseq
    %v1038 = vshrl.u32 %v1037, 7
    %v1039 = vsub.s32 0, %v1038
    %v1040 = vrot.slane %v1034, %v1039
    %v1041 = vsub.f32 %v584, %v1040
    %v1042 = vmul.f32 %v1041, %v1041
    %1043 = vmatprep.subr.mxu0 0.0
    %v1044 = vand.u32 %v1042, 4294901760
    %1045 = vmatpush1.msra.mxu0 %v1044
    %1046 = vmatprep.subr.mxu0 0.0
    %1047 = vmatpush1.msra.mxu0 0.0
    %1048 = vmatprep.subr.mxu0 0.0
    %1049 = vmatpush1.msra.mxu0 0.0
    %1050 = vmatprep.subr.mxu0 0.0
    %1051 = vmatpush1.msra.mxu0 0.0
    %1052 = vmatprep.subr.mxu0 0.0
    %1053 = vmatpush1.msra.mxu0 0.0
    %1054 = vmatprep.subr.mxu0 0.0
    %1055 = vmatpush1.msra.mxu0 0.0
    %1056 = vmatprep.subr.mxu0 0.0
    %1057 = vmatpush1.msra.mxu0 0.0
    %1058 = vmatprep.subr.mxu0 0.0
    %1059 = vmatpush1.msra.mxu0 0.0
    %1060 = vmatprep.subr.mxu0 0.0
    %1061 = vmatpush1.msra.mxu0 0.0
    %1062 = vmatprep.subr.mxu0 0.0
    %1063 = vmatpush1.msra.mxu0 0.0
    %1064 = vmatprep.subr.mxu0 0.0
    %1065 = vmatpush1.msra.mxu0 0.0
    %1066 = vmatprep.subr.mxu0 0.0
    %1067 = vmatpush1.msra.mxu0 0.0
    %1068 = vmatprep.subr.mxu0 0.0
    %1069 = vmatpush1.msra.mxu0 0.0
    %1070 = vmatprep.subr.mxu0 0.0
    %1071 = vmatpush1.msra.mxu0 0.0
    %1072 = vmatprep.subr.mxu0 0.0
    %1073 = vmatpush1.msra.mxu0 0.0
    %1074 = vmatprep.subr.mxu0 0.0
    %1075 = vmatpush1.msra.mxu0 0.0
    %1076 = vmatprep.subr.mxu0 0.0
    %1077 = vmatpush1.msra.mxu0 0.0
    %1078 = vmatprep.subr.mxu0 0.0
    %1079 = vmatpush1.msra.mxu0 0.0
    %1080 = vmatprep.subr.mxu0 0.0
    %1081 = vmatpush1.msra.mxu0 0.0
    %1082 = vmatprep.subr.mxu0 0.0
    %1083 = vmatpush1.msra.mxu0 0.0
    %1084 = vmatprep.subr.mxu0 0.0
    %1085 = vmatpush1.msra.mxu0 0.0
    %1086 = vmatprep.subr.mxu0 0.0
    %1087 = vmatpush1.msra.mxu0 0.0
    %1088 = vmatprep.subr.mxu0 0.0
    %1089 = vmatpush1.msra.mxu0 0.0
    %1090 = vmatprep.subr.mxu0 0.0
    %1091 = vmatpush1.msra.mxu0 0.0
    %1092 = vmatprep.subr.mxu0 0.0
    %1093 = vmatpush1.msra.mxu0 0.0
    %1094 = vmatprep.subr.mxu0 0.0
    %1095 = vmatpush1.msra.mxu0 0.0
    %1096 = vmatprep.subr.mxu0 0.0
    %1097 = vmatpush1.msra.mxu0 0.0
    %1098 = vmatprep.subr.mxu0 0.0
    %1099 = vmatpush1.msra.mxu0 0.0
    %1100 = vmatprep.subr.mxu0 0.0
    %1101 = vmatpush1.msra.mxu0 0.0
    %1102 = vmatprep.subr.mxu0 0.0
    %1103 = vmatpush1.msra.mxu0 0.0
    %1104 = vmatprep.subr.mxu0 0.0
    %1105 = vmatpush1.msra.mxu0 0.0
    %1106 = vmatprep.subr.mxu0 0.0
    %1107 = vmatpush1.msra.mxu0 0.0
    %1108 = vmatprep.mubr.f32.mxu0 0.0
    %v1109 = vand.u32 %v589, 4294901760
    %v1110 = vsub.f32 %v589, %v1109
    %v1111 = vand.u32 %v1110, 4294901760
    %v1112 = vsub.f32 %v1110, %v1111
    %v1113 = vand.u32 %v1112, 4294901760
    %1114 = vmatmul.mubr.f32.gmra.mrb[0].mxu0 %v1113
    %v1115 = vpop.f32.mrb[0].mxu0
    %v1116 = vadd.f32 1e-05, %v1115
    %v1117 = vpop.f32.mrb[0].mxu0
    %1118 = vdwg.mxu0
    %1119 = vmatprep.subr.mxu0 0.0
    %v1120 = vand.u32 %v1042, 4294901760
    %v1121 = vsub.f32 %v1042, %v1120
    %v1122 = vand.u32 %v1121, 4294901760
    %v1123 = vsub.f32 %v1121, %v1122
    %v1124 = vand.u32 %v1123, 4294901760
    %1125 = vmatpush1.msra.mxu0 %v1124
    %1126 = vmatprep.subr.mxu0 0.0
    %1127 = vmatpush1.msra.mxu0 0.0
    %1128 = vmatprep.subr.mxu0 0.0
    %1129 = vmatpush1.msra.mxu0 0.0
    %1130 = vmatprep.subr.mxu0 0.0
    %1131 = vmatpush1.msra.mxu0 0.0
    %1132 = vmatprep.subr.mxu0 0.0
    %1133 = vmatpush1.msra.mxu0 0.0
    %1134 = vmatprep.subr.mxu0 0.0
    %1135 = vmatpush1.msra.mxu0 0.0
    %1136 = vmatprep.subr.mxu0 0.0
    %1137 = vmatpush1.msra.mxu0 0.0
    %1138 = vmatprep.subr.mxu0 0.0
    %1139 = vmatpush1.msra.mxu0 0.0
    %1140 = vmatprep.subr.mxu0 0.0
    %1141 = vmatpush1.msra.mxu0 0.0
    %1142 = vmatprep.subr.mxu0 0.0
    %1143 = vmatpush1.msra.mxu0 0.0
    %1144 = vmatprep.subr.mxu0 0.0
    %1145 = vmatpush1.msra.mxu0 0.0
    %1146 = vmatprep.subr.mxu0 0.0
    %1147 = vmatpush1.msra.mxu0 0.0
    %1148 = vmatprep.subr.mxu0 0.0
    %1149 = vmatpush1.msra.mxu0 0.0
    %1150 = vmatprep.subr.mxu0 0.0
    %1151 = vmatpush1.msra.mxu0 0.0
    %1152 = vmatprep.subr.mxu0 0.0
    %1153 = vmatpush1.msra.mxu0 0.0
    %1154 = vmatprep.subr.mxu0 0.0
    %1155 = vmatpush1.msra.mxu0 0.0
    %1156 = vmatprep.subr.mxu0 0.0
    %1157 = vmatpush1.msra.mxu0 0.0
    %1158 = vmatprep.subr.mxu0 0.0
    %1159 = vmatpush1.msra.mxu0 0.0
    %1160 = vmatprep.subr.mxu0 0.0
    %1161 = vmatpush1.msra.mxu0 0.0
    %1162 = vmatprep.subr.mxu0 0.0
    %1163 = vmatpush1.msra.mxu0 0.0
    %1164 = vmatprep.subr.mxu0 0.0
    %1165 = vmatpush1.msra.mxu0 0.0
    %1166 = vmatprep.subr.mxu0 0.0
    %1167 = vmatpush1.msra.mxu0 0.0
    %1168 = vmatprep.subr.mxu0 0.0
    %1169 = vmatpush1.msra.mxu0 0.0
    %1170 = vmatprep.subr.mxu0 0.0
    %1171 = vmatpush1.msra.mxu0 0.0
    %1172 = vmatprep.subr.mxu0 0.0
    %1173 = vmatpush1.msra.mxu0 0.0
    %1174 = vmatprep.subr.mxu0 0.0
    %1175 = vmatpush1.msra.mxu0 0.0
    %1176 = vmatprep.subr.mxu0 0.0
    %1177 = vmatpush1.msra.mxu0 0.0
    %1178 = vmatprep.subr.mxu0 0.0
    %1179 = vmatpush1.msra.mxu0 0.0
    %1180 = vmatprep.subr.mxu0 0.0
    %1181 = vmatpush1.msra.mxu0 0.0
    %1182 = vmatprep.subr.mxu0 0.0
    %1183 = vmatpush1.msra.mxu0 0.0
    %1184 = vmatprep.subr.mxu0 0.0
    %1185 = vmatpush1.msra.mxu0 0.0
    %1186 = vmatprep.subr.mxu0 0.0
    %1187 = vmatpush1.msra.mxu0 0.0
    %1188 = vmatprep.mubr.f32.mxu0 0.0
    %v1189 = vand.u32 %v589, 4294901760
    %1190 = vmatmul.mubr.f32.gmra.mrb[0].mxu0 %v1189
    %v1191 = vpop.f32.mrb[0].mxu0
    %v1192 = vadd.f32 %v1116, %v1191
    %v1193 = vpop.f32.mrb[0].mxu0
    %1194 = vdwg.mxu0
    %1195 = vmatprep.subr.mxu0 0.0
    %v1196 = vand.u32 %v1042, 4294901760
    %v1197 = vsub.f32 %v1042, %v1196
    %1198 = vmatpush1.msra.mxu0 %v1197
    %1199 = vmatprep.subr.mxu0 0.0
    %1200 = vmatpush1.msra.mxu0 0.0
    %1201 = vmatprep.subr.mxu0 0.0
    %1202 = vmatpush1.msra.mxu0 0.0
    %1203 = vmatprep.subr.mxu0 0.0
    %1204 = vmatpush1.msra.mxu0 0.0
    %1205 = vmatprep.subr.mxu0 0.0
    %1206 = vmatpush1.msra.mxu0 0.0
    %1207 = vmatprep.subr.mxu0 0.0
    %1208 = vmatpush1.msra.mxu0 0.0
    %1209 = vmatprep.subr.mxu0 0.0
    %1210 = vmatpush1.msra.mxu0 0.0
    %1211 = vmatprep.subr.mxu0 0.0
    %1212 = vmatpush1.msra.mxu0 0.0
    %1213 = vmatprep.subr.mxu0 0.0
    %1214 = vmatpush1.msra.mxu0 0.0
    %1215 = vmatprep.subr.mxu0 0.0
    %1216 = vmatpush1.msra.mxu0 0.0
    %1217 = vmatprep.subr.mxu0 0.0
    %1218 = vmatpush1.msra.mxu0 0.0
    %1219 = vmatprep.subr.mxu0 0.0
    %1220 = vmatpush1.msra.mxu0 0.0
    %1221 = vmatprep.subr.mxu0 0.0
    %1222 = vmatpush1.msra.mxu0 0.0
    %1223 = vmatprep.subr.mxu0 0.0
    %1224 = vmatpush1.msra.mxu0 0.0
    %1225 = vmatprep.subr.mxu0 0.0
    %1226 = vmatpush1.msra.mxu0 0.0
    %1227 = vmatprep.subr.mxu0 0.0
    %1228 = vmatpush1.msra.mxu0 0.0
    %1229 = vmatprep.subr.mxu0 0.0
    %1230 = vmatpush1.msra.mxu0 0.0
    %1231 = vmatprep.subr.mxu0 0.0
    %1232 = vmatpush1.msra.mxu0 0.0
    %1233 = vmatprep.subr.mxu0 0.0
    %1234 = vmatpush1.msra.mxu0 0.0
    %1235 = vmatprep.subr.mxu0 0.0
    %1236 = vmatpush1.msra.mxu0 0.0
    %1237 = vmatprep.subr.mxu0 0.0
    %1238 = vmatpush1.msra.mxu0 0.0
    %1239 = vmatprep.subr.mxu0 0.0
    %1240 = vmatpush1.msra.mxu0 0.0
    %1241 = vmatprep.subr.mxu0 0.0
    %1242 = vmatpush1.msra.mxu0 0.0
    %1243 = vmatprep.subr.mxu0 0.0
    %1244 = vmatpush1.msra.mxu0 0.0
    %1245 = vmatprep.subr.mxu0 0.0
    %1246 = vmatpush1.msra.mxu0 0.0
    %1247 = vmatprep.subr.mxu0 0.0
    %1248 = vmatpush1.msra.mxu0 0.0
    %1249 = vmatprep.subr.mxu0 0.0
    %1250 = vmatpush1.msra.mxu0 0.0
    %1251 = vmatprep.subr.mxu0 0.0
    %1252 = vmatpush1.msra.mxu0 0.0
    %1253 = vmatprep.subr.mxu0 0.0
    %1254 = vmatpush1.msra.mxu0 0.0
    %1255 = vmatprep.subr.mxu0 0.0
    %1256 = vmatpush1.msra.mxu0 0.0
    %1257 = vmatprep.subr.mxu0 0.0
    %1258 = vmatpush1.msra.mxu0 0.0
    %1259 = vmatprep.subr.mxu0 0.0
    %1260 = vmatpush1.msra.mxu0 0.0
    %1261 = vmatprep.mubr.f32.mxu0 0.0
    %v1262 = vand.u32 %v589, 4294901760
    %v1263 = vsub.f32 %v589, %v1262
    %1264 = vmatmul.mubr.f32.gmra.mrb[0].mxu0 %v1263
    %v1265 = vpop.f32.mrb[0].mxu0
    %v1266 = vadd.f32 %v1192, %v1265
    %v1267 = vpop.f32.mrb[0].mxu0
    %1268 = vdwg.mxu0
    %1269 = vmatprep.subr.mxu0 0.0
    %v1270 = vand.u32 %v1042, 4294901760
    %1271 = vmatpush1.msra.mxu0 %v1270
    %1272 = vmatprep.subr.mxu0 0.0
    %1273 = vmatpush1.msra.mxu0 0.0
    %1274 = vmatprep.subr.mxu0 0.0
    %1275 = vmatpush1.msra.mxu0 0.0
    %1276 = vmatprep.subr.mxu0 0.0
    %1277 = vmatpush1.msra.mxu0 0.0
    %1278 = vmatprep.subr.mxu0 0.0
    %1279 = vmatpush1.msra.mxu0 0.0
    %1280 = vmatprep.subr.mxu0 0.0
    %1281 = vmatpush1.msra.mxu0 0.0
    %1282 = vmatprep.subr.mxu0 0.0
    %1283 = vmatpush1.msra.mxu0 0.0
    %1284 = vmatprep.subr.mxu0 0.0
    %1285 = vmatpush1.msra.mxu0 0.0
    %1286 = vmatprep.subr.mxu0 0.0
    %1287 = vmatpush1.msra.mxu0 0.0
    %1288 = vmatprep.subr.mxu0 0.0
    %1289 = vmatpush1.msra.mxu0 0.0
    %1290 = vmatprep.subr.mxu0 0.0
    %1291 = vmatpush1.msra.mxu0 0.0
    %1292 = vmatprep.subr.mxu0 0.0
    %1293 = vmatpush1.msra.mxu0 0.0
    %1294 = vmatprep.subr.mxu0 0.0
    %1295 = vmatpush1.msra.mxu0 0.0
    %1296 = vmatprep.subr.mxu0 0.0
    %1297 = vmatpush1.msra.mxu0 0.0
    %1298 = vmatprep.subr.mxu0 0.0
    %1299 = vmatpush1.msra.mxu0 0.0
    %1300 = vmatprep.subr.mxu0 0.0
    %1301 = vmatpush1.msra.mxu0 0.0
    %1302 = vmatprep.subr.mxu0 0.0
    %1303 = vmatpush1.msra.mxu0 0.0
    %1304 = vmatprep.subr.mxu0 0.0
    %1305 = vmatpush1.msra.mxu0 0.0
    %1306 = vmatprep.subr.mxu0 0.0
    %1307 = vmatpush1.msra.mxu0 0.0
    %1308 = vmatprep.subr.mxu0 0.0
    %1309 = vmatpush1.msra.mxu0 0.0
    %1310 = vmatprep.subr.mxu0 0.0
    %1311 = vmatpush1.msra.mxu0 0.0
    %1312 = vmatprep.subr.mxu0 0.0
    %1313 = vmatpush1.msra.mxu0 0.0
    %1314 = vmatprep.subr.mxu0 0.0
    %1315 = vmatpush1.msra.mxu0 0.0
    %1316 = vmatprep.subr.mxu0 0.0
    %1317 = vmatpush1.msra.mxu0 0.0
    %1318 = vmatprep.subr.mxu0 0.0
    %1319 = vmatpush1.msra.mxu0 0.0
    %1320 = vmatprep.subr.mxu0 0.0
    %1321 = vmatpush1.msra.mxu0 0.0
    %1322 = vmatprep.subr.mxu0 0.0
    %1323 = vmatpush1.msra.mxu0 0.0
    %1324 = vmatprep.subr.mxu0 0.0
    %1325 = vmatpush1.msra.mxu0 0.0
    %1326 = vmatprep.subr.mxu0 0.0
    %1327 = vmatpush1.msra.mxu0 0.0
    %1328 = vmatprep.subr.mxu0 0.0
    %1329 = vmatpush1.msra.mxu0 0.0
    %1330 = vmatprep.subr.mxu0 0.0
    %1331 = vmatpush1.msra.mxu0 0.0
    %1332 = vmatprep.subr.mxu0 0.0
    %1333 = vmatpush1.msra.mxu0 0.0
    %1334 = vmatprep.mubr.f32.mxu0 0.0
    %v1335 = vand.u32 %v589, 4294901760
    %v1336 = vsub.f32 %v589, %v1335
    %v1337 = vand.u32 %v1336, 4294901760
    %1338 = vmatmul.mubr.f32.gmra.mrb[0].mxu0 %v1337
    %v1339 = vpop.f32.mrb[0].mxu0
    %v1340 = vadd.f32 %v1266, %v1339
    %v1341 = vpop.f32.mrb[0].mxu0
    %1342 = vdwg.mxu0
    %1343 = vmatprep.subr.mxu0 0.0
    %v1344 = vand.u32 %v1042, 4294901760
    %v1345 = vsub.f32 %v1042, %v1344
    %v1346 = vand.u32 %v1345, 4294901760
    %1347 = vmatpush1.msra.mxu0 %v1346
    %1348 = vmatprep.subr.mxu0 0.0
    %1349 = vmatpush1.msra.mxu0 0.0
    %1350 = vmatprep.subr.mxu0 0.0
    %1351 = vmatpush1.msra.mxu0 0.0
    %1352 = vmatprep.subr.mxu0 0.0
    %1353 = vmatpush1.msra.mxu0 0.0
    %1354 = vmatprep.subr.mxu0 0.0
    %1355 = vmatpush1.msra.mxu0 0.0
    %1356 = vmatprep.subr.mxu0 0.0
    %1357 = vmatpush1.msra.mxu0 0.0
    %1358 = vmatprep.subr.mxu0 0.0
    %1359 = vmatpush1.msra.mxu0 0.0
    %1360 = vmatprep.subr.mxu0 0.0
    %1361 = vmatpush1.msra.mxu0 0.0
    %1362 = vmatprep.subr.mxu0 0.0
    %1363 = vmatpush1.msra.mxu0 0.0
    %1364 = vmatprep.subr.mxu0 0.0
    %1365 = vmatpush1.msra.mxu0 0.0
    %1366 = vmatprep.subr.mxu0 0.0
    %1367 = vmatpush1.msra.mxu0 0.0
    %1368 = vmatprep.subr.mxu0 0.0
    %1369 = vmatpush1.msra.mxu0 0.0
    %1370 = vmatprep.subr.mxu0 0.0
    %1371 = vmatpush1.msra.mxu0 0.0
    %1372 = vmatprep.subr.mxu0 0.0
    %1373 = vmatpush1.msra.mxu0 0.0
    %1374 = vmatprep.subr.mxu0 0.0
    %1375 = vmatpush1.msra.mxu0 0.0
    %1376 = vmatprep.subr.mxu0 0.0
    %1377 = vmatpush1.msra.mxu0 0.0
    %1378 = vmatprep.subr.mxu0 0.0
    %1379 = vmatpush1.msra.mxu0 0.0
    %1380 = vmatprep.subr.mxu0 0.0
    %1381 = vmatpush1.msra.mxu0 0.0
    %1382 = vmatprep.subr.mxu0 0.0
    %1383 = vmatpush1.msra.mxu0 0.0
    %1384 = vmatprep.subr.mxu0 0.0
    %1385 = vmatpush1.msra.mxu0 0.0
    %1386 = vmatprep.subr.mxu0 0.0
    %1387 = vmatpush1.msra.mxu0 0.0
    %1388 = vmatprep.subr.mxu0 0.0
    %1389 = vmatpush1.msra.mxu0 0.0
    %1390 = vmatprep.subr.mxu0 0.0
    %1391 = vmatpush1.msra.mxu0 0.0
    %1392 = vmatprep.subr.mxu0 0.0
    %1393 = vmatpush1.msra.mxu0 0.0
    %1394 = vmatprep.subr.mxu0 0.0
    %1395 = vmatpush1.msra.mxu0 0.0
    %1396 = vmatprep.subr.mxu0 0.0
    %1397 = vmatpush1.msra.mxu0 0.0
    %1398 = vmatprep.subr.mxu0 0.0
    %1399 = vmatpush1.msra.mxu0 0.0
    %1400 = vmatprep.subr.mxu0 0.0
    %1401 = vmatpush1.msra.mxu0 0.0
    %1402 = vmatprep.subr.mxu0 0.0
    %1403 = vmatpush1.msra.mxu0 0.0
    %1404 = vmatprep.subr.mxu0 0.0
    %1405 = vmatpush1.msra.mxu0 0.0
    %1406 = vmatprep.subr.mxu0 0.0
    %1407 = vmatpush1.msra.mxu0 0.0
    %1408 = vmatprep.subr.mxu0 0.0
    %1409 = vmatpush1.msra.mxu0 0.0
    %1410 = vmatprep.mubr.f32.mxu0 0.0
    %v1411 = vand.u32 %v589, 4294901760
    %1412 = vmatmul.mubr.f32.gmra.mrb[0].mxu0 %v1411
    %v1413 = vpop.f32.mrb[0].mxu0
    %v1414 = vadd.f32 %v1340, %v1413
    %v1415 = vpop.f32.mrb[0].mxu0
    %1416 = vdwg.mxu0
    %1417 = vmatprep.subr.mxu0 0.0
    %v1418 = vand.u32 %v1042, 4294901760
    %1419 = vmatpush1.msra.mxu0 %v1418
    %1420 = vmatprep.subr.mxu0 0.0
    %1421 = vmatpush1.msra.mxu0 0.0
    %1422 = vmatprep.subr.mxu0 0.0
    %1423 = vmatpush1.msra.mxu0 0.0
    %1424 = vmatprep.subr.mxu0 0.0
    %1425 = vmatpush1.msra.mxu0 0.0
    %1426 = vmatprep.subr.mxu0 0.0
    %1427 = vmatpush1.msra.mxu0 0.0
    %1428 = vmatprep.subr.mxu0 0.0
    %1429 = vmatpush1.msra.mxu0 0.0
    %1430 = vmatprep.subr.mxu0 0.0
    %1431 = vmatpush1.msra.mxu0 0.0
    %1432 = vmatprep.subr.mxu0 0.0
    %1433 = vmatpush1.msra.mxu0 0.0
    %1434 = vmatprep.subr.mxu0 0.0
    %1435 = vmatpush1.msra.mxu0 0.0
    %1436 = vmatprep.subr.mxu0 0.0
    %1437 = vmatpush1.msra.mxu0 0.0
    %1438 = vmatprep.subr.mxu0 0.0
    %1439 = vmatpush1.msra.mxu0 0.0
    %1440 = vmatprep.subr.mxu0 0.0
    %1441 = vmatpush1.msra.mxu0 0.0
    %1442 = vmatprep.subr.mxu0 0.0
    %1443 = vmatpush1.msra.mxu0 0.0
    %1444 = vmatprep.subr.mxu0 0.0
    %1445 = vmatpush1.msra.mxu0 0.0
    %1446 = vmatprep.subr.mxu0 0.0
    %1447 = vmatpush1.msra.mxu0 0.0
    %1448 = vmatprep.subr.mxu0 0.0
    %1449 = vmatpush1.msra.mxu0 0.0
    %1450 = vmatprep.subr.mxu0 0.0
    %1451 = vmatpush1.msra.mxu0 0.0
    %1452 = vmatprep.subr.mxu0 0.0
    %1453 = vmatpush1.msra.mxu0 0.0
    %1454 = vmatprep.subr.mxu0 0.0
    %1455 = vmatpush1.msra.mxu0 0.0
    %1456 = vmatprep.subr.mxu0 0.0
    %1457 = vmatpush1.msra.mxu0 0.0
    %1458 = vmatprep.subr.mxu0 0.0
    %1459 = vmatpush1.msra.mxu0 0.0
    %1460 = vmatprep.subr.mxu0 0.0
    %1461 = vmatpush1.msra.mxu0 0.0
    %1462 = vmatprep.subr.mxu0 0.0
    %1463 = vmatpush1.msra.mxu0 0.0
    %1464 = vmatprep.subr.mxu0 0.0
    %1465 = vmatpush1.msra.mxu0 0.0
    %1466 = vmatprep.subr.mxu0 0.0
    %1467 = vmatpush1.msra.mxu0 0.0
    %1468 = vmatprep.subr.mxu0 0.0
    %1469 = vmatpush1.msra.mxu0 0.0
    %1470 = vmatprep.subr.mxu0 0.0
    %1471 = vmatpush1.msra.mxu0 0.0
    %1472 = vmatprep.subr.mxu0 0.0
    %1473 = vmatpush1.msra.mxu0 0.0
    %1474 = vmatprep.subr.mxu0 0.0
    %1475 = vmatpush1.msra.mxu0 0.0
    %1476 = vmatprep.subr.mxu0 0.0
    %1477 = vmatpush1.msra.mxu0 0.0
    %1478 = vmatprep.subr.mxu0 0.0
    %1479 = vmatpush1.msra.mxu0 0.0
    %1480 = vmatprep.subr.mxu0 0.0
    %1481 = vmatpush1.msra.mxu0 0.0
    %1482 = vmatprep.mubr.f32.mxu0 0.0
    %v1483 = vand.u32 %v589, 4294901760
    %1484 = vmatmul.mubr.f32.gmra.mrb[0].mxu0 %v1483
    %v1485 = vpop.f32.mrb[0].mxu0
    %v1486 = vadd.f32 %v1414, %v1485
    %v1487 = vpop.f32.mrb[0].mxu0
    %1488 = vdwg.mxu0
    %v1489 = vrsqrt.pop %v1486
    %v1490 = vmul.f32 %v75, %v1489
    %v1491 = vmul.f32 %v1034, %v1490
    %v1492 = vsub.f32 %v76, %v1491
    %v1494 = vlaneseq
    %v1495 = vshrl.u32 %v1494, 7
    %v1496 = vsub.s32 0, %v1495
    %v1497 = vrot.slane %v1490, %v1496
    %v1499 = vmul.f32 %v584, %v1497
    %v1501 = vlaneseq
    %v1502 = vshrl.u32 %v1501, 7
    %v1503 = vsub.s32 0, %v1502
    %v1504 = vrot.slane %v1492, %v1503
    %v1506 = vadd.f32 %v1499, %v1504
    %v1507 = vmax.f32 %v1506, 0.0
    %1508 = vmatprep.subr.mxu0 0.0
    %v1509 = vand.u32 %v81, 4294901760
    %1510 = vmatpush1.msra.mxu0 %v1509
    %1511 = vmatprep.subr.mxu0 0.0
    %v1512 = vand.u32 %v82, 4294901760
    %1513 = vmatpush1.msra.mxu0 %v1512
    %1514 = vmatprep.subr.mxu0 0.0
    %v1515 = vand.u32 %v83, 4294901760
    %1516 = vmatpush1.msra.mxu0 %v1515
    %1517 = vmatprep.subr.mxu0 0.0
    %v1518 = vand.u32 %v84, 4294901760
    %1519 = vmatpush1.msra.mxu0 %v1518
    %1520 = vmatprep.subr.mxu0 0.0
    %v1521 = vand.u32 %v85, 4294901760
    %1522 = vmatpush1.msra.mxu0 %v1521
    %1523 = vmatprep.subr.mxu0 0.0
    %v1524 = vand.u32 %v86, 4294901760
    %1525 = vmatpush1.msra.mxu0 %v1524
    %1526 = vmatprep.subr.mxu0 0.0
    %v1527 = vand.u32 %v87, 4294901760
    %1528 = vmatpush1.msra.mxu0 %v1527
    %1529 = vmatprep.subr.mxu0 0.0
    %v1530 = vand.u32 %v88, 4294901760
    %1531 = vmatpush1.msra.mxu0 %v1530
    %1532 = vmatprep.subr.mxu0 0.0
    %v1533 = vand.u32 %v89, 4294901760
    %1534 = vmatpush1.msra.mxu0 %v1533
    %1535 = vmatprep.subr.mxu0 0.0
    %v1536 = vand.u32 %v90, 4294901760
    %1537 = vmatpush1.msra.mxu0 %v1536
    %1538 = vmatprep.subr.mxu0 0.0
    %v1539 = vand.u32 %v91, 4294901760
    %1540 = vmatpush1.msra.mxu0 %v1539
    %1541 = vmatprep.subr.mxu0 0.0
    %v1542 = vand.u32 %v92, 4294901760
    %1543 = vmatpush1.msra.mxu0 %v1542
    %1544 = vmatprep.subr.mxu0 0.0
    %v1545 = vand.u32 %v93, 4294901760
    %1546 = vmatpush1.msra.mxu0 %v1545
    %1547 = vmatprep.subr.mxu0 0.0
    %v1548 = vand.u32 %v94, 4294901760
    %1549 = vmatpush1.msra.mxu0 %v1548
    %1550 = vmatprep.subr.mxu0 0.0
    %v1551 = vand.u32 %v95, 4294901760
    %1552 = vmatpush1.msra.mxu0 %v1551
    %1553 = vmatprep.subr.mxu0 0.0
    %v1554 = vand.u32 %v96, 4294901760
    %1555 = vmatpush1.msra.mxu0 %v1554
    %1556 = vmatprep.subr.mxu0 0.0
    %1557 = vmatpush1.msra.mxu0 0.0
    %1558 = vmatprep.subr.mxu0 0.0
    %1559 = vmatpush1.msra.mxu0 0.0
    %1560 = vmatprep.subr.mxu0 0.0
    %1561 = vmatpush1.msra.mxu0 0.0
    %1562 = vmatprep.subr.mxu0 0.0
    %1563 = vmatpush1.msra.mxu0 0.0
    %1564 = vmatprep.subr.mxu0 0.0
    %1565 = vmatpush1.msra.mxu0 0.0
    %1566 = vmatprep.subr.mxu0 0.0
    %1567 = vmatpush1.msra.mxu0 0.0
    %1568 = vmatprep.subr.mxu0 0.0
    %1569 = vmatpush1.msra.mxu0 0.0
    %1570 = vmatprep.subr.mxu0 0.0
    %1571 = vmatpush1.msra.mxu0 0.0
    %1572 = vmatprep.subr.mxu0 0.0
    %1573 = vmatpush1.msra.mxu0 0.0
    %1574 = vmatprep.subr.mxu0 0.0
    %1575 = vmatpush1.msra.mxu0 0.0
    %1576 = vmatprep.subr.mxu0 0.0
    %1577 = vmatpush1.msra.mxu0 0.0
    %1578 = vmatprep.subr.mxu0 0.0
    %1579 = vmatpush1.msra.mxu0 0.0
    %1580 = vmatprep.subr.mxu0 0.0
    %1581 = vmatpush1.msra.mxu0 0.0
    %1582 = vmatprep.subr.mxu0 0.0
    %1583 = vmatpush1.msra.mxu0 0.0
    %1584 = vmatprep.subr.mxu0 0.0
    %1585 = vmatpush1.msra.mxu0 0.0
    %1586 = vmatprep.subr.mxu0 0.0
    %1587 = vmatpush1.msra.mxu0 0.0
    %1588 = vmatprep.mubr.f32.mxu0 0.0
    %v1589 = vand.u32 %v1507, 4294901760
    %v1590 = vsub.f32 %v1507, %v1589
    %v1591 = vand.u32 %v1590, 4294901760
    %v1592 = vsub.f32 %v1590, %v1591
    %v1593 = vand.u32 %v1592, 4294901760
    %1594 = vmatmul.mubr.f32.gmra.mrb[0].mxu0 %v1593
    %v1595 = vpop.f32.mrb[0].mxu0
    %v1596 = vadd.f32 0.0, %v1595
    %v1597 = vpop.f32.mrb[0].mxu0
    %1598 = vdwg.mxu0
    %1599 = vmatprep.subr.mxu0 0.0
    %v1600 = vand.u32 %v81, 4294901760
    %v1601 = vsub.f32 %v81, %v1600
    %v1602 = vand.u32 %v1601, 4294901760
    %v1603 = vsub.f32 %v1601, %v1602
    %v1604 = vand.u32 %v1603, 4294901760
    %1605 = vmatpush1.msra.mxu0 %v1604
    %1606 = vmatprep.subr.mxu0 0.0
    %v1607 = vand.u32 %v82, 4294901760
    %v1608 = vsub.f32 %v82, %v1607
    %v1609 = vand.u32 %v1608, 4294901760
    %v1610 = vsub.f32 %v1608, %v1609
    %v1611 = vand.u32 %v1610, 4294901760
    %1612 = vmatpush1.msra.mxu0 %v1611
    %1613 = vmatprep.subr.mxu0 0.0
    %v1614 = vand.u32 %v83, 4294901760
    %v1615 = vsub.f32 %v83, %v1614
    %v1616 = vand.u32 %v1615, 4294901760
    %v1617 = vsub.f32 %v1615, %v1616
    %v1618 = vand.u32 %v1617, 4294901760
    %1619 = vmatpush1.msra.mxu0 %v1618
    %1620 = vmatprep.subr.mxu0 0.0
    %v1621 = vand.u32 %v84, 4294901760
    %v1622 = vsub.f32 %v84, %v1621
    %v1623 = vand.u32 %v1622, 4294901760
    %v1624 = vsub.f32 %v1622, %v1623
    %v1625 = vand.u32 %v1624, 4294901760
    %1626 = vmatpush1.msra.mxu0 %v1625
    %1627 = vmatprep.subr.mxu0 0.0
    %v1628 = vand.u32 %v85, 4294901760
    %v1629 = vsub.f32 %v85, %v1628
    %v1630 = vand.u32 %v1629, 4294901760
    %v1631 = vsub.f32 %v1629, %v1630
    %v1632 = vand.u32 %v1631, 4294901760
    %1633 = vmatpush1.msra.mxu0 %v1632
    %1634 = vmatprep.subr.mxu0 0.0
    %v1635 = vand.u32 %v86, 4294901760
    %v1636 = vsub.f32 %v86, %v1635
    %v1637 = vand.u32 %v1636, 4294901760
    %v1638 = vsub.f32 %v1636, %v1637
    %v1639 = vand.u32 %v1638, 4294901760
    %1640 = vmatpush1.msra.mxu0 %v1639
    %1641 = vmatprep.subr.mxu0 0.0
    %v1642 = vand.u32 %v87, 4294901760
    %v1643 = vsub.f32 %v87, %v1642
    %v1644 = vand.u32 %v1643, 4294901760
    %v1645 = vsub.f32 %v1643, %v1644
    %v1646 = vand.u32 %v1645, 4294901760
    %1647 = vmatpush1.msra.mxu0 %v1646
    %1648 = vmatprep.subr.mxu0 0.0
    %v1649 = vand.u32 %v88, 4294901760
    %v1650 = vsub.f32 %v88, %v1649
    %v1651 = vand.u32 %v1650, 4294901760
    %v1652 = vsub.f32 %v1650, %v1651
    %v1653 = vand.u32 %v1652, 4294901760
    %1654 = vmatpush1.msra.mxu0 %v1653
    %1655 = vmatprep.subr.mxu0 0.0
    %v1656 = vand.u32 %v89, 4294901760
    %v1657 = vsub.f32 %v89, %v1656
    %v1658 = vand.u32 %v1657, 4294901760
    %v1659 = vsub.f32 %v1657, %v1658
    %v1660 = vand.u32 %v1659, 4294901760
    %1661 = vmatpush1.msra.mxu0 %v1660
    %1662 = vmatprep.subr.mxu0 0.0
    %v1663 = vand.u32 %v90, 4294901760
    %v1664 = vsub.f32 %v90, %v1663
    %v1665 = vand.u32 %v1664, 4294901760
    %v1666 = vsub.f32 %v1664, %v1665
    %v1667 = vand.u32 %v1666, 4294901760
    %1668 = vmatpush1.msra.mxu0 %v1667
    %1669 = vmatprep.subr.mxu0 0.0
    %v1670 = vand.u32 %v91, 4294901760
    %v1671 = vsub.f32 %v91, %v1670
    %v1672 = vand.u32 %v1671, 4294901760
    %v1673 = vsub.f32 %v1671, %v1672
    %v1674 = vand.u32 %v1673, 4294901760
    %1675 = vmatpush1.msra.mxu0 %v1674
    %1676 = vmatprep.subr.mxu0 0.0
    %v1677 = vand.u32 %v92, 4294901760
    %v1678 = vsub.f32 %v92, %v1677
    %v1679 = vand.u32 %v1678, 4294901760
    %v1680 = vsub.f32 %v1678, %v1679
    %v1681 = vand.u32 %v1680, 4294901760
    %1682 = vmatpush1.msra.mxu0 %v1681
    %1683 = vmatprep.subr.mxu0 0.0
    %v1684 = vand.u32 %v93, 4294901760
    %v1685 = vsub.f32 %v93, %v1684
    %v1686 = vand.u32 %v1685, 4294901760
    %v1687 = vsub.f32 %v1685, %v1686
    %v1688 = vand.u32 %v1687, 4294901760
    %1689 = vmatpush1.msra.mxu0 %v1688
    %1690 = vmatprep.subr.mxu0 0.0
    %v1691 = vand.u32 %v94, 4294901760
    %v1692 = vsub.f32 %v94, %v1691
    %v1693 = vand.u32 %v1692, 4294901760
    %v1694 = vsub.f32 %v1692, %v1693
    %v1695 = vand.u32 %v1694, 4294901760
    %1696 = vmatpush1.msra.mxu0 %v1695
    %1697 = vmatprep.subr.mxu0 0.0
    %v1698 = vand.u32 %v95, 4294901760
    %v1699 = vsub.f32 %v95, %v1698
    %v1700 = vand.u32 %v1699, 4294901760
    %v1701 = vsub.f32 %v1699, %v1700
    %v1702 = vand.u32 %v1701, 4294901760
    %1703 = vmatpush1.msra.mxu0 %v1702
    %1704 = vmatprep.subr.mxu0 0.0
    %v1705 = vand.u32 %v96, 4294901760
    %v1706 = vsub.f32 %v96, %v1705
    %v1707 = vand.u32 %v1706, 4294901760
    %v1708 = vsub.f32 %v1706, %v1707
    %v1709 = vand.u32 %v1708, 4294901760
    %1710 = vmatpush1.msra.mxu0 %v1709
    %1711 = vmatprep.subr.mxu0 0.0
    %1712 = vmatpush1.msra.mxu0 0.0
    %1713 = vmatprep.subr.mxu0 0.0
    %1714 = vmatpush1.msra.mxu0 0.0
    %1715 = vmatprep.subr.mxu0 0.0
    %1716 = vmatpush1.msra.mxu0 0.0
    %1717 = vmatprep.subr.mxu0 0.0
    %1718 = vmatpush1.msra.mxu0 0.0
    %1719 = vmatprep.subr.mxu0 0.0
    %1720 = vmatpush1.msra.mxu0 0.0
    %1721 = vmatprep.subr.mxu0 0.0
    %1722 = vmatpush1.msra.mxu0 0.0
    %1723 = vmatprep.subr.mxu0 0.0
    %1724 = vmatpush1.msra.mxu0 0.0
    %1725 = vmatprep.subr.mxu0 0.0
    %1726 = vmatpush1.msra.mxu0 0.0
    %1727 = vmatprep.subr.mxu0 0.0
    %1728 = vmatpush1.msra.mxu0 0.0
    %1729 = vmatprep.subr.mxu0 0.0
    %1730 = vmatpush1.msra.mxu0 0.0
    %1731 = vmatprep.subr.mxu0 0.0
    %1732 = vmatpush1.msra.mxu0 0.0
    %1733 = vmatprep.subr.mxu0 0.0
    %1734 = vmatpush1.msra.mxu0 0.0
    %1735 = vmatprep.subr.mxu0 0.0
    %1736 = vmatpush1.msra.mxu0 0.0
    %1737 = vmatprep.subr.mxu0 0.0
    %1738 = vmatpush1.msra.mxu0 0.0
    %1739 = vmatprep.subr.mxu0 0.0
    %1740 = vmatpush1.msra.mxu0 0.0
    %1741 = vmatprep.subr.mxu0 0.0
    %1742 = vmatpush1.msra.mxu0 0.0
    %1743 = vmatprep.mubr.f32.mxu0 0.0
    %v1744 = vand.u32 %v1507, 4294901760
    %1745 = vmatmul.mubr.f32.gmra.mrb[0].mxu0 %v1744
    %v1746 = vpop.f32.mrb[0].mxu0
    %v1747 = vadd.f32 %v1596, %v1746
    %v1748 = vpop.f32.mrb[0].mxu0
    %1749 = vdwg.mxu0
    %1750 = vmatprep.subr.mxu0 0.0
    %v1751 = vand.u32 %v81, 4294901760
    %v1752 = vsub.f32 %v81, %v1751
    %1753 = vmatpush1.msra.mxu0 %v1752
    %1754 = vmatprep.subr.mxu0 0.0
    %v1755 = vand.u32 %v82, 4294901760
    %v1756 = vsub.f32 %v82, %v1755
    %1757 = vmatpush1.msra.mxu0 %v1756
    %1758 = vmatprep.subr.mxu0 0.0
    %v1759 = vand.u32 %v83, 4294901760
    %v1760 = vsub.f32 %v83, %v1759
    %1761 = vmatpush1.msra.mxu0 %v1760
    %1762 = vmatprep.subr.mxu0 0.0
    %v1763 = vand.u32 %v84, 4294901760
    %v1764 = vsub.f32 %v84, %v1763
    %1765 = vmatpush1.msra.mxu0 %v1764
    %1766 = vmatprep.subr.mxu0 0.0
    %v1767 = vand.u32 %v85, 4294901760
    %v1768 = vsub.f32 %v85, %v1767
    %1769 = vmatpush1.msra.mxu0 %v1768
    %1770 = vmatprep.subr.mxu0 0.0
    %v1771 = vand.u32 %v86, 4294901760
    %v1772 = vsub.f32 %v86, %v1771
    %1773 = vmatpush1.msra.mxu0 %v1772
    %1774 = vmatprep.subr.mxu0 0.0
    %v1775 = vand.u32 %v87, 4294901760
    %v1776 = vsub.f32 %v87, %v1775
    %1777 = vmatpush1.msra.mxu0 %v1776
    %1778 = vmatprep.subr.mxu0 0.0
    %v1779 = vand.u32 %v88, 4294901760
    %v1780 = vsub.f32 %v88, %v1779
    %1781 = vmatpush1.msra.mxu0 %v1780
    %1782 = vmatprep.subr.mxu0 0.0
    %v1783 = vand.u32 %v89, 4294901760
    %v1784 = vsub.f32 %v89, %v1783
    %1785 = vmatpush1.msra.mxu0 %v1784
    %1786 = vmatprep.subr.mxu0 0.0
    %v1787 = vand.u32 %v90, 4294901760
    %v1788 = vsub.f32 %v90, %v1787
    %1789 = vmatpush1.msra.mxu0 %v1788
    %1790 = vmatprep.subr.mxu0 0.0
    %v1791 = vand.u32 %v91, 4294901760
    %v1792 = vsub.f32 %v91, %v1791
    %1793 = vmatpush1.msra.mxu0 %v1792
    %1794 = vmatprep.subr.mxu0 0.0
    %v1795 = vand.u32 %v92, 4294901760
    %v1796 = vsub.f32 %v92, %v1795
    %1797 = vmatpush1.msra.mxu0 %v1796
    %1798 = vmatprep.subr.mxu0 0.0
    %v1799 = vand.u32 %v93, 4294901760
    %v1800 = vsub.f32 %v93, %v1799
    %1801 = vmatpush1.msra.mxu0 %v1800
    %1802 = vmatprep.subr.mxu0 0.0
    %v1803 = vand.u32 %v94, 4294901760
    %v1804 = vsub.f32 %v94, %v1803
    %1805 = vmatpush1.msra.mxu0 %v1804
    %1806 = vmatprep.subr.mxu0 0.0
    %v1807 = vand.u32 %v95, 4294901760
    %v1808 = vsub.f32 %v95, %v1807
    %1809 = vmatpush1.msra.mxu0 %v1808
    %1810 = vmatprep.subr.mxu0 0.0
    %v1811 = vand.u32 %v96, 4294901760
    %v1812 = vsub.f32 %v96, %v1811
    %1813 = vmatpush1.msra.mxu0 %v1812
    %1814 = vmatprep.subr.mxu0 0.0
    %1815 = vmatpush1.msra.mxu0 0.0
    %1816 = vmatprep.subr.mxu0 0.0
    %1817 = vmatpush1.msra.mxu0 0.0
    %1818 = vmatprep.subr.mxu0 0.0
    %1819 = vmatpush1.msra.mxu0 0.0
    %1820 = vmatprep.subr.mxu0 0.0
    %1821 = vmatpush1.msra.mxu0 0.0
    %1822 = vmatprep.subr.mxu0 0.0
    %1823 = vmatpush1.msra.mxu0 0.0
    %1824 = vmatprep.subr.mxu0 0.0
    %1825 = vmatpush1.msra.mxu0 0.0
    %1826 = vmatprep.subr.mxu0 0.0
    %1827 = vmatpush1.msra.mxu0 0.0
    %1828 = vmatprep.subr.mxu0 0.0
    %1829 = vmatpush1.msra.mxu0 0.0
    %1830 = vmatprep.subr.mxu0 0.0
    %1831 = vmatpush1.msra.mxu0 0.0
    %1832 = vmatprep.subr.mxu0 0.0
    %1833 = vmatpush1.msra.mxu0 0.0
    %1834 = vmatprep.subr.mxu0 0.0
    %1835 = vmatpush1.msra.mxu0 0.0
    %1836 = vmatprep.subr.mxu0 0.0
    %1837 = vmatpush1.msra.mxu0 0.0
    %1838 = vmatprep.subr.mxu0 0.0
    %1839 = vmatpush1.msra.mxu0 0.0
    %1840 = vmatprep.subr.mxu0 0.0
    %1841 = vmatpush1.msra.mxu0 0.0
    %1842 = vmatprep.subr.mxu0 0.0
    %1843 = vmatpush1.msra.mxu0 0.0
    %1844 = vmatprep.subr.mxu0 0.0
    %1845 = vmatpush1.msra.mxu0 0.0
    %1846 = vmatprep.mubr.f32.mxu0 0.0
    %v1847 = vand.u32 %v1507, 4294901760
    %v1848 = vsub.f32 %v1507, %v1847
    %1849 = vmatmul.mubr.f32.gmra.mrb[0].mxu0 %v1848
    %v1850 = vpop.f32.mrb[0].mxu0
    %v1851 = vadd.f32 %v1747, %v1850
    %v1852 = vpop.f32.mrb[0].mxu0
    %1853 = vdwg.mxu0
    %1854 = vmatprep.subr.mxu0 0.0
    %v1855 = vand.u32 %v81, 4294901760
    %1856 = vmatpush1.msra.mxu0 %v1855
    %1857 = vmatprep.subr.mxu0 0.0
    %v1858 = vand.u32 %v82, 4294901760
    %1859 = vmatpush1.msra.mxu0 %v1858
    %1860 = vmatprep.subr.mxu0 0.0
    %v1861 = vand.u32 %v83, 4294901760
    %1862 = vmatpush1.msra.mxu0 %v1861
    %1863 = vmatprep.subr.mxu0 0.0
    %v1864 = vand.u32 %v84, 4294901760
    %1865 = vmatpush1.msra.mxu0 %v1864
    %1866 = vmatprep.subr.mxu0 0.0
    %v1867 = vand.u32 %v85, 4294901760
    %1868 = vmatpush1.msra.mxu0 %v1867
    %1869 = vmatprep.subr.mxu0 0.0
    %v1870 = vand.u32 %v86, 4294901760
    %1871 = vmatpush1.msra.mxu0 %v1870
    %1872 = vmatprep.subr.mxu0 0.0
    %v1873 = vand.u32 %v87, 4294901760
    %1874 = vmatpush1.msra.mxu0 %v1873
    %1875 = vmatprep.subr.mxu0 0.0
    %v1876 = vand.u32 %v88, 4294901760
    %1877 = vmatpush1.msra.mxu0 %v1876
    %1878 = vmatprep.subr.mxu0 0.0
    %v1879 = vand.u32 %v89, 4294901760
    %1880 = vmatpush1.msra.mxu0 %v1879
    %1881 = vmatprep.subr.mxu0 0.0
    %v1882 = vand.u32 %v90, 4294901760
    %1883 = vmatpush1.msra.mxu0 %v1882
    %1884 = vmatprep.subr.mxu0 0.0
    %v1885 = vand.u32 %v91, 4294901760
    %1886 = vmatpush1.msra.mxu0 %v1885
    %1887 = vmatprep.subr.mxu0 0.0
    %v1888 = vand.u32 %v92, 4294901760
    %1889 = vmatpush1.msra.mxu0 %v1888
    %1890 = vmatprep.subr.mxu0 0.0
    %v1891 = vand.u32 %v93, 4294901760
    %1892 = vmatpush1.msra.mxu0 %v1891
    %1893 = vmatprep.subr.mxu0 0.0
    %v1894 = vand.u32 %v94, 4294901760
    %1895 = vmatpush1.msra.mxu0 %v1894
    %1896 = vmatprep.subr.mxu0 0.0
    %v1897 = vand.u32 %v95, 4294901760
    %1898 = vmatpush1.msra.mxu0 %v1897
    %1899 = vmatprep.subr.mxu0 0.0
    %v1900 = vand.u32 %v96, 4294901760
    %1901 = vmatpush1.msra.mxu0 %v1900
    %1902 = vmatprep.subr.mxu0 0.0
    %1903 = vmatpush1.msra.mxu0 0.0
    %1904 = vmatprep.subr.mxu0 0.0
    %1905 = vmatpush1.msra.mxu0 0.0
    %1906 = vmatprep.subr.mxu0 0.0
    %1907 = vmatpush1.msra.mxu0 0.0
    %1908 = vmatprep.subr.mxu0 0.0
    %1909 = vmatpush1.msra.mxu0 0.0
    %1910 = vmatprep.subr.mxu0 0.0
    %1911 = vmatpush1.msra.mxu0 0.0
    %1912 = vmatprep.subr.mxu0 0.0
    %1913 = vmatpush1.msra.mxu0 0.0
    %1914 = vmatprep.subr.mxu0 0.0
    %1915 = vmatpush1.msra.mxu0 0.0
    %1916 = vmatprep.subr.mxu0 0.0
    %1917 = vmatpush1.msra.mxu0 0.0
    %1918 = vmatprep.subr.mxu0 0.0
    %1919 = vmatpush1.msra.mxu0 0.0
    %1920 = vmatprep.subr.mxu0 0.0
    %1921 = vmatpush1.msra.mxu0 0.0
    %1922 = vmatprep.subr.mxu0 0.0
    %1923 = vmatpush1.msra.mxu0 0.0
    %1924 = vmatprep.subr.mxu0 0.0
    %1925 = vmatpush1.msra.mxu0 0.0
    %1926 = vmatprep.subr.mxu0 0.0
    %1927 = vmatpush1.msra.mxu0 0.0
    %1928 = vmatprep.subr.mxu0 0.0
    %1929 = vmatpush1.msra.mxu0 0.0
    %1930 = vmatprep.subr.mxu0 0.0
    %1931 = vmatpush1.msra.mxu0 0.0
    %1932 = vmatprep.subr.mxu0 0.0
    %1933 = vmatpush1.msra.mxu0 0.0
    %1934 = vmatprep.mubr.f32.mxu0 0.0
    %v1935 = vand.u32 %v1507, 4294901760
    %v1936 = vsub.f32 %v1507, %v1935
    %v1937 = vand.u32 %v1936, 4294901760
    %1938 = vmatmul.mubr.f32.gmra.mrb[0].mxu0 %v1937
    %v1939 = vpop.f32.mrb[0].mxu0
    %v1940 = vadd.f32 %v1851, %v1939
    %v1941 = vpop.f32.mrb[0].mxu0
    %1942 = vdwg.mxu0
    %1943 = vmatprep.subr.mxu0 0.0
    %v1944 = vand.u32 %v81, 4294901760
    %v1945 = vsub.f32 %v81, %v1944
    %v1946 = vand.u32 %v1945, 4294901760
    %1947 = vmatpush1.msra.mxu0 %v1946
    %1948 = vmatprep.subr.mxu0 0.0
    %v1949 = vand.u32 %v82, 4294901760
    %v1950 = vsub.f32 %v82, %v1949
    %v1951 = vand.u32 %v1950, 4294901760
    %1952 = vmatpush1.msra.mxu0 %v1951
    %1953 = vmatprep.subr.mxu0 0.0
    %v1954 = vand.u32 %v83, 4294901760
    %v1955 = vsub.f32 %v83, %v1954
    %v1956 = vand.u32 %v1955, 4294901760
    %1957 = vmatpush1.msra.mxu0 %v1956
    %1958 = vmatprep.subr.mxu0 0.0
    %v1959 = vand.u32 %v84, 4294901760
    %v1960 = vsub.f32 %v84, %v1959
    %v1961 = vand.u32 %v1960, 4294901760
    %1962 = vmatpush1.msra.mxu0 %v1961
    %1963 = vmatprep.subr.mxu0 0.0
    %v1964 = vand.u32 %v85, 4294901760
    %v1965 = vsub.f32 %v85, %v1964
    %v1966 = vand.u32 %v1965, 4294901760
    %1967 = vmatpush1.msra.mxu0 %v1966
    %1968 = vmatprep.subr.mxu0 0.0
    %v1969 = vand.u32 %v86, 4294901760
    %v1970 = vsub.f32 %v86, %v1969
    %v1971 = vand.u32 %v1970, 4294901760
    %1972 = vmatpush1.msra.mxu0 %v1971
    %1973 = vmatprep.subr.mxu0 0.0
    %v1974 = vand.u32 %v87, 4294901760
    %v1975 = vsub.f32 %v87, %v1974
    %v1976 = vand.u32 %v1975, 4294901760
    %1977 = vmatpush1.msra.mxu0 %v1976
    %1978 = vmatprep.subr.mxu0 0.0
    %v1979 = vand.u32 %v88, 4294901760
    %v1980 = vsub.f32 %v88, %v1979
    %v1981 = vand.u32 %v1980, 4294901760
    %1982 = vmatpush1.msra.mxu0 %v1981
    %1983 = vmatprep.subr.mxu0 0.0
    %v1984 = vand.u32 %v89, 4294901760
    %v1985 = vsub.f32 %v89, %v1984
    %v1986 = vand.u32 %v1985, 4294901760
    %1987 = vmatpush1.msra.mxu0 %v1986
    %1988 = vmatprep.subr.mxu0 0.0
    %v1989 = vand.u32 %v90, 4294901760
    %v1990 = vsub.f32 %v90, %v1989
    %v1991 = vand.u32 %v1990, 4294901760
    %1992 = vmatpush1.msra.mxu0 %v1991
    %1993 = vmatprep.subr.mxu0 0.0
    %v1994 = vand.u32 %v91, 4294901760
    %v1995 = vsub.f32 %v91, %v1994
    %v1996 = vand.u32 %v1995, 4294901760
    %1997 = vmatpush1.msra.mxu0 %v1996
    %1998 = vmatprep.subr.mxu0 0.0
    %v1999 = vand.u32 %v92, 4294901760
    %v2000 = vsub.f32 %v92, %v1999
    %v2001 = vand.u32 %v2000, 4294901760
    %2002 = vmatpush1.msra.mxu0 %v2001
    %2003 = vmatprep.subr.mxu0 0.0
    %v2004 = vand.u32 %v93, 4294901760
    %v2005 = vsub.f32 %v93, %v2004
    %v2006 = vand.u32 %v2005, 4294901760
    %2007 = vmatpush1.msra.mxu0 %v2006
    %2008 = vmatprep.subr.mxu0 0.0
    %v2009 = vand.u32 %v94, 4294901760
    %v2010 = vsub.f32 %v94, %v2009
    %v2011 = vand.u32 %v2010, 4294901760
    %2012 = vmatpush1.msra.mxu0 %v2011
    %2013 = vmatprep.subr.mxu0 0.0
    %v2014 = vand.u32 %v95, 4294901760
    %v2015 = vsub.f32 %v95, %v2014
    %v2016 = vand.u32 %v2015, 4294901760
    %2017 = vmatpush1.msra.mxu0 %v2016
    %2018 = vmatprep.subr.mxu0 0.0
    %v2019 = vand.u32 %v96, 4294901760
    %v2020 = vsub.f32 %v96, %v2019
    %v2021 = vand.u32 %v2020, 4294901760
    %2022 = vmatpush1.msra.mxu0 %v2021
    %2023 = vmatprep.subr.mxu0 0.0
    %2024 = vmatpush1.msra.mxu0 0.0
    %2025 = vmatprep.subr.mxu0 0.0
    %2026 = vmatpush1.msra.mxu0 0.0
    %2027 = vmatprep.subr.mxu0 0.0
    %2028 = vmatpush1.msra.mxu0 0.0
    %2029 = vmatprep.subr.mxu0 0.0
    %2030 = vmatpush1.msra.mxu0 0.0
    %2031 = vmatprep.subr.mxu0 0.0
    %2032 = vmatpush1.msra.mxu0 0.0
    %2033 = vmatprep.subr.mxu0 0.0
    %2034 = vmatpush1.msra.mxu0 0.0
    %2035 = vmatprep.subr.mxu0 0.0
    %2036 = vmatpush1.msra.mxu0 0.0
    %2037 = vmatprep.subr.mxu0 0.0
    %2038 = vmatpush1.msra.mxu0 0.0
    %2039 = vmatprep.subr.mxu0 0.0
    %2040 = vmatpush1.msra.mxu0 0.0
    %2041 = vmatprep.subr.mxu0 0.0
    %2042 = vmatpush1.msra.mxu0 0.0
    %2043 = vmatprep.subr.mxu0 0.0
    %2044 = vmatpush1.msra.mxu0 0.0
    %2045 = vmatprep.subr.mxu0 0.0
    %2046 = vmatpush1.msra.mxu0 0.0
    %2047 = vmatprep.subr.mxu0 0.0
    %2048 = vmatpush1.msra.mxu0 0.0
    %2049 = vmatprep.subr.mxu0 0.0
    %2050 = vmatpush1.msra.mxu0 0.0
    %2051 = vmatprep.subr.mxu0 0.0
    %2052 = vmatpush1.msra.mxu0 0.0
    %2053 = vmatprep.subr.mxu0 0.0
    %2054 = vmatpush1.msra.mxu0 0.0
    %2055 = vmatprep.mubr.f32.mxu0 0.0
    %v2056 = vand.u32 %v1507, 4294901760
    %2057 = vmatmul.mubr.f32.gmra.mrb[0].mxu0 %v2056
    %v2058 = vpop.f32.mrb[0].mxu0
    %v2059 = vadd.f32 %v1940, %v2058
    %v2060 = vpop.f32.mrb[0].mxu0
    %2061 = vdwg.mxu0
    %2062 = vmatprep.subr.mxu0 0.0
    %v2063 = vand.u32 %v81, 4294901760
    %2064 = vmatpush1.msra.mxu0 %v2063
    %2065 = vmatprep.subr.mxu0 0.0
    %v2066 = vand.u32 %v82, 4294901760
    %2067 = vmatpush1.msra.mxu0 %v2066
    %2068 = vmatprep.subr.mxu0 0.0
    %v2069 = vand.u32 %v83, 4294901760
    %2070 = vmatpush1.msra.mxu0 %v2069
    %2071 = vmatprep.subr.mxu0 0.0
    %v2072 = vand.u32 %v84, 4294901760
    %2073 = vmatpush1.msra.mxu0 %v2072
    %2074 = vmatprep.subr.mxu0 0.0
    %v2075 = vand.u32 %v85, 4294901760
    %2076 = vmatpush1.msra.mxu0 %v2075
    %2077 = vmatprep.subr.mxu0 0.0
    %v2078 = vand.u32 %v86, 4294901760
    %2079 = vmatpush1.msra.mxu0 %v2078
    %2080 = vmatprep.subr.mxu0 0.0
    %v2081 = vand.u32 %v87, 4294901760
    %2082 = vmatpush1.msra.mxu0 %v2081
    %2083 = vmatprep.subr.mxu0 0.0
    %v2084 = vand.u32 %v88, 4294901760
    %2085 = vmatpush1.msra.mxu0 %v2084
    %2086 = vmatprep.subr.mxu0 0.0
    %v2087 = vand.u32 %v89, 4294901760
    %2088 = vmatpush1.msra.mxu0 %v2087
    %2089 = vmatprep.subr.mxu0 0.0
    %v2090 = vand.u32 %v90, 4294901760
    %2091 = vmatpush1.msra.mxu0 %v2090
    %2092 = vmatprep.subr.mxu0 0.0
    %v2093 = vand.u32 %v91, 4294901760
    %2094 = vmatpush1.msra.mxu0 %v2093
    %2095 = vmatprep.subr.mxu0 0.0
    %v2096 = vand.u32 %v92, 4294901760
    %2097 = vmatpush1.msra.mxu0 %v2096
    %2098 = vmatprep.subr.mxu0 0.0
    %v2099 = vand.u32 %v93, 4294901760
    %2100 = vmatpush1.msra.mxu0 %v2099
    %2101 = vmatprep.subr.mxu0 0.0
    %v2102 = vand.u32 %v94, 4294901760
    %2103 = vmatpush1.msra.mxu0 %v2102
    %2104 = vmatprep.subr.mxu0 0.0
    %v2105 = vand.u32 %v95, 4294901760
    %2106 = vmatpush1.msra.mxu0 %v2105
    %2107 = vmatprep.subr.mxu0 0.0
    %v2108 = vand.u32 %v96, 4294901760
    %2109 = vmatpush1.msra.mxu0 %v2108
    %2110 = vmatprep.subr.mxu0 0.0
    %2111 = vmatpush1.msra.mxu0 0.0
    %2112 = vmatprep.subr.mxu0 0.0
    %2113 = vmatpush1.msra.mxu0 0.0
    %2114 = vmatprep.subr.mxu0 0.0
    %2115 = vmatpush1.msra.mxu0 0.0
    %2116 = vmatprep.subr.mxu0 0.0
    %2117 = vmatpush1.msra.mxu0 0.0
    %2118 = vmatprep.subr.mxu0 0.0
    %2119 = vmatpush1.msra.mxu0 0.0
    %2120 = vmatprep.subr.mxu0 0.0
    %2121 = vmatpush1.msra.mxu0 0.0
    %2122 = vmatprep.subr.mxu0 0.0
    %2123 = vmatpush1.msra.mxu0 0.0
    %2124 = vmatprep.subr.mxu0 0.0
    %2125 = vmatpush1.msra.mxu0 0.0
    %2126 = vmatprep.subr.mxu0 0.0
    %2127 = vmatpush1.msra.mxu0 0.0
    %2128 = vmatprep.subr.mxu0 0.0
    %2129 = vmatpush1.msra.mxu0 0.0
    %2130 = vmatprep.subr.mxu0 0.0
    %2131 = vmatpush1.msra.mxu0 0.0
    %2132 = vmatprep.subr.mxu0 0.0
    %2133 = vmatpush1.msra.mxu0 0.0
    %2134 = vmatprep.subr.mxu0 0.0
    %2135 = vmatpush1.msra.mxu0 0.0
    %2136 = vmatprep.subr.mxu0 0.0
    %2137 = vmatpush1.msra.mxu0 0.0
    %2138 = vmatprep.subr.mxu0 0.0
    %2139 = vmatpush1.msra.mxu0 0.0
    %2140 = vmatprep.subr.mxu0 0.0
    %2141 = vmatpush1.msra.mxu0 0.0
    %2142 = vmatprep.mubr.f32.mxu0 0.0
    %v2143 = vand.u32 %v1507, 4294901760
    %2144 = vmatmul.mubr.f32.gmra.mrb[0].mxu0 %v2143
    %v2145 = vpop.f32.mrb[0].mxu0
    %v2146 = vadd.f32 %v2059, %v2145
    %v2147 = vpop.f32.mrb[0].mxu0
    %2148 = vdwg.mxu0
    %v2149 = vld [vmem:[#allocation5] sm:$0xff]
    %v2151 = vsel %vm98, %v2149, 0
    %2153 = vmatprep.subr.mxu0 0.0
    %v2154 = vand.u32 %v77, 4294901760
    %2155 = vmatpush1.msra.mxu0 %v2154
    %2156 = vmatprep.subr.mxu0 0.0
    %v2157 = vand.u32 %v78, 4294901760
    %2158 = vmatpush1.msra.mxu0 %v2157
    %2159 = vmatprep.subr.mxu0 0.0
    %v2160 = vand.u32 %v79, 4294901760
    %2161 = vmatpush1.msra.mxu0 %v2160
    %2162 = vmatprep.subr.mxu0 0.0
    %v2163 = vand.u32 %v80, 4294901760
    %2164 = vmatpush1.msra.mxu0 %v2163
    %2165 = vmatprep.subr.mxu0 0.0
    %2166 = vmatpush1.msra.mxu0 0.0
    %2167 = vmatprep.subr.mxu0 0.0
    %2168 = vmatpush1.msra.mxu0 0.0
    %2169 = vmatprep.subr.mxu0 0.0
    %2170 = vmatpush1.msra.mxu0 0.0
    %2171 = vmatprep.subr.mxu0 0.0
    %2172 = vmatpush1.msra.mxu0 0.0
    %2173 = vmatprep.subr.mxu0 0.0
    %2174 = vmatpush1.msra.mxu0 0.0
    %2175 = vmatprep.subr.mxu0 0.0
    %2176 = vmatpush1.msra.mxu0 0.0
    %2177 = vmatprep.subr.mxu0 0.0
    %2178 = vmatpush1.msra.mxu0 0.0
    %2179 = vmatprep.subr.mxu0 0.0
    %2180 = vmatpush1.msra.mxu0 0.0
    %2181 = vmatprep.subr.mxu0 0.0
    %2182 = vmatpush1.msra.mxu0 0.0
    %2183 = vmatprep.subr.mxu0 0.0
    %2184 = vmatpush1.msra.mxu0 0.0
    %2185 = vmatprep.subr.mxu0 0.0
    %2186 = vmatpush1.msra.mxu0 0.0
    %2187 = vmatprep.subr.mxu0 0.0
    %2188 = vmatpush1.msra.mxu0 0.0
    %2189 = vmatprep.subr.mxu0 0.0
    %2190 = vmatpush1.msra.mxu0 0.0
    %2191 = vmatprep.subr.mxu0 0.0
    %2192 = vmatpush1.msra.mxu0 0.0
    %2193 = vmatprep.subr.mxu0 0.0
    %2194 = vmatpush1.msra.mxu0 0.0
    %2195 = vmatprep.subr.mxu0 0.0
    %2196 = vmatpush1.msra.mxu0 0.0
    %2197 = vmatprep.subr.mxu0 0.0
    %2198 = vmatpush1.msra.mxu0 0.0
    %2199 = vmatprep.subr.mxu0 0.0
    %2200 = vmatpush1.msra.mxu0 0.0
    %2201 = vmatprep.subr.mxu0 0.0
    %2202 = vmatpush1.msra.mxu0 0.0
    %2203 = vmatprep.subr.mxu0 0.0
    %2204 = vmatpush1.msra.mxu0 0.0
    %2205 = vmatprep.subr.mxu0 0.0
    %2206 = vmatpush1.msra.mxu0 0.0
    %2207 = vmatprep.subr.mxu0 0.0
    %2208 = vmatpush1.msra.mxu0 0.0
    %2209 = vmatprep.subr.mxu0 0.0
    %2210 = vmatpush1.msra.mxu0 0.0
    %2211 = vmatprep.subr.mxu0 0.0
    %2212 = vmatpush1.msra.mxu0 0.0
    %2213 = vmatprep.subr.mxu0 0.0
    %2214 = vmatpush1.msra.mxu0 0.0
    %2215 = vmatprep.subr.mxu0 0.0
    %2216 = vmatpush1.msra.mxu0 0.0
    %2217 = vmatprep.subr.mxu0 0.0
    %2218 = vmatpush1.msra.mxu0 0.0
    %2219 = vmatprep.subr.mxu0 0.0
    %2220 = vmatpush1.msra.mxu0 0.0
    %2221 = vmatprep.mubr.f32.mxu0 0.0
    %v2222 = vand.u32 %v2151, 4294901760
    %v2223 = vsub.f32 %v2151, %v2222
    %v2224 = vand.u32 %v2223, 4294901760
    %v2225 = vsub.f32 %v2223, %v2224
    %v2226 = vand.u32 %v2225, 4294901760
    %2227 = vmatmul.mubr.f32.gmra.mrb[0].mxu0 %v2226
    %v2228 = vpop.f32.mrb[0].mxu0
    %v2229 = vadd.f32 0.0, %v2228
    %v2230 = vpop.f32.mrb[0].mxu0
    %2231 = vdwg.mxu0
    %2232 = vmatprep.subr.mxu0 0.0
    %v2233 = vand.u32 %v77, 4294901760
    %v2234 = vsub.f32 %v77, %v2233
    %v2235 = vand.u32 %v2234, 4294901760
    %v2236 = vsub.f32 %v2234, %v2235
    %v2237 = vand.u32 %v2236, 4294901760
    %2238 = vmatpush1.msra.mxu0 %v2237
    %2239 = vmatprep.subr.mxu0 0.0
    %v2240 = vand.u32 %v78, 4294901760
    %v2241 = vsub.f32 %v78, %v2240
    %v2242 = vand.u32 %v2241, 4294901760
    %v2243 = vsub.f32 %v2241, %v2242
    %v2244 = vand.u32 %v2243, 4294901760
    %2245 = vmatpush1.msra.mxu0 %v2244
    %2246 = vmatprep.subr.mxu0 0.0
    %v2247 = vand.u32 %v79, 4294901760
    %v2248 = vsub.f32 %v79, %v2247
    %v2249 = vand.u32 %v2248, 4294901760
    %v2250 = vsub.f32 %v2248, %v2249
    %v2251 = vand.u32 %v2250, 4294901760
    %2252 = vmatpush1.msra.mxu0 %v2251
    %2253 = vmatprep.subr.mxu0 0.0
    %v2254 = vand.u32 %v80, 4294901760
    %v2255 = vsub.f32 %v80, %v2254
    %v2256 = vand.u32 %v2255, 4294901760
    %v2257 = vsub.f32 %v2255, %v2256
    %v2258 = vand.u32 %v2257, 4294901760
    %2259 = vmatpush1.msra.mxu0 %v2258
    %2260 = vmatprep.subr.mxu0 0.0
    %2261 = vmatpush1.msra.mxu0 0.0
    %2262 = vmatprep.subr.mxu0 0.0
    %2263 = vmatpush1.msra.mxu0 0.0
    %2264 = vmatprep.subr.mxu0 0.0
    %2265 = vmatpush1.msra.mxu0 0.0
    %2266 = vmatprep.subr.mxu0 0.0
    %2267 = vmatpush1.msra.mxu0 0.0
    %2268 = vmatprep.subr.mxu0 0.0
    %2269 = vmatpush1.msra.mxu0 0.0
    %2270 = vmatprep.subr.mxu0 0.0
    %2271 = vmatpush1.msra.mxu0 0.0
    %2272 = vmatprep.subr.mxu0 0.0
    %2273 = vmatpush1.msra.mxu0 0.0
    %2274 = vmatprep.subr.mxu0 0.0
    %2275 = vmatpush1.msra.mxu0 0.0
    %2276 = vmatprep.subr.mxu0 0.0
    %2277 = vmatpush1.msra.mxu0 0.0
    %2278 = vmatprep.subr.mxu0 0.0
    %2279 = vmatpush1.msra.mxu0 0.0
    %2280 = vmatprep.subr.mxu0 0.0
    %2281 = vmatpush1.msra.mxu0 0.0
    %2282 = vmatprep.subr.mxu0 0.0
    %2283 = vmatpush1.msra.mxu0 0.0
    %2284 = vmatprep.subr.mxu0 0.0
    %2285 = vmatpush1.msra.mxu0 0.0
    %2286 = vmatprep.subr.mxu0 0.0
    %2287 = vmatpush1.msra.mxu0 0.0
    %2288 = vmatprep.subr.mxu0 0.0
    %2289 = vmatpush1.msra.mxu0 0.0
    %2290 = vmatprep.subr.mxu0 0.0
    %2291 = vmatpush1.msra.mxu0 0.0
    %2292 = vmatprep.subr.mxu0 0.0
    %2293 = vmatpush1.msra.mxu0 0.0
    %2294 = vmatprep.subr.mxu0 0.0
    %2295 = vmatpush1.msra.mxu0 0.0
    %2296 = vmatprep.subr.mxu0 0.0
    %2297 = vmatpush1.msra.mxu0 0.0
    %2298 = vmatprep.subr.mxu0 0.0
    %2299 = vmatpush1.msra.mxu0 0.0
    %2300 = vmatprep.subr.mxu0 0.0
    %2301 = vmatpush1.msra.mxu0 0.0
    %2302 = vmatprep.subr.mxu0 0.0
    %2303 = vmatpush1.msra.mxu0 0.0
    %2304 = vmatprep.subr.mxu0 0.0
    %2305 = vmatpush1.msra.mxu0 0.0
    %2306 = vmatprep.subr.mxu0 0.0
    %2307 = vmatpush1.msra.mxu0 0.0
    %2308 = vmatprep.subr.mxu0 0.0
    %2309 = vmatpush1.msra.mxu0 0.0
    %2310 = vmatprep.subr.mxu0 0.0
    %2311 = vmatpush1.msra.mxu0 0.0
    %2312 = vmatprep.subr.mxu0 0.0
    %2313 = vmatpush1.msra.mxu0 0.0
    %2314 = vmatprep.subr.mxu0 0.0
    %2315 = vmatpush1.msra.mxu0 0.0
    %2316 = vmatprep.mubr.f32.mxu0 0.0
    %v2317 = vand.u32 %v2151, 4294901760
    %2318 = vmatmul.mubr.f32.gmra.mrb[0].mxu0 %v2317
    %v2319 = vpop.f32.mrb[0].mxu0
    %v2320 = vadd.f32 %v2229, %v2319
    %v2321 = vpop.f32.mrb[0].mxu0
    %2322 = vdwg.mxu0
    %2323 = vmatprep.subr.mxu0 0.0
    %v2324 = vand.u32 %v77, 4294901760
    %v2325 = vsub.f32 %v77, %v2324
    %2326 = vmatpush1.msra.mxu0 %v2325
    %2327 = vmatprep.subr.mxu0 0.0
    %v2328 = vand.u32 %v78, 4294901760
    %v2329 = vsub.f32 %v78, %v2328
    %2330 = vmatpush1.msra.mxu0 %v2329
    %2331 = vmatprep.subr.mxu0 0.0
    %v2332 = vand.u32 %v79, 4294901760
    %v2333 = vsub.f32 %v79, %v2332
    %2334 = vmatpush1.msra.mxu0 %v2333
    %2335 = vmatprep.subr.mxu0 0.0
    %v2336 = vand.u32 %v80, 4294901760
    %v2337 = vsub.f32 %v80, %v2336
    %2338 = vmatpush1.msra.mxu0 %v2337
    %2339 = vmatprep.subr.mxu0 0.0
    %2340 = vmatpush1.msra.mxu0 0.0
    %2341 = vmatprep.subr.mxu0 0.0
    %2342 = vmatpush1.msra.mxu0 0.0
    %2343 = vmatprep.subr.mxu0 0.0
    %2344 = vmatpush1.msra.mxu0 0.0
    %2345 = vmatprep.subr.mxu0 0.0
    %2346 = vmatpush1.msra.mxu0 0.0
    %2347 = vmatprep.subr.mxu0 0.0
    %2348 = vmatpush1.msra.mxu0 0.0
    %2349 = vmatprep.subr.mxu0 0.0
    %2350 = vmatpush1.msra.mxu0 0.0
    %2351 = vmatprep.subr.mxu0 0.0
    %2352 = vmatpush1.msra.mxu0 0.0
    %2353 = vmatprep.subr.mxu0 0.0
    %2354 = vmatpush1.msra.mxu0 0.0
    %2355 = vmatprep.subr.mxu0 0.0
    %2356 = vmatpush1.msra.mxu0 0.0
    %2357 = vmatprep.subr.mxu0 0.0
    %2358 = vmatpush1.msra.mxu0 0.0
    %2359 = vmatprep.subr.mxu0 0.0
    %2360 = vmatpush1.msra.mxu0 0.0
    %2361 = vmatprep.subr.mxu0 0.0
    %2362 = vmatpush1.msra.mxu0 0.0
    %2363 = vmatprep.subr.mxu0 0.0
    %2364 = vmatpush1.msra.mxu0 0.0
    %2365 = vmatprep.subr.mxu0 0.0
    %2366 = vmatpush1.msra.mxu0 0.0
    %2367 = vmatprep.subr.mxu0 0.0
    %2368 = vmatpush1.msra.mxu0 0.0
    %2369 = vmatprep.subr.mxu0 0.0
    %2370 = vmatpush1.msra.mxu0 0.0
    %2371 = vmatprep.subr.mxu0 0.0
    %2372 = vmatpush1.msra.mxu0 0.0
    %2373 = vmatprep.subr.mxu0 0.0
    %2374 = vmatpush1.msra.mxu0 0.0
    %2375 = vmatprep.subr.mxu0 0.0
    %2376 = vmatpush1.msra.mxu0 0.0
    %2377 = vmatprep.subr.mxu0 0.0
    %2378 = vmatpush1.msra.mxu0 0.0
    %2379 = vmatprep.subr.mxu0 0.0
    %2380 = vmatpush1.msra.mxu0 0.0
    %2381 = vmatprep.subr.mxu0 0.0
    %2382 = vmatpush1.msra.mxu0 0.0
    %2383 = vmatprep.subr.mxu0 0.0
    %2384 = vmatpush1.msra.mxu0 0.0
    %2385 = vmatprep.subr.mxu0 0.0
    %2386 = vmatpush1.msra.mxu0 0.0
    %2387 = vmatprep.subr.mxu0 0.0
    %2388 = vmatpush1.msra.mxu0 0.0
    %2389 = vmatprep.subr.mxu0 0.0
    %2390 = vmatpush1.msra.mxu0 0.0
    %2391 = vmatprep.subr.mxu0 0.0
    %2392 = vmatpush1.msra.mxu0 0.0
    %2393 = vmatprep.subr.mxu0 0.0
    %2394 = vmatpush1.msra.mxu0 0.0
    %2395 = vmatprep.mubr.f32.mxu0 0.0
    %v2396 = vand.u32 %v2151, 4294901760
    %v2397 = vsub.f32 %v2151, %v2396
    %2398 = vmatmul.mubr.f32.gmra.mrb[0].mxu0 %v2397
    %v2399 = vpop.f32.mrb[0].mxu0
    %v2400 = vadd.f32 %v2320, %v2399
    %v2401 = vpop.f32.mrb[0].mxu0
    %2402 = vdwg.mxu0
    %2403 = vmatprep.subr.mxu0 0.0
    %v2404 = vand.u32 %v77, 4294901760
    %2405 = vmatpush1.msra.mxu0 %v2404
    %2406 = vmatprep.subr.mxu0 0.0
    %v2407 = vand.u32 %v78, 4294901760
    %2408 = vmatpush1.msra.mxu0 %v2407
    %2409 = vmatprep.subr.mxu0 0.0
    %v2410 = vand.u32 %v79, 4294901760
    %2411 = vmatpush1.msra.mxu0 %v2410
    %2412 = vmatprep.subr.mxu0 0.0
    %v2413 = vand.u32 %v80, 4294901760
    %2414 = vmatpush1.msra.mxu0 %v2413
    %2415 = vmatprep.subr.mxu0 0.0
    %2416 = vmatpush1.msra.mxu0 0.0
    %2417 = vmatprep.subr.mxu0 0.0
    %2418 = vmatpush1.msra.mxu0 0.0
    %2419 = vmatprep.subr.mxu0 0.0
    %2420 = vmatpush1.msra.mxu0 0.0
    %2421 = vmatprep.subr.mxu0 0.0
    %2422 = vmatpush1.msra.mxu0 0.0
    %2423 = vmatprep.subr.mxu0 0.0
    %2424 = vmatpush1.msra.mxu0 0.0
    %2425 = vmatprep.subr.mxu0 0.0
    %2426 = vmatpush1.msra.mxu0 0.0
    %2427 = vmatprep.subr.mxu0 0.0
    %2428 = vmatpush1.msra.mxu0 0.0
    %2429 = vmatprep.subr.mxu0 0.0
    %2430 = vmatpush1.msra.mxu0 0.0
    %2431 = vmatprep.subr.mxu0 0.0
    %2432 = vmatpush1.msra.mxu0 0.0
    %2433 = vmatprep.subr.mxu0 0.0
    %2434 = vmatpush1.msra.mxu0 0.0
    %2435 = vmatprep.subr.mxu0 0.0
    %2436 = vmatpush1.msra.mxu0 0.0
    %2437 = vmatprep.subr.mxu0 0.0
    %2438 = vmatpush1.msra.mxu0 0.0
    %2439 = vmatprep.subr.mxu0 0.0
    %2440 = vmatpush1.msra.mxu0 0.0
    %2441 = vmatprep.subr.mxu0 0.0
    %2442 = vmatpush1.msra.mxu0 0.0
    %2443 = vmatprep.subr.mxu0 0.0
    %2444 = vmatpush1.msra.mxu0 0.0
    %2445 = vmatprep.subr.mxu0 0.0
    %2446 = vmatpush1.msra.mxu0 0.0
    %2447 = vmatprep.subr.mxu0 0.0
    %2448 = vmatpush1.msra.mxu0 0.0
    %2449 = vmatprep.subr.mxu0 0.0
    %2450 = vmatpush1.msra.mxu0 0.0
    %2451 = vmatprep.subr.mxu0 0.0
    %2452 = vmatpush1.msra.mxu0 0.0
    %2453 = vmatprep.subr.mxu0 0.0
    %2454 = vmatpush1.msra.mxu0 0.0
    %2455 = vmatprep.subr.mxu0 0.0
    %2456 = vmatpush1.msra.mxu0 0.0
    %2457 = vmatprep.subr.mxu0 0.0
    %2458 = vmatpush1.msra.mxu0 0.0
    %2459 = vmatprep.subr.mxu0 0.0
    %2460 = vmatpush1.msra.mxu0 0.0
    %2461 = vmatprep.subr.mxu0 0.0
    %2462 = vmatpush1.msra.mxu0 0.0
    %2463 = vmatprep.subr.mxu0 0.0
    %2464 = vmatpush1.msra.mxu0 0.0
    %2465 = vmatprep.subr.mxu0 0.0
    %2466 = vmatpush1.msra.mxu0 0.0
    %2467 = vmatprep.subr.mxu0 0.0
    %2468 = vmatpush1.msra.mxu0 0.0
    %2469 = vmatprep.subr.mxu0 0.0
    %2470 = vmatpush1.msra.mxu0 0.0
    %2471 = vmatprep.mubr.f32.mxu0 0.0
    %v2472 = vand.u32 %v2151, 4294901760
    %v2473 = vsub.f32 %v2151, %v2472
    %v2474 = vand.u32 %v2473, 4294901760
    %2475 = vmatmul.mubr.f32.gmra.mrb[0].mxu0 %v2474
    %v2476 = vpop.f32.mrb[0].mxu0
    %v2477 = vadd.f32 %v2400, %v2476
    %v2478 = vpop.f32.mrb[0].mxu0
    %2479 = vdwg.mxu0
    %2480 = vmatprep.subr.mxu0 0.0
    %v2481 = vand.u32 %v77, 4294901760
    %v2482 = vsub.f32 %v77, %v2481
    %v2483 = vand.u32 %v2482, 4294901760
    %2484 = vmatpush1.msra.mxu0 %v2483
    %2485 = vmatprep.subr.mxu0 0.0
    %v2486 = vand.u32 %v78, 4294901760
    %v2487 = vsub.f32 %v78, %v2486
    %v2488 = vand.u32 %v2487, 4294901760
    %2489 = vmatpush1.msra.mxu0 %v2488
    %2490 = vmatprep.subr.mxu0 0.0
    %v2491 = vand.u32 %v79, 4294901760
    %v2492 = vsub.f32 %v79, %v2491
    %v2493 = vand.u32 %v2492, 4294901760
    %2494 = vmatpush1.msra.mxu0 %v2493
    %2495 = vmatprep.subr.mxu0 0.0
    %v2496 = vand.u32 %v80, 4294901760
    %v2497 = vsub.f32 %v80, %v2496
    %v2498 = vand.u32 %v2497, 4294901760
    %2499 = vmatpush1.msra.mxu0 %v2498
    %2500 = vmatprep.subr.mxu0 0.0
    %2501 = vmatpush1.msra.mxu0 0.0
    %2502 = vmatprep.subr.mxu0 0.0
    %2503 = vmatpush1.msra.mxu0 0.0
    %2504 = vmatprep.subr.mxu0 0.0
    %2505 = vmatpush1.msra.mxu0 0.0
    %2506 = vmatprep.subr.mxu0 0.0
    %2507 = vmatpush1.msra.mxu0 0.0
    %2508 = vmatprep.subr.mxu0 0.0
    %2509 = vmatpush1.msra.mxu0 0.0
    %2510 = vmatprep.subr.mxu0 0.0
    %2511 = vmatpush1.msra.mxu0 0.0
    %2512 = vmatprep.subr.mxu0 0.0
    %2513 = vmatpush1.msra.mxu0 0.0
    %2514 = vmatprep.subr.mxu0 0.0
    %2515 = vmatpush1.msra.mxu0 0.0
    %2516 = vmatprep.subr.mxu0 0.0
    %2517 = vmatpush1.msra.mxu0 0.0
    %2518 = vmatprep.subr.mxu0 0.0
    %2519 = vmatpush1.msra.mxu0 0.0
    %2520 = vmatprep.subr.mxu0 0.0
    %2521 = vmatpush1.msra.mxu0 0.0
    %2522 = vmatprep.subr.mxu0 0.0
    %2523 = vmatpush1.msra.mxu0 0.0
    %2524 = vmatprep.subr.mxu0 0.0
    %2525 = vmatpush1.msra.mxu0 0.0
    %2526 = vmatprep.subr.mxu0 0.0
    %2527 = vmatpush1.msra.mxu0 0.0
    %2528 = vmatprep.subr.mxu0 0.0
    %2529 = vmatpush1.msra.mxu0 0.0
    %2530 = vmatprep.subr.mxu0 0.0
    %2531 = vmatpush1.msra.mxu0 0.0
    %2532 = vmatprep.subr.mxu0 0.0
    %2533 = vmatpush1.msra.mxu0 0.0
    %2534 = vmatprep.subr.mxu0 0.0
    %2535 = vmatpush1.msra.mxu0 0.0
    %2536 = vmatprep.subr.mxu0 0.0
    %2537 = vmatpush1.msra.mxu0 0.0
    %2538 = vmatprep.subr.mxu0 0.0
    %2539 = vmatpush1.msra.mxu0 0.0
    %2540 = vmatprep.subr.mxu0 0.0
    %2541 = vmatpush1.msra.mxu0 0.0
    %2542 = vmatprep.subr.mxu0 0.0
    %2543 = vmatpush1.msra.mxu0 0.0
    %2544 = vmatprep.subr.mxu0 0.0
    %2545 = vmatpush1.msra.mxu0 0.0
    %2546 = vmatprep.subr.mxu0 0.0
    %2547 = vmatpush1.msra.mxu0 0.0
    %2548 = vmatprep.subr.mxu0 0.0
    %2549 = vmatpush1.msra.mxu0 0.0
    %2550 = vmatprep.subr.mxu0 0.0
    %2551 = vmatpush1.msra.mxu0 0.0
    %2552 = vmatprep.subr.mxu0 0.0
    %2553 = vmatpush1.msra.mxu0 0.0
    %2554 = vmatprep.subr.mxu0 0.0
    %2555 = vmatpush1.msra.mxu0 0.0
    %2556 = vmatprep.mubr.f32.mxu0 0.0
    %v2557 = vand.u32 %v2151, 4294901760
    %2558 = vmatmul.mubr.f32.gmra.mrb[0].mxu0 %v2557
    %v2559 = vpop.f32.mrb[0].mxu0
    %v2560 = vadd.f32 %v2477, %v2559
    %v2561 = vpop.f32.mrb[0].mxu0
    %2562 = vdwg.mxu0
    %2563 = vmatprep.subr.mxu0 0.0
    %v2564 = vand.u32 %v77, 4294901760
    %2565 = vmatpush1.msra.mxu0 %v2564
    %2566 = vmatprep.subr.mxu0 0.0
    %v2567 = vand.u32 %v78, 4294901760
    %2568 = vmatpush1.msra.mxu0 %v2567
    %2569 = vmatprep.subr.mxu0 0.0
    %v2570 = vand.u32 %v79, 4294901760
    %2571 = vmatpush1.msra.mxu0 %v2570
    %2572 = vmatprep.subr.mxu0 0.0
    %v2573 = vand.u32 %v80, 4294901760
    %2574 = vmatpush1.msra.mxu0 %v2573
    %2575 = vmatprep.subr.mxu0 0.0
    %2576 = vmatpush1.msra.mxu0 0.0
    %2577 = vmatprep.subr.mxu0 0.0
    %2578 = vmatpush1.msra.mxu0 0.0
    %2579 = vmatprep.subr.mxu0 0.0
    %2580 = vmatpush1.msra.mxu0 0.0
    %2581 = vmatprep.subr.mxu0 0.0
    %2582 = vmatpush1.msra.mxu0 0.0
    %2583 = vmatprep.subr.mxu0 0.0
    %2584 = vmatpush1.msra.mxu0 0.0
    %2585 = vmatprep.subr.mxu0 0.0
    %2586 = vmatpush1.msra.mxu0 0.0
    %2587 = vmatprep.subr.mxu0 0.0
    %2588 = vmatpush1.msra.mxu0 0.0
    %2589 = vmatprep.subr.mxu0 0.0
    %2590 = vmatpush1.msra.mxu0 0.0
    %2591 = vmatprep.subr.mxu0 0.0
    %2592 = vmatpush1.msra.mxu0 0.0
    %2593 = vmatprep.subr.mxu0 0.0
    %2594 = vmatpush1.msra.mxu0 0.0
    %2595 = vmatprep.subr.mxu0 0.0
    %2596 = vmatpush1.msra.mxu0 0.0
    %2597 = vmatprep.subr.mxu0 0.0
    %2598 = vmatpush1.msra.mxu0 0.0
    %2599 = vmatprep.subr.mxu0 0.0
    %2600 = vmatpush1.msra.mxu0 0.0
    %2601 = vmatprep.subr.mxu0 0.0
    %2602 = vmatpush1.msra.mxu0 0.0
    %2603 = vmatprep.subr.mxu0 0.0
    %2604 = vmatpush1.msra.mxu0 0.0
    %2605 = vmatprep.subr.mxu0 0.0
    %2606 = vmatpush1.msra.mxu0 0.0
    %2607 = vmatprep.subr.mxu0 0.0
    %2608 = vmatpush1.msra.mxu0 0.0
    %2609 = vmatprep.subr.mxu0 0.0
    %2610 = vmatpush1.msra.mxu0 0.0
    %2611 = vmatprep.subr.mxu0 0.0
    %2612 = vmatpush1.msra.mxu0 0.0
    %2613 = vmatprep.subr.mxu0 0.0
    %2614 = vmatpush1.msra.mxu0 0.0
    %2615 = vmatprep.subr.mxu0 0.0
    %2616 = vmatpush1.msra.mxu0 0.0
    %2617 = vmatprep.subr.mxu0 0.0
    %2618 = vmatpush1.msra.mxu0 0.0
    %2619 = vmatprep.subr.mxu0 0.0
    %2620 = vmatpush1.msra.mxu0 0.0
    %2621 = vmatprep.subr.mxu0 0.0
    %2622 = vmatpush1.msra.mxu0 0.0
    %2623 = vmatprep.subr.mxu0 0.0
    %2624 = vmatpush1.msra.mxu0 0.0
    %2625 = vmatprep.subr.mxu0 0.0
    %2626 = vmatpush1.msra.mxu0 0.0
    %2627 = vmatprep.subr.mxu0 0.0
    %2628 = vmatpush1.msra.mxu0 0.0
    %2629 = vmatprep.subr.mxu0 0.0
    %2630 = vmatpush1.msra.mxu0 0.0
    %2631 = vmatprep.mubr.f32.mxu0 0.0
    %v2632 = vand.u32 %v2151, 4294901760
    %2633 = vmatmul.mubr.f32.gmra.mrb[0].mxu0 %v2632
    %v2634 = vpop.f32.mrb[0].mxu0
    %v2635 = vadd.f32 %v2560, %v2634
    %v2636 = vpop.f32.mrb[0].mxu0
    %2637 = vdwg.mxu0
    %2638 = vmatprep.subr.mxu0 0.0
    %v2639 = vand.u32 %v2635, 4294901760
    %2640 = vmatpush1.msra.mxu0 %v2639
    %2641 = vmatprep.subr.mxu0 0.0
    %2642 = vmatpush1.msra.mxu0 0.0
    %2643 = vmatprep.subr.mxu0 0.0
    %2644 = vmatpush1.msra.mxu0 0.0
    %2645 = vmatprep.subr.mxu0 0.0
    %2646 = vmatpush1.msra.mxu0 0.0
    %2647 = vmatprep.subr.mxu0 0.0
    %2648 = vmatpush1.msra.mxu0 0.0
    %2649 = vmatprep.subr.mxu0 0.0
    %2650 = vmatpush1.msra.mxu0 0.0
    %2651 = vmatprep.subr.mxu0 0.0
    %2652 = vmatpush1.msra.mxu0 0.0
    %2653 = vmatprep.subr.mxu0 0.0
    %2654 = vmatpush1.msra.mxu0 0.0
    %2655 = vmatprep.subr.mxu0 0.0
    %2656 = vmatpush1.msra.mxu0 0.0
    %2657 = vmatprep.subr.mxu0 0.0
    %2658 = vmatpush1.msra.mxu0 0.0
    %2659 = vmatprep.subr.mxu0 0.0
    %2660 = vmatpush1.msra.mxu0 0.0
    %2661 = vmatprep.subr.mxu0 0.0
    %2662 = vmatpush1.msra.mxu0 0.0
    %2663 = vmatprep.subr.mxu0 0.0
    %2664 = vmatpush1.msra.mxu0 0.0
    %2665 = vmatprep.subr.mxu0 0.0
    %2666 = vmatpush1.msra.mxu0 0.0
    %2667 = vmatprep.subr.mxu0 0.0
    %2668 = vmatpush1.msra.mxu0 0.0
    %2669 = vmatprep.subr.mxu0 0.0
    %2670 = vmatpush1.msra.mxu0 0.0
    %2671 = vmatprep.subr.mxu0 0.0
    %2672 = vmatpush1.msra.mxu0 0.0
    %2673 = vmatprep.subr.mxu0 0.0
    %2674 = vmatpush1.msra.mxu0 0.0
    %2675 = vmatprep.subr.mxu0 0.0
    %2676 = vmatpush1.msra.mxu0 0.0
    %2677 = vmatprep.subr.mxu0 0.0
    %2678 = vmatpush1.msra.mxu0 0.0
    %2679 = vmatprep.subr.mxu0 0.0
    %2680 = vmatpush1.msra.mxu0 0.0
    %2681 = vmatprep.subr.mxu0 0.0
    %2682 = vmatpush1.msra.mxu0 0.0
    %2683 = vmatprep.subr.mxu0 0.0
    %2684 = vmatpush1.msra.mxu0 0.0
    %2685 = vmatprep.subr.mxu0 0.0
    %2686 = vmatpush1.msra.mxu0 0.0
    %2687 = vmatprep.subr.mxu0 0.0
    %2688 = vmatpush1.msra.mxu0 0.0
    %2689 = vmatprep.subr.mxu0 0.0
    %2690 = vmatpush1.msra.mxu0 0.0
    %2691 = vmatprep.subr.mxu0 0.0
    %2692 = vmatpush1.msra.mxu0 0.0
    %2693 = vmatprep.subr.mxu0 0.0
    %2694 = vmatpush1.msra.mxu0 0.0
    %2695 = vmatprep.subr.mxu0 0.0
    %2696 = vmatpush1.msra.mxu0 0.0
    %2697 = vmatprep.subr.mxu0 0.0
    %2698 = vmatpush1.msra.mxu0 0.0
    %2699 = vmatprep.subr.mxu0 0.0
    %2700 = vmatpush1.msra.mxu0 0.0
    %2701 = vmatprep.subr.mxu0 0.0
    %2702 = vmatpush1.msra.mxu0 0.0
    %2703 = vmatprep.mubr.f32.mxu0 0.0
    %v2704 = vand.u32 %v589, 4294901760
    %v2705 = vsub.f32 %v589, %v2704
    %v2706 = vand.u32 %v2705, 4294901760
    %v2707 = vsub.f32 %v2705, %v2706
    %v2708 = vand.u32 %v2707, 4294901760
    %2709 = vmatmul.mubr.f32.gmra.mrb[0].mxu0 %v2708
    %v2710 = vpop.f32.mrb[0].mxu0
    %v2711 = vadd.f32 0.0, %v2710
    %v2712 = vpop.f32.mrb[0].mxu0
    %2713 = vdwg.mxu0
    %2714 = vmatprep.subr.mxu0 0.0
    %v2715 = vand.u32 %v2635, 4294901760
    %v2716 = vsub.f32 %v2635, %v2715
    %v2717 = vand.u32 %v2716, 4294901760
    %v2718 = vsub.f32 %v2716, %v2717
    %v2719 = vand.u32 %v2718, 4294901760
    %2720 = vmatpush1.msra.mxu0 %v2719
    %2721 = vmatprep.subr.mxu0 0.0
    %2722 = vmatpush1.msra.mxu0 0.0
    %2723 = vmatprep.subr.mxu0 0.0
    %2724 = vmatpush1.msra.mxu0 0.0
    %2725 = vmatprep.subr.mxu0 0.0
    %2726 = vmatpush1.msra.mxu0 0.0
    %2727 = vmatprep.subr.mxu0 0.0
    %2728 = vmatpush1.msra.mxu0 0.0
    %2729 = vmatprep.subr.mxu0 0.0
    %2730 = vmatpush1.msra.mxu0 0.0
    %2731 = vmatprep.subr.mxu0 0.0
    %2732 = vmatpush1.msra.mxu0 0.0
    %2733 = vmatprep.subr.mxu0 0.0
    %2734 = vmatpush1.msra.mxu0 0.0
    %2735 = vmatprep.subr.mxu0 0.0
    %2736 = vmatpush1.msra.mxu0 0.0
    %2737 = vmatprep.subr.mxu0 0.0
    %2738 = vmatpush1.msra.mxu0 0.0
    %2739 = vmatprep.subr.mxu0 0.0
    %2740 = vmatpush1.msra.mxu0 0.0
    %2741 = vmatprep.subr.mxu0 0.0
    %2742 = vmatpush1.msra.mxu0 0.0
    %2743 = vmatprep.subr.mxu0 0.0
    %2744 = vmatpush1.msra.mxu0 0.0
    %2745 = vmatprep.subr.mxu0 0.0
    %2746 = vmatpush1.msra.mxu0 0.0
    %2747 = vmatprep.subr.mxu0 0.0
    %2748 = vmatpush1.msra.mxu0 0.0
    %2749 = vmatprep.subr.mxu0 0.0
    %2750 = vmatpush1.msra.mxu0 0.0
    %2751 = vmatprep.subr.mxu0 0.0
    %2752 = vmatpush1.msra.mxu0 0.0
    %2753 = vmatprep.subr.mxu0 0.0
    %2754 = vmatpush1.msra.mxu0 0.0
    %2755 = vmatprep.subr.mxu0 0.0
    %2756 = vmatpush1.msra.mxu0 0.0
    %2757 = vmatprep.subr.mxu0 0.0
    %2758 = vmatpush1.msra.mxu0 0.0
    %2759 = vmatprep.subr.mxu0 0.0
    %2760 = vmatpush1.msra.mxu0 0.0
    %2761 = vmatprep.subr.mxu0 0.0
    %2762 = vmatpush1.msra.mxu0 0.0
    %2763 = vmatprep.subr.mxu0 0.0
    %2764 = vmatpush1.msra.mxu0 0.0
    %2765 = vmatprep.subr.mxu0 0.0
    %2766 = vmatpush1.msra.mxu0 0.0
    %2767 = vmatprep.subr.mxu0 0.0
    %2768 = vmatpush1.msra.mxu0 0.0
    %2769 = vmatprep.subr.mxu0 0.0
    %2770 = vmatpush1.msra.mxu0 0.0
    %2771 = vmatprep.subr.mxu0 0.0
    %2772 = vmatpush1.msra.mxu0 0.0
    %2773 = vmatprep.subr.mxu0 0.0
    %2774 = vmatpush1.msra.mxu0 0.0
    %2775 = vmatprep.subr.mxu0 0.0
    %2776 = vmatpush1.msra.mxu0 0.0
    %2777 = vmatprep.subr.mxu0 0.0
    %2778 = vmatpush1.msra.mxu0 0.0
    %2779 = vmatprep.subr.mxu0 0.0
    %2780 = vmatpush1.msra.mxu0 0.0
    %2781 = vmatprep.subr.mxu0 0.0
    %2782 = vmatpush1.msra.mxu0 0.0
    %2783 = vmatprep.mubr.f32.mxu0 0.0
    %v2784 = vand.u32 %v589, 4294901760
    %2785 = vmatmul.mubr.f32.gmra.mrb[0].mxu0 %v2784
    %v2786 = vpop.f32.mrb[0].mxu0
    %v2787 = vadd.f32 %v2711, %v2786
    %v2788 = vpop.f32.mrb[0].mxu0
    %2789 = vdwg.mxu0
    %2790 = vmatprep.subr.mxu0 0.0
    %v2791 = vand.u32 %v2635, 4294901760
    %v2792 = vsub.f32 %v2635, %v2791
    %2793 = vmatpush1.msra.mxu0 %v2792
    %2794 = vmatprep.subr.mxu0 0.0
    %2795 = vmatpush1.msra.mxu0 0.0
    %2796 = vmatprep.subr.mxu0 0.0
    %2797 = vmatpush1.msra.mxu0 0.0
    %2798 = vmatprep.subr.mxu0 0.0
    %2799 = vmatpush1.msra.mxu0 0.0
    %2800 = vmatprep.subr.mxu0 0.0
    %2801 = vmatpush1.msra.mxu0 0.0
    %2802 = vmatprep.subr.mxu0 0.0
    %2803 = vmatpush1.msra.mxu0 0.0
    %2804 = vmatprep.subr.mxu0 0.0
    %2805 = vmatpush1.msra.mxu0 0.0
    %2806 = vmatprep.subr.mxu0 0.0
    %2807 = vmatpush1.msra.mxu0 0.0
    %2808 = vmatprep.subr.mxu0 0.0
    %2809 = vmatpush1.msra.mxu0 0.0
    %2810 = vmatprep.subr.mxu0 0.0
    %2811 = vmatpush1.msra.mxu0 0.0
    %2812 = vmatprep.subr.mxu0 0.0
    %2813 = vmatpush1.msra.mxu0 0.0
    %2814 = vmatprep.subr.mxu0 0.0
    %2815 = vmatpush1.msra.mxu0 0.0
    %2816 = vmatprep.subr.mxu0 0.0
    %2817 = vmatpush1.msra.mxu0 0.0
    %2818 = vmatprep.subr.mxu0 0.0
    %2819 = vmatpush1.msra.mxu0 0.0
    %2820 = vmatprep.subr.mxu0 0.0
    %2821 = vmatpush1.msra.mxu0 0.0
    %2822 = vmatprep.subr.mxu0 0.0
    %2823 = vmatpush1.msra.mxu0 0.0
    %2824 = vmatprep.subr.mxu0 0.0
    %2825 = vmatpush1.msra.mxu0 0.0
    %2826 = vmatprep.subr.mxu0 0.0
    %2827 = vmatpush1.msra.mxu0 0.0
    %2828 = vmatprep.subr.mxu0 0.0
    %2829 = vmatpush1.msra.mxu0 0.0
    %2830 = vmatprep.subr.mxu0 0.0
    %2831 = vmatpush1.msra.mxu0 0.0
    %2832 = vmatprep.subr.mxu0 0.0
    %2833 = vmatpush1.msra.mxu0 0.0
    %2834 = vmatprep.subr.mxu0 0.0
    %2835 = vmatpush1.msra.mxu0 0.0
    %2836 = vmatprep.subr.mxu0 0.0
    %2837 = vmatpush1.msra.mxu0 0.0
    %2838 = vmatprep.subr.mxu0 0.0
    %2839 = vmatpush1.msra.mxu0 0.0
    %2840 = vmatprep.subr.mxu0 0.0
    %2841 = vmatpush1.msra.mxu0 0.0
    %2842 = vmatprep.subr.mxu0 0.0
    %2843 = vmatpush1.msra.mxu0 0.0
    %2844 = vmatprep.subr.mxu0 0.0
    %2845 = vmatpush1.msra.mxu0 0.0
    %2846 = vmatprep.subr.mxu0 0.0
    %2847 = vmatpush1.msra.mxu0 0.0
    %2848 = vmatprep.subr.mxu0 0.0
    %2849 = vmatpush1.msra.mxu0 0.0
    %2850 = vmatprep.subr.mxu0 0.0
    %2851 = vmatpush1.msra.mxu0 0.0
    %2852 = vmatprep.subr.mxu0 0.0
    %2853 = vmatpush1.msra.mxu0 0.0
    %2854 = vmatprep.subr.mxu0 0.0
    %2855 = vmatpush1.msra.mxu0 0.0
    %2856 = vmatprep.mubr.f32.mxu0 0.0
    %v2857 = vand.u32 %v589, 4294901760
    %v2858 = vsub.f32 %v589, %v2857
    %2859 = vmatmul.mubr.f32.gmra.mrb[0].mxu0 %v2858
    %v2860 = vpop.f32.mrb[0].mxu0
    %v2861 = vadd.f32 %v2787, %v2860
    %v2862 = vpop.f32.mrb[0].mxu0
    %2863 = vdwg.mxu0
    %2864 = vmatprep.subr.mxu0 0.0
    %v2865 = vand.u32 %v2635, 4294901760
    %2866 = vmatpush1.msra.mxu0 %v2865
    %2867 = vmatprep.subr.mxu0 0.0
    %2868 = vmatpush1.msra.mxu0 0.0
    %2869 = vmatprep.subr.mxu0 0.0
    %2870 = vmatpush1.msra.mxu0 0.0
    %2871 = vmatprep.subr.mxu0 0.0
    %2872 = vmatpush1.msra.mxu0 0.0
    %2873 = vmatprep.subr.mxu0 0.0
    %2874 = vmatpush1.msra.mxu0 0.0
    %2875 = vmatprep.subr.mxu0 0.0
    %2876 = vmatpush1.msra.mxu0 0.0
    %2877 = vmatprep.subr.mxu0 0.0
    %2878 = vmatpush1.msra.mxu0 0.0
    %2879 = vmatprep.subr.mxu0 0.0
    %2880 = vmatpush1.msra.mxu0 0.0
    %2881 = vmatprep.subr.mxu0 0.0
    %2882 = vmatpush1.msra.mxu0 0.0
    %2883 = vmatprep.subr.mxu0 0.0
    %2884 = vmatpush1.msra.mxu0 0.0
    %2885 = vmatprep.subr.mxu0 0.0
    %2886 = vmatpush1.msra.mxu0 0.0
    %2887 = vmatprep.subr.mxu0 0.0
    %2888 = vmatpush1.msra.mxu0 0.0
    %2889 = vmatprep.subr.mxu0 0.0
    %2890 = vmatpush1.msra.mxu0 0.0
    %2891 = vmatprep.subr.mxu0 0.0
    %2892 = vmatpush1.msra.mxu0 0.0
    %2893 = vmatprep.subr.mxu0 0.0
    %2894 = vmatpush1.msra.mxu0 0.0
    %2895 = vmatprep.subr.mxu0 0.0
    %2896 = vmatpush1.msra.mxu0 0.0
    %2897 = vmatprep.subr.mxu0 0.0
    %2898 = vmatpush1.msra.mxu0 0.0
    %2899 = vmatprep.subr.mxu0 0.0
    %2900 = vmatpush1.msra.mxu0 0.0
    %2901 = vmatprep.subr.mxu0 0.0
    %2902 = vmatpush1.msra.mxu0 0.0
    %2903 = vmatprep.subr.mxu0 0.0
    %2904 = vmatpush1.msra.mxu0 0.0
    %2905 = vmatprep.subr.mxu0 0.0
    %2906 = vmatpush1.msra.mxu0 0.0
    %2907 = vmatprep.subr.mxu0 0.0
    %2908 = vmatpush1.msra.mxu0 0.0
    %2909 = vmatprep.subr.mxu0 0.0
    %2910 = vmatpush1.msra.mxu0 0.0
    %2911 = vmatprep.subr.mxu0 0.0
    %2912 = vmatpush1.msra.mxu0 0.0
    %2913 = vmatprep.subr.mxu0 0.0
    %2914 = vmatpush1.msra.mxu0 0.0
    %2915 = vmatprep.subr.mxu0 0.0
    %2916 = vmatpush1.msra.mxu0 0.0
    %2917 = vmatprep.subr.mxu0 0.0
    %2918 = vmatpush1.msra.mxu0 0.0
    %2919 = vmatprep.subr.mxu0 0.0
    %2920 = vmatpush1.msra.mxu0 0.0
    %2921 = vmatprep.subr.mxu0 0.0
    %2922 = vmatpush1.msra.mxu0 0.0
    %2923 = vmatprep.subr.mxu0 0.0
    %2924 = vmatpush1.msra.mxu0 0.0
    %2925 = vmatprep.subr.mxu0 0.0
    %2926 = vmatpush1.msra.mxu0 0.0
    %2927 = vmatprep.subr.mxu0 0.0
    %2928 = vmatpush1.msra.mxu0 0.0
    %2929 = vmatprep.mubr.f32.mxu0 0.0
    %v2930 = vand.u32 %v589, 4294901760
    %v2931 = vsub.f32 %v589, %v2930
    %v2932 = vand.u32 %v2931, 4294901760
    %2933 = vmatmul.mubr.f32.gmra.mrb[0].mxu0 %v2932
    %v2934 = vpop.f32.mrb[0].mxu0
    %v2935 = vadd.f32 %v2861, %v2934
    %v2936 = vpop.f32.mrb[0].mxu0
    %2937 = vdwg.mxu0
    %2938 = vmatprep.subr.mxu0 0.0
    %v2939 = vand.u32 %v2635, 4294901760
    %v2940 = vsub.f32 %v2635, %v2939
    %v2941 = vand.u32 %v2940, 4294901760
    %2942 = vmatpush1.msra.mxu0 %v2941
    %2943 = vmatprep.subr.mxu0 0.0
    %2944 = vmatpush1.msra.mxu0 0.0
    %2945 = vmatprep.subr.mxu0 0.0
    %2946 = vmatpush1.msra.mxu0 0.0
    %2947 = vmatprep.subr.mxu0 0.0
    %2948 = vmatpush1.msra.mxu0 0.0
    %2949 = vmatprep.subr.mxu0 0.0
    %2950 = vmatpush1.msra.mxu0 0.0
    %2951 = vmatprep.subr.mxu0 0.0
    %2952 = vmatpush1.msra.mxu0 0.0
    %2953 = vmatprep.subr.mxu0 0.0
    %2954 = vmatpush1.msra.mxu0 0.0
    %2955 = vmatprep.subr.mxu0 0.0
    %2956 = vmatpush1.msra.mxu0 0.0
    %2957 = vmatprep.subr.mxu0 0.0
    %2958 = vmatpush1.msra.mxu0 0.0
    %2959 = vmatprep.subr.mxu0 0.0
    %2960 = vmatpush1.msra.mxu0 0.0
    %2961 = vmatprep.subr.mxu0 0.0
    %2962 = vmatpush1.msra.mxu0 0.0
    %2963 = vmatprep.subr.mxu0 0.0
    %2964 = vmatpush1.msra.mxu0 0.0
    %2965 = vmatprep.subr.mxu0 0.0
    %2966 = vmatpush1.msra.mxu0 0.0
    %2967 = vmatprep.subr.mxu0 0.0
    %2968 = vmatpush1.msra.mxu0 0.0
    %2969 = vmatprep.subr.mxu0 0.0
    %2970 = vmatpush1.msra.mxu0 0.0
    %2971 = vmatprep.subr.mxu0 0.0
    %2972 = vmatpush1.msra.mxu0 0.0
    %2973 = vmatprep.subr.mxu0 0.0
    %2974 = vmatpush1.msra.mxu0 0.0
    %2975 = vmatprep.subr.mxu0 0.0
    %2976 = vmatpush1.msra.mxu0 0.0
    %2977 = vmatprep.subr.mxu0 0.0
    %2978 = vmatpush1.msra.mxu0 0.0
    %2979 = vmatprep.subr.mxu0 0.0
    %2980 = vmatpush1.msra.mxu0 0.0
    %2981 = vmatprep.subr.mxu0 0.0
    %2982 = vmatpush1.msra.mxu0 0.0
    %2983 = vmatprep.subr.mxu0 0.0
    %2984 = vmatpush1.msra.mxu0 0.0
    %2985 = vmatprep.subr.mxu0 0.0
    %2986 = vmatpush1.msra.mxu0 0.0
    %2987 = vmatprep.subr.mxu0 0.0
    %2988 = vmatpush1.msra.mxu0 0.0
    %2989 = vmatprep.subr.mxu0 0.0
    %2990 = vmatpush1.msra.mxu0 0.0
    %2991 = vmatprep.subr.mxu0 0.0
    %2992 = vmatpush1.msra.mxu0 0.0
    %2993 = vmatprep.subr.mxu0 0.0
    %2994 = vmatpush1.msra.mxu0 0.0
    %2995 = vmatprep.subr.mxu0 0.0
    %2996 = vmatpush1.msra.mxu0 0.0
    %2997 = vmatprep.subr.mxu0 0.0
    %2998 = vmatpush1.msra.mxu0 0.0
    %2999 = vmatprep.subr.mxu0 0.0
    %3000 = vmatpush1.msra.mxu0 0.0
    %3001 = vmatprep.subr.mxu0 0.0
    %3002 = vmatpush1.msra.mxu0 0.0
    %3003 = vmatprep.subr.mxu0 0.0
    %3004 = vmatpush1.msra.mxu0 0.0
    %3005 = vmatprep.mubr.f32.mxu0 0.0
    %v3006 = vand.u32 %v589, 4294901760
    %3007 = vmatmul.mubr.f32.gmra.mrb[0].mxu0 %v3006
    %v3008 = vpop.f32.mrb[0].mxu0
    %v3009 = vadd.f32 %v2935, %v3008
    %v3010 = vpop.f32.mrb[0].mxu0
    %3011 = vdwg.mxu0
    %3012 = vmatprep.subr.mxu0 0.0
    %v3013 = vand.u32 %v2635, 4294901760
    %3014 = vmatpush1.msra.mxu0 %v3013
    %3015 = vmatprep.subr.mxu0 0.0
    %3016 = vmatpush1.msra.mxu0 0.0
    %3017 = vmatprep.subr.mxu0 0.0
    %3018 = vmatpush1.msra.mxu0 0.0
    %3019 = vmatprep.subr.mxu0 0.0
    %3020 = vmatpush1.msra.mxu0 0.0
    %3021 = vmatprep.subr.mxu0 0.0
    %3022 = vmatpush1.msra.mxu0 0.0
    %3023 = vmatprep.subr.mxu0 0.0
    %3024 = vmatpush1.msra.mxu0 0.0
    %3025 = vmatprep.subr.mxu0 0.0
    %3026 = vmatpush1.msra.mxu0 0.0
    %3027 = vmatprep.subr.mxu0 0.0
    %3028 = vmatpush1.msra.mxu0 0.0
    %3029 = vmatprep.subr.mxu0 0.0
    %3030 = vmatpush1.msra.mxu0 0.0
    %3031 = vmatprep.subr.mxu0 0.0
    %3032 = vmatpush1.msra.mxu0 0.0
    %3033 = vmatprep.subr.mxu0 0.0
    %3034 = vmatpush1.msra.mxu0 0.0
    %3035 = vmatprep.subr.mxu0 0.0
    %3036 = vmatpush1.msra.mxu0 0.0
    %3037 = vmatprep.subr.mxu0 0.0
    %3038 = vmatpush1.msra.mxu0 0.0
    %3039 = vmatprep.subr.mxu0 0.0
    %3040 = vmatpush1.msra.mxu0 0.0
    %3041 = vmatprep.subr.mxu0 0.0
    %3042 = vmatpush1.msra.mxu0 0.0
    %3043 = vmatprep.subr.mxu0 0.0
    %3044 = vmatpush1.msra.mxu0 0.0
    %3045 = vmatprep.subr.mxu0 0.0
    %3046 = vmatpush1.msra.mxu0 0.0
    %3047 = vmatprep.subr.mxu0 0.0
    %3048 = vmatpush1.msra.mxu0 0.0
    %3049 = vmatprep.subr.mxu0 0.0
    %3050 = vmatpush1.msra.mxu0 0.0
    %3051 = vmatprep.subr.mxu0 0.0
    %3052 = vmatpush1.msra.mxu0 0.0
    %3053 = vmatprep.subr.mxu0 0.0
    %3054 = vmatpush1.msra.mxu0 0.0
    %3055 = vmatprep.subr.mxu0 0.0
    %3056 = vmatpush1.msra.mxu0 0.0
    %3057 = vmatprep.subr.mxu0 0.0
    %3058 = vmatpush1.msra.mxu0 0.0
    %3059 = vmatprep.subr.mxu0 0.0
    %3060 = vmatpush1.msra.mxu0 0.0
    %3061 = vmatprep.subr.mxu0 0.0
    %3062 = vmatpush1.msra.mxu0 0.0
    %3063 = vmatprep.subr.mxu0 0.0
    %3064 = vmatpush1.msra.mxu0 0.0
    %3065 = vmatprep.subr.mxu0 0.0
    %3066 = vmatpush1.msra.mxu0 0.0
    %3067 = vmatprep.subr.mxu0 0.0
    %3068 = vmatpush1.msra.mxu0 0.0
    %3069 = vmatprep.subr.mxu0 0.0
    %3070 = vmatpush1.msra.mxu0 0.0
    %3071 = vmatprep.subr.mxu0 0.0
    %3072 = vmatpush1.msra.mxu0 0.0
    %3073 = vmatprep.subr.mxu0 0.0
    %3074 = vmatpush1.msra.mxu0 0.0
    %3075 = vmatprep.subr.mxu0 0.0
    %3076 = vmatpush1.msra.mxu0 0.0
    %3077 = vmatprep.mubr.f32.mxu0 0.0
    %v3078 = vand.u32 %v589, 4294901760
    %3079 = vmatmul.mubr.f32.gmra.mrb[0].mxu0 %v3078
    %v3080 = vpop.f32.mrb[0].mxu0
    %v3081 = vadd.f32 %v3009, %v3080
    %v3082 = vpop.f32.mrb[0].mxu0
    %3083 = vdwg.mxu0
    %v3084 = vlaneseq
    %v3085 = vshrl.u32 %v3084, 7
    %v3086 = vsub.s32 0, %v3085
    %v3087 = vrot.slane %v3081, %v3086
    %v3088 = vsub.f32 %v2635, %v3087
    %v3089 = vmul.f32 %v3088, %v3088
    %3090 = vmatprep.subr.mxu0 0.0
    %v3091 = vand.u32 %v3089, 4294901760
    %3092 = vmatpush1.msra.mxu0 %v3091
    %3093 = vmatprep.subr.mxu0 0.0
    %3094 = vmatpush1.msra.mxu0 0.0
    %3095 = vmatprep.subr.mxu0 0.0
    %3096 = vmatpush1.msra.mxu0 0.0
    %3097 = vmatprep.subr.mxu0 0.0
    %3098 = vmatpush1.msra.mxu0 0.0
    %3099 = vmatprep.subr.mxu0 0.0
    %3100 = vmatpush1.msra.mxu0 0.0
    %3101 = vmatprep.subr.mxu0 0.0
    %3102 = vmatpush1.msra.mxu0 0.0
    %3103 = vmatprep.subr.mxu0 0.0
    %3104 = vmatpush1.msra.mxu0 0.0
    %3105 = vmatprep.subr.mxu0 0.0
    %3106 = vmatpush1.msra.mxu0 0.0
    %3107 = vmatprep.subr.mxu0 0.0
    %3108 = vmatpush1.msra.mxu0 0.0
    %3109 = vmatprep.subr.mxu0 0.0
    %3110 = vmatpush1.msra.mxu0 0.0
    %3111 = vmatprep.subr.mxu0 0.0
    %3112 = vmatpush1.msra.mxu0 0.0
    %3113 = vmatprep.subr.mxu0 0.0
    %3114 = vmatpush1.msra.mxu0 0.0
    %3115 = vmatprep.subr.mxu0 0.0
    %3116 = vmatpush1.msra.mxu0 0.0
    %3117 = vmatprep.subr.mxu0 0.0
    %3118 = vmatpush1.msra.mxu0 0.0
    %3119 = vmatprep.subr.mxu0 0.0
    %3120 = vmatpush1.msra.mxu0 0.0
    %3121 = vmatprep.subr.mxu0 0.0
    %3122 = vmatpush1.msra.mxu0 0.0
    %3123 = vmatprep.subr.mxu0 0.0
    %3124 = vmatpush1.msra.mxu0 0.0
    %3125 = vmatprep.subr.mxu0 0.0
    %3126 = vmatpush1.msra.mxu0 0.0
    %3127 = vmatprep.subr.mxu0 0.0
    %3128 = vmatpush1.msra.mxu0 0.0
    %3129 = vmatprep.subr.mxu0 0.0
    %3130 = vmatpush1.msra.mxu0 0.0
    %3131 = vmatprep.subr.mxu0 0.0
    %3132 = vmatpush1.msra.mxu0 0.0
    %3133 = vmatprep.subr.mxu0 0.0
    %3134 = vmatpush1.msra.mxu0 0.0
    %3135 = vmatprep.subr.mxu0 0.0
    %3136 = vmatpush1.msra.mxu0 0.0
    %3137 = vmatprep.subr.mxu0 0.0
    %3138 = vmatpush1.msra.mxu0 0.0
    %3139 = vmatprep.subr.mxu0 0.0
    %3140 = vmatpush1.msra.mxu0 0.0
    %3141 = vmatprep.subr.mxu0 0.0
    %3142 = vmatpush1.msra.mxu0 0.0
    %3143 = vmatprep.subr.mxu0 0.0
    %3144 = vmatpush1.msra.mxu0 0.0
    %3145 = vmatprep.subr.mxu0 0.0
    %3146 = vmatpush1.msra.mxu0 0.0
    %3147 = vmatprep.subr.mxu0 0.0
    %3148 = vmatpush1.msra.mxu0 0.0
    %3149 = vmatprep.subr.mxu0 0.0
    %3150 = vmatpush1.msra.mxu0 0.0
    %3151 = vmatprep.subr.mxu0 0.0
    %3152 = vmatpush1.msra.mxu0 0.0
    %3153 = vmatprep.subr.mxu0 0.0
    %3154 = vmatpush1.msra.mxu0 0.0
    %3155 = vmatprep.mubr.f32.mxu0 0.0
    %v3156 = vand.u32 %v589, 4294901760
    %v3157 = vsub.f32 %v589, %v3156
    %v3158 = vand.u32 %v3157, 4294901760
    %v3159 = vsub.f32 %v3157, %v3158
    %v3160 = vand.u32 %v3159, 4294901760
    %3161 = vmatmul.mubr.f32.gmra.mrb[0].mxu0 %v3160
    %v3162 = vpop.f32.mrb[0].mxu0
    %v3163 = vadd.f32 1e-05, %v3162
    %v3164 = vpop.f32.mrb[0].mxu0
    %3165 = vdwg.mxu0
    %3166 = vmatprep.subr.mxu0 0.0
    %v3167 = vand.u32 %v3089, 4294901760
    %v3168 = vsub.f32 %v3089, %v3167
    %v3169 = vand.u32 %v3168, 4294901760
    %v3170 = vsub.f32 %v3168, %v3169
    %v3171 = vand.u32 %v3170, 4294901760
    %3172 = vmatpush1.msra.mxu0 %v3171
    %3173 = vmatprep.subr.mxu0 0.0
    %3174 = vmatpush1.msra.mxu0 0.0
    %3175 = vmatprep.subr.mxu0 0.0
    %3176 = vmatpush1.msra.mxu0 0.0
    %3177 = vmatprep.subr.mxu0 0.0
    %3178 = vmatpush1.msra.mxu0 0.0
    %3179 = vmatprep.subr.mxu0 0.0
    %3180 = vmatpush1.msra.mxu0 0.0
    %3181 = vmatprep.subr.mxu0 0.0
    %3182 = vmatpush1.msra.mxu0 0.0
    %3183 = vmatprep.subr.mxu0 0.0
    %3184 = vmatpush1.msra.mxu0 0.0
    %3185 = vmatprep.subr.mxu0 0.0
    %3186 = vmatpush1.msra.mxu0 0.0
    %3187 = vmatprep.subr.mxu0 0.0
    %3188 = vmatpush1.msra.mxu0 0.0
    %3189 = vmatprep.subr.mxu0 0.0
    %3190 = vmatpush1.msra.mxu0 0.0
    %3191 = vmatprep.subr.mxu0 0.0
    %3192 = vmatpush1.msra.mxu0 0.0
    %3193 = vmatprep.subr.mxu0 0.0
    %3194 = vmatpush1.msra.mxu0 0.0
    %3195 = vmatprep.subr.mxu0 0.0
    %3196 = vmatpush1.msra.mxu0 0.0
    %3197 = vmatprep.subr.mxu0 0.0
    %3198 = vmatpush1.msra.mxu0 0.0
    %3199 = vmatprep.subr.mxu0 0.0
    %3200 = vmatpush1.msra.mxu0 0.0
    %3201 = vmatprep.subr.mxu0 0.0
    %3202 = vmatpush1.msra.mxu0 0.0
    %3203 = vmatprep.subr.mxu0 0.0
    %3204 = vmatpush1.msra.mxu0 0.0
    %3205 = vmatprep.subr.mxu0 0.0
    %3206 = vmatpush1.msra.mxu0 0.0
    %3207 = vmatprep.subr.mxu0 0.0
    %3208 = vmatpush1.msra.mxu0 0.0
    %3209 = vmatprep.subr.mxu0 0.0
    %3210 = vmatpush1.msra.mxu0 0.0
    %3211 = vmatprep.subr.mxu0 0.0
    %3212 = vmatpush1.msra.mxu0 0.0
    %3213 = vmatprep.subr.mxu0 0.0
    %3214 = vmatpush1.msra.mxu0 0.0
    %3215 = vmatprep.subr.mxu0 0.0
    %3216 = vmatpush1.msra.mxu0 0.0
    %3217 = vmatprep.subr.mxu0 0.0
    %3218 = vmatpush1.msra.mxu0 0.0
    %3219 = vmatprep.subr.mxu0 0.0
    %3220 = vmatpush1.msra.mxu0 0.0
    %3221 = vmatprep.subr.mxu0 0.0
    %3222 = vmatpush1.msra.mxu0 0.0
    %3223 = vmatprep.subr.mxu0 0.0
    %3224 = vmatpush1.msra.mxu0 0.0
    %3225 = vmatprep.subr.mxu0 0.0
    %3226 = vmatpush1.msra.mxu0 0.0
    %3227 = vmatprep.subr.mxu0 0.0
    %3228 = vmatpush1.msra.mxu0 0.0
    %3229 = vmatprep.subr.mxu0 0.0
    %3230 = vmatpush1.msra.mxu0 0.0
    %3231 = vmatprep.subr.mxu0 0.0
    %3232 = vmatpush1.msra.mxu0 0.0
    %3233 = vmatprep.subr.mxu0 0.0
    %3234 = vmatpush1.msra.mxu0 0.0
    %3235 = vmatprep.mubr.f32.mxu0 0.0
    %v3236 = vand.u32 %v589, 4294901760
    %3237 = vmatmul.mubr.f32.gmra.mrb[0].mxu0 %v3236
    %v3238 = vpop.f32.mrb[0].mxu0
    %v3239 = vadd.f32 %v3163, %v3238
    %v3240 = vpop.f32.mrb[0].mxu0
    %3241 = vdwg.mxu0
    %3242 = vmatprep.subr.mxu0 0.0
    %v3243 = vand.u32 %v3089, 4294901760
    %v3244 = vsub.f32 %v3089, %v3243
    %3245 = vmatpush1.msra.mxu0 %v3244
    %3246 = vmatprep.subr.mxu0 0.0
    %3247 = vmatpush1.msra.mxu0 0.0
    %3248 = vmatprep.subr.mxu0 0.0
    %3249 = vmatpush1.msra.mxu0 0.0
    %3250 = vmatprep.subr.mxu0 0.0
    %3251 = vmatpush1.msra.mxu0 0.0
    %3252 = vmatprep.subr.mxu0 0.0
    %3253 = vmatpush1.msra.mxu0 0.0
    %3254 = vmatprep.subr.mxu0 0.0
    %3255 = vmatpush1.msra.mxu0 0.0
    %3256 = vmatprep.subr.mxu0 0.0
    %3257 = vmatpush1.msra.mxu0 0.0
    %3258 = vmatprep.subr.mxu0 0.0
    %3259 = vmatpush1.msra.mxu0 0.0
    %3260 = vmatprep.subr.mxu0 0.0
    %3261 = vmatpush1.msra.mxu0 0.0
    %3262 = vmatprep.subr.mxu0 0.0
    %3263 = vmatpush1.msra.mxu0 0.0
    %3264 = vmatprep.subr.mxu0 0.0
    %3265 = vmatpush1.msra.mxu0 0.0
    %3266 = vmatprep.subr.mxu0 0.0
    %3267 = vmatpush1.msra.mxu0 0.0
    %3268 = vmatprep.subr.mxu0 0.0
    %3269 = vmatpush1.msra.mxu0 0.0
    %3270 = vmatprep.subr.mxu0 0.0
    %3271 = vmatpush1.msra.mxu0 0.0
    %3272 = vmatprep.subr.mxu0 0.0
    %3273 = vmatpush1.msra.mxu0 0.0
    %3274 = vmatprep.subr.mxu0 0.0
    %3275 = vmatpush1.msra.mxu0 0.0
    %3276 = vmatprep.subr.mxu0 0.0
    %3277 = vmatpush1.msra.mxu0 0.0
    %3278 = vmatprep.subr.mxu0 0.0
    %3279 = vmatpush1.msra.mxu0 0.0
    %3280 = vmatprep.subr.mxu0 0.0
    %3281 = vmatpush1.msra.mxu0 0.0
    %3282 = vmatprep.subr.mxu0 0.0
    %3283 = vmatpush1.msra.mxu0 0.0
    %3284 = vmatprep.subr.mxu0 0.0
    %3285 = vmatpush1.msra.mxu0 0.0
    %3286 = vmatprep.subr.mxu0 0.0
    %3287 = vmatpush1.msra.mxu0 0.0
    %3288 = vmatprep.subr.mxu0 0.0
    %3289 = vmatpush1.msra.mxu0 0.0
    %3290 = vmatprep.subr.mxu0 0.0
    %3291 = vmatpush1.msra.mxu0 0.0
    %3292 = vmatprep.subr.mxu0 0.0
    %3293 = vmatpush1.msra.mxu0 0.0
    %3294 = vmatprep.subr.mxu0 0.0
    %3295 = vmatpush1.msra.mxu0 0.0
    %3296 = vmatprep.subr.mxu0 0.0
    %3297 = vmatpush1.msra.mxu0 0.0
    %3298 = vmatprep.subr.mxu0 0.0
    %3299 = vmatpush1.msra.mxu0 0.0
    %3300 = vmatprep.subr.mxu0 0.0
    %3301 = vmatpush1.msra.mxu0 0.0
    %3302 = vmatprep.subr.mxu0 0.0
    %3303 = vmatpush1.msra.mxu0 0.0
    %3304 = vmatprep.subr.mxu0 0.0
    %3305 = vmatpush1.msra.mxu0 0.0
    %3306 = vmatprep.subr.mxu0 0.0
    %3307 = vmatpush1.msra.mxu0 0.0
    %3308 = vmatprep.mubr.f32.mxu0 0.0
    %v3309 = vand.u32 %v589, 4294901760
    %v3310 = vsub.f32 %v589, %v3309
    %3311 = vmatmul.mubr.f32.gmra.mrb[0].mxu0 %v3310
    %v3312 = vpop.f32.mrb[0].mxu0
    %v3313 = vadd.f32 %v3239, %v3312
    %v3314 = vpop.f32.mrb[0].mxu0
    %3315 = vdwg.mxu0
    %3316 = vmatprep.subr.mxu0 0.0
    %v3317 = vand.u32 %v3089, 4294901760
    %3318 = vmatpush1.msra.mxu0 %v3317
    %3319 = vmatprep.subr.mxu0 0.0
    %3320 = vmatpush1.msra.mxu0 0.0
    %3321 = vmatprep.subr.mxu0 0.0
    %3322 = vmatpush1.msra.mxu0 0.0
    %3323 = vmatprep.subr.mxu0 0.0
    %3324 = vmatpush1.msra.mxu0 0.0
    %3325 = vmatprep.subr.mxu0 0.0
    %3326 = vmatpush1.msra.mxu0 0.0
    %3327 = vmatprep.subr.mxu0 0.0
    %3328 = vmatpush1.msra.mxu0 0.0
    %3329 = vmatprep.subr.mxu0 0.0
    %3330 = vmatpush1.msra.mxu0 0.0
    %3331 = vmatprep.subr.mxu0 0.0
    %3332 = vmatpush1.msra.mxu0 0.0
    %3333 = vmatprep.subr.mxu0 0.0
    %3334 = vmatpush1.msra.mxu0 0.0
    %3335 = vmatprep.subr.mxu0 0.0
    %3336 = vmatpush1.msra.mxu0 0.0
    %3337 = vmatprep.subr.mxu0 0.0
    %3338 = vmatpush1.msra.mxu0 0.0
    %3339 = vmatprep.subr.mxu0 0.0
    %3340 = vmatpush1.msra.mxu0 0.0
    %3341 = vmatprep.subr.mxu0 0.0
    %3342 = vmatpush1.msra.mxu0 0.0
    %3343 = vmatprep.subr.mxu0 0.0
    %3344 = vmatpush1.msra.mxu0 0.0
    %3345 = vmatprep.subr.mxu0 0.0
    %3346 = vmatpush1.msra.mxu0 0.0
    %3347 = vmatprep.subr.mxu0 0.0
    %3348 = vmatpush1.msra.mxu0 0.0
    %3349 = vmatprep.subr.mxu0 0.0
    %3350 = vmatpush1.msra.mxu0 0.0
    %3351 = vmatprep.subr.mxu0 0.0
    %3352 = vmatpush1.msra.mxu0 0.0
    %3353 = vmatprep.subr.mxu0 0.0
    %3354 = vmatpush1.msra.mxu0 0.0
    %3355 = vmatprep.subr.mxu0 0.0
    %3356 = vmatpush1.msra.mxu0 0.0
    %3357 = vmatprep.subr.mxu0 0.0
    %3358 = vmatpush1.msra.mxu0 0.0
    %3359 = vmatprep.subr.mxu0 0.0
    %3360 = vmatpush1.msra.mxu0 0.0
    %3361 = vmatprep.subr.mxu0 0.0
    %3362 = vmatpush1.msra.mxu0 0.0
    %3363 = vmatprep.subr.mxu0 0.0
    %3364 = vmatpush1.msra.mxu0 0.0
    %3365 = vmatprep.subr.mxu0 0.0
    %3366 = vmatpush1.msra.mxu0 0.0
    %3367 = vmatprep.subr.mxu0 0.0
    %3368 = vmatpush1.msra.mxu0 0.0
    %3369 = vmatprep.subr.mxu0 0.0
    %3370 = vmatpush1.msra.mxu0 0.0
    %3371 = vmatprep.subr.mxu0 0.0
    %3372 = vmatpush1.msra.mxu0 0.0
    %3373 = vmatprep.subr.mxu0 0.0
    %3374 = vmatpush1.msra.mxu0 0.0
    %3375 = vmatprep.subr.mxu0 0.0
    %3376 = vmatpush1.msra.mxu0 0.0
    %3377 = vmatprep.subr.mxu0 0.0
    %3378 = vmatpush1.msra.mxu0 0.0
    %3379 = vmatprep.subr.mxu0 0.0
    %3380 = vmatpush1.msra.mxu0 0.0
    %3381 = vmatprep.mubr.f32.mxu0 0.0
    %v3382 = vand.u32 %v589, 4294901760
    %v3383 = vsub.f32 %v589, %v3382
    %v3384 = vand.u32 %v3383, 4294901760
    %3385 = vmatmul.mubr.f32.gmra.mrb[0].mxu0 %v3384
    %v3386 = vpop.f32.mrb[0].mxu0
    %v3387 = vadd.f32 %v3313, %v3386
    %v3388 = vpop.f32.mrb[0].mxu0
    %3389 = vdwg.mxu0
    %3390 = vmatprep.subr.mxu0 0.0
    %v3391 = vand.u32 %v3089, 4294901760
    %v3392 = vsub.f32 %v3089, %v3391
    %v3393 = vand.u32 %v3392, 4294901760
    %3394 = vmatpush1.msra.mxu0 %v3393
    %3395 = vmatprep.subr.mxu0 0.0
    %3396 = vmatpush1.msra.mxu0 0.0
    %3397 = vmatprep.subr.mxu0 0.0
    %3398 = vmatpush1.msra.mxu0 0.0
    %3399 = vmatprep.subr.mxu0 0.0
    %3400 = vmatpush1.msra.mxu0 0.0
    %3401 = vmatprep.subr.mxu0 0.0
    %3402 = vmatpush1.msra.mxu0 0.0
    %3403 = vmatprep.subr.mxu0 0.0
    %3404 = vmatpush1.msra.mxu0 0.0
    %3405 = vmatprep.subr.mxu0 0.0
    %3406 = vmatpush1.msra.mxu0 0.0
    %3407 = vmatprep.subr.mxu0 0.0
    %3408 = vmatpush1.msra.mxu0 0.0
    %3409 = vmatprep.subr.mxu0 0.0
    %3410 = vmatpush1.msra.mxu0 0.0
    %3411 = vmatprep.subr.mxu0 0.0
    %3412 = vmatpush1.msra.mxu0 0.0
    %3413 = vmatprep.subr.mxu0 0.0
    %3414 = vmatpush1.msra.mxu0 0.0
    %3415 = vmatprep.subr.mxu0 0.0
    %3416 = vmatpush1.msra.mxu0 0.0
    %3417 = vmatprep.subr.mxu0 0.0
    %3418 = vmatpush1.msra.mxu0 0.0
    %3419 = vmatprep.subr.mxu0 0.0
    %3420 = vmatpush1.msra.mxu0 0.0
    %3421 = vmatprep.subr.mxu0 0.0
    %3422 = vmatpush1.msra.mxu0 0.0
    %3423 = vmatprep.subr.mxu0 0.0
    %3424 = vmatpush1.msra.mxu0 0.0
    %3425 = vmatprep.subr.mxu0 0.0
    %3426 = vmatpush1.msra.mxu0 0.0
    %3427 = vmatprep.subr.mxu0 0.0
    %3428 = vmatpush1.msra.mxu0 0.0
    %3429 = vmatprep.subr.mxu0 0.0
    %3430 = vmatpush1.msra.mxu0 0.0
    %3431 = vmatprep.subr.mxu0 0.0
    %3432 = vmatpush1.msra.mxu0 0.0
    %3433 = vmatprep.subr.mxu0 0.0
    %3434 = vmatpush1.msra.mxu0 0.0
    %3435 = vmatprep.subr.mxu0 0.0
    %3436 = vmatpush1.msra.mxu0 0.0
    %3437 = vmatprep.subr.mxu0 0.0
    %3438 = vmatpush1.msra.mxu0 0.0
    %3439 = vmatprep.subr.mxu0 0.0
    %3440 = vmatpush1.msra.mxu0 0.0
    %3441 = vmatprep.subr.mxu0 0.0
    %3442 = vmatpush1.msra.mxu0 0.0
    %3443 = vmatprep.subr.mxu0 0.0
    %3444 = vmatpush1.msra.mxu0 0.0
    %3445 = vmatprep.subr.mxu0 0.0
    %3446 = vmatpush1.msra.mxu0 0.0
    %3447 = vmatprep.subr.mxu0 0.0
    %3448 = vmatpush1.msra.mxu0 0.0
    %3449 = vmatprep.subr.mxu0 0.0
    %3450 = vmatpush1.msra.mxu0 0.0
    %3451 = vmatprep.subr.mxu0 0.0
    %3452 = vmatpush1.msra.mxu0 0.0
    %3453 = vmatprep.subr.mxu0 0.0
    %3454 = vmatpush1.msra.mxu0 0.0
    %3455 = vmatprep.subr.mxu0 0.0
    %3456 = vmatpush1.msra.mxu0 0.0
    %3457 = vmatprep.mubr.f32.mxu0 0.0
    %v3458 = vand.u32 %v589, 4294901760
    %3459 = vmatmul.mubr.f32.gmra.mrb[0].mxu0 %v3458
    %v3460 = vpop.f32.mrb[0].mxu0
    %v3461 = vadd.f32 %v3387, %v3460
    %v3462 = vpop.f32.mrb[0].mxu0
    %3463 = vdwg.mxu0
    %3464 = vmatprep.subr.mxu0 0.0
    %v3465 = vand.u32 %v3089, 4294901760
    %3466 = vmatpush1.msra.mxu0 %v3465
    %3467 = vmatprep.subr.mxu0 0.0
    %3468 = vmatpush1.msra.mxu0 0.0
    %3469 = vmatprep.subr.mxu0 0.0
    %3470 = vmatpush1.msra.mxu0 0.0
    %3471 = vmatprep.subr.mxu0 0.0
    %3472 = vmatpush1.msra.mxu0 0.0
    %3473 = vmatprep.subr.mxu0 0.0
    %3474 = vmatpush1.msra.mxu0 0.0
    %3475 = vmatprep.subr.mxu0 0.0
    %3476 = vmatpush1.msra.mxu0 0.0
    %3477 = vmatprep.subr.mxu0 0.0
    %3478 = vmatpush1.msra.mxu0 0.0
    %3479 = vmatprep.subr.mxu0 0.0
    %3480 = vmatpush1.msra.mxu0 0.0
    %3481 = vmatprep.subr.mxu0 0.0
    %3482 = vmatpush1.msra.mxu0 0.0
    %3483 = vmatprep.subr.mxu0 0.0
    %3484 = vmatpush1.msra.mxu0 0.0
    %3485 = vmatprep.subr.mxu0 0.0
    %3486 = vmatpush1.msra.mxu0 0.0
    %3487 = vmatprep.subr.mxu0 0.0
    %3488 = vmatpush1.msra.mxu0 0.0
    %3489 = vmatprep.subr.mxu0 0.0
    %3490 = vmatpush1.msra.mxu0 0.0
    %3491 = vmatprep.subr.mxu0 0.0
    %3492 = vmatpush1.msra.mxu0 0.0
    %3493 = vmatprep.subr.mxu0 0.0
    %3494 = vmatpush1.msra.mxu0 0.0
    %3495 = vmatprep.subr.mxu0 0.0
    %3496 = vmatpush1.msra.mxu0 0.0
    %3497 = vmatprep.subr.mxu0 0.0
    %3498 = vmatpush1.msra.mxu0 0.0
    %3499 = vmatprep.subr.mxu0 0.0
    %3500 = vmatpush1.msra.mxu0 0.0
    %3501 = vmatprep.subr.mxu0 0.0
    %3502 = vmatpush1.msra.mxu0 0.0
    %3503 = vmatprep.subr.mxu0 0.0
    %3504 = vmatpush1.msra.mxu0 0.0
    %3505 = vmatprep.subr.mxu0 0.0
    %3506 = vmatpush1.msra.mxu0 0.0
    %3507 = vmatprep.subr.mxu0 0.0
    %3508 = vmatpush1.msra.mxu0 0.0
    %3509 = vmatprep.subr.mxu0 0.0
    %3510 = vmatpush1.msra.mxu0 0.0
    %3511 = vmatprep.subr.mxu0 0.0
    %3512 = vmatpush1.msra.mxu0 0.0
    %3513 = vmatprep.subr.mxu0 0.0
    %3514 = vmatpush1.msra.mxu0 0.0
    %3515 = vmatprep.subr.mxu0 0.0
    %3516 = vmatpush1.msra.mxu0 0.0
    %3517 = vmatprep.subr.mxu0 0.0
    %3518 = vmatpush1.msra.mxu0 0.0
    %3519 = vmatprep.subr.mxu0 0.0
    %3520 = vmatpush1.msra.mxu0 0.0
    %3521 = vmatprep.subr.mxu0 0.0
    %3522 = vmatpush1.msra.mxu0 0.0
    %3523 = vmatprep.subr.mxu0 0.0
    %3524 = vmatpush1.msra.mxu0 0.0
    %3525 = vmatprep.subr.mxu0 0.0
    %3526 = vmatpush1.msra.mxu0 0.0
    %3527 = vmatprep.subr.mxu0 0.0
    %3528 = vmatpush1.msra.mxu0 0.0
    %3529 = vmatprep.mubr.f32.mxu0 0.0
    %v3530 = vand.u32 %v589, 4294901760
    %3531 = vmatmul.mubr.f32.gmra.mrb[0].mxu0 %v3530
    %v3532 = vpop.f32.mrb[0].mxu0
    %v3533 = vadd.f32 %v3461, %v3532
    %v3534 = vpop.f32.mrb[0].mxu0
    %3535 = vdwg.mxu0
    %v3536 = vrsqrt.pop %v3533
    %v3537 = vmul.f32 %v75, %v3536
    %v3538 = vmul.f32 %v3081, %v3537
    %v3539 = vsub.f32 %v76, %v3538
    %v3541 = vlaneseq
    %v3542 = vshrl.u32 %v3541, 7
    %v3543 = vsub.s32 0, %v3542
    %v3544 = vrot.slane %v3537, %v3543
    %v3546 = vmul.f32 %v2635, %v3544
    %v3548 = vlaneseq
    %v3549 = vshrl.u32 %v3548, 7
    %v3550 = vsub.s32 0, %v3549
    %v3551 = vrot.slane %v3539, %v3550
    %v3553 = vadd.f32 %v3546, %v3551
    %v3554 = vmax.f32 %v3553, 0.0
    %3555 = vmatprep.subr.mxu0 0.0
    %v3556 = vand.u32 %v81, 4294901760
    %3557 = vmatpush1.msra.mxu0 %v3556
    %3558 = vmatprep.subr.mxu0 0.0
    %v3559 = vand.u32 %v82, 4294901760
    %3560 = vmatpush1.msra.mxu0 %v3559
    %3561 = vmatprep.subr.mxu0 0.0
    %v3562 = vand.u32 %v83, 4294901760
    %3563 = vmatpush1.msra.mxu0 %v3562
    %3564 = vmatprep.subr.mxu0 0.0
    %v3565 = vand.u32 %v84, 4294901760
    %3566 = vmatpush1.msra.mxu0 %v3565
    %3567 = vmatprep.subr.mxu0 0.0
    %v3568 = vand.u32 %v85, 4294901760
    %3569 = vmatpush1.msra.mxu0 %v3568
    %3570 = vmatprep.subr.mxu0 0.0
    %v3571 = vand.u32 %v86, 4294901760
    %3572 = vmatpush1.msra.mxu0 %v3571
    %3573 = vmatprep.subr.mxu0 0.0
    %v3574 = vand.u32 %v87, 4294901760
    %3575 = vmatpush1.msra.mxu0 %v3574
    %3576 = vmatprep.subr.mxu0 0.0
    %v3577 = vand.u32 %v88, 4294901760
    %3578 = vmatpush1.msra.mxu0 %v3577
    %3579 = vmatprep.subr.mxu0 0.0
    %v3580 = vand.u32 %v89, 4294901760
    %3581 = vmatpush1.msra.mxu0 %v3580
    %3582 = vmatprep.subr.mxu0 0.0
    %v3583 = vand.u32 %v90, 4294901760
    %3584 = vmatpush1.msra.mxu0 %v3583
    %3585 = vmatprep.subr.mxu0 0.0
    %v3586 = vand.u32 %v91, 4294901760
    %3587 = vmatpush1.msra.mxu0 %v3586
    %3588 = vmatprep.subr.mxu0 0.0
    %v3589 = vand.u32 %v92, 4294901760
    %3590 = vmatpush1.msra.mxu0 %v3589
    %3591 = vmatprep.subr.mxu0 0.0
    %v3592 = vand.u32 %v93, 4294901760
    %3593 = vmatpush1.msra.mxu0 %v3592
    %3594 = vmatprep.subr.mxu0 0.0
    %v3595 = vand.u32 %v94, 4294901760
    %3596 = vmatpush1.msra.mxu0 %v3595
    %3597 = vmatprep.subr.mxu0 0.0
    %v3598 = vand.u32 %v95, 4294901760
    %3599 = vmatpush1.msra.mxu0 %v3598
    %3600 = vmatprep.subr.mxu0 0.0
    %v3601 = vand.u32 %v96, 4294901760
    %3602 = vmatpush1.msra.mxu0 %v3601
    %3603 = vmatprep.subr.mxu0 0.0
    %3604 = vmatpush1.msra.mxu0 0.0
    %3605 = vmatprep.subr.mxu0 0.0
    %3606 = vmatpush1.msra.mxu0 0.0
    %3607 = vmatprep.subr.mxu0 0.0
    %3608 = vmatpush1.msra.mxu0 0.0
    %3609 = vmatprep.subr.mxu0 0.0
    %3610 = vmatpush1.msra.mxu0 0.0
    %3611 = vmatprep.subr.mxu0 0.0
    %3612 = vmatpush1.msra.mxu0 0.0
    %3613 = vmatprep.subr.mxu0 0.0
    %3614 = vmatpush1.msra.mxu0 0.0
    %3615 = vmatprep.subr.mxu0 0.0
    %3616 = vmatpush1.msra.mxu0 0.0
    %3617 = vmatprep.subr.mxu0 0.0
    %3618 = vmatpush1.msra.mxu0 0.0
    %3619 = vmatprep.subr.mxu0 0.0
    %3620 = vmatpush1.msra.mxu0 0.0
    %3621 = vmatprep.subr.mxu0 0.0
    %3622 = vmatpush1.msra.mxu0 0.0
    %3623 = vmatprep.subr.mxu0 0.0
    %3624 = vmatpush1.msra.mxu0 0.0
    %3625 = vmatprep.subr.mxu0 0.0
    %3626 = vmatpush1.msra.mxu0 0.0
    %3627 = vmatprep.subr.mxu0 0.0
    %3628 = vmatpush1.msra.mxu0 0.0
    %3629 = vmatprep.subr.mxu0 0.0
    %3630 = vmatpush1.msra.mxu0 0.0
    %3631 = vmatprep.subr.mxu0 0.0
    %3632 = vmatpush1.msra.mxu0 0.0
    %3633 = vmatprep.subr.mxu0 0.0
    %3634 = vmatpush1.msra.mxu0 0.0
    %3635 = vmatprep.mubr.f32.mxu0 0.0
    %v3636 = vand.u32 %v3554, 4294901760
    %v3637 = vsub.f32 %v3554, %v3636
    %v3638 = vand.u32 %v3637, 4294901760
    %v3639 = vsub.f32 %v3637, %v3638
    %v3640 = vand.u32 %v3639, 4294901760
    %3641 = vmatmul.mubr.f32.gmra.mrb[0].mxu0 %v3640
    %v3642 = vpop.f32.mrb[0].mxu0
    %v3643 = vadd.f32 0.0, %v3642
    %v3644 = vpop.f32.mrb[0].mxu0
    %3645 = vdwg.mxu0
    %3646 = vmatprep.subr.mxu0 0.0
    %v3647 = vand.u32 %v81, 4294901760
    %v3648 = vsub.f32 %v81, %v3647
    %v3649 = vand.u32 %v3648, 4294901760
    %v3650 = vsub.f32 %v3648, %v3649
    %v3651 = vand.u32 %v3650, 4294901760
    %3652 = vmatpush1.msra.mxu0 %v3651
    %3653 = vmatprep.subr.mxu0 0.0
    %v3654 = vand.u32 %v82, 4294901760
    %v3655 = vsub.f32 %v82, %v3654
    %v3656 = vand.u32 %v3655, 4294901760
    %v3657 = vsub.f32 %v3655, %v3656
    %v3658 = vand.u32 %v3657, 4294901760
    %3659 = vmatpush1.msra.mxu0 %v3658
    %3660 = vmatprep.subr.mxu0 0.0
    %v3661 = vand.u32 %v83, 4294901760
    %v3662 = vsub.f32 %v83, %v3661
    %v3663 = vand.u32 %v3662, 4294901760
    %v3664 = vsub.f32 %v3662, %v3663
    %v3665 = vand.u32 %v3664, 4294901760
    %3666 = vmatpush1.msra.mxu0 %v3665
    %3667 = vmatprep.subr.mxu0 0.0
    %v3668 = vand.u32 %v84, 4294901760
    %v3669 = vsub.f32 %v84, %v3668
    %v3670 = vand.u32 %v3669, 4294901760
    %v3671 = vsub.f32 %v3669, %v3670
    %v3672 = vand.u32 %v3671, 4294901760
    %3673 = vmatpush1.msra.mxu0 %v3672
    %3674 = vmatprep.subr.mxu0 0.0
    %v3675 = vand.u32 %v85, 4294901760
    %v3676 = vsub.f32 %v85, %v3675
    %v3677 = vand.u32 %v3676, 4294901760
    %v3678 = vsub.f32 %v3676, %v3677
    %v3679 = vand.u32 %v3678, 4294901760
    %3680 = vmatpush1.msra.mxu0 %v3679
    %3681 = vmatprep.subr.mxu0 0.0
    %v3682 = vand.u32 %v86, 4294901760
    %v3683 = vsub.f32 %v86, %v3682
    %v3684 = vand.u32 %v3683, 4294901760
    %v3685 = vsub.f32 %v3683, %v3684
    %v3686 = vand.u32 %v3685, 4294901760
    %3687 = vmatpush1.msra.mxu0 %v3686
    %3688 = vmatprep.subr.mxu0 0.0
    %v3689 = vand.u32 %v87, 4294901760
    %v3690 = vsub.f32 %v87, %v3689
    %v3691 = vand.u32 %v3690, 4294901760
    %v3692 = vsub.f32 %v3690, %v3691
    %v3693 = vand.u32 %v3692, 4294901760
    %3694 = vmatpush1.msra.mxu0 %v3693
    %3695 = vmatprep.subr.mxu0 0.0
    %v3696 = vand.u32 %v88, 4294901760
    %v3697 = vsub.f32 %v88, %v3696
    %v3698 = vand.u32 %v3697, 4294901760
    %v3699 = vsub.f32 %v3697, %v3698
    %v3700 = vand.u32 %v3699, 4294901760
    %3701 = vmatpush1.msra.mxu0 %v3700
    %3702 = vmatprep.subr.mxu0 0.0
    %v3703 = vand.u32 %v89, 4294901760
    %v3704 = vsub.f32 %v89, %v3703
    %v3705 = vand.u32 %v3704, 4294901760
    %v3706 = vsub.f32 %v3704, %v3705
    %v3707 = vand.u32 %v3706, 4294901760
    %3708 = vmatpush1.msra.mxu0 %v3707
    %3709 = vmatprep.subr.mxu0 0.0
    %v3710 = vand.u32 %v90, 4294901760
    %v3711 = vsub.f32 %v90, %v3710
    %v3712 = vand.u32 %v3711, 4294901760
    %v3713 = vsub.f32 %v3711, %v3712
    %v3714 = vand.u32 %v3713, 4294901760
    %3715 = vmatpush1.msra.mxu0 %v3714
    %3716 = vmatprep.subr.mxu0 0.0
    %v3717 = vand.u32 %v91, 4294901760
    %v3718 = vsub.f32 %v91, %v3717
    %v3719 = vand.u32 %v3718, 4294901760
    %v3720 = vsub.f32 %v3718, %v3719
    %v3721 = vand.u32 %v3720, 4294901760
    %3722 = vmatpush1.msra.mxu0 %v3721
    %3723 = vmatprep.subr.mxu0 0.0
    %v3724 = vand.u32 %v92, 4294901760
    %v3725 = vsub.f32 %v92, %v3724
    %v3726 = vand.u32 %v3725, 4294901760
    %v3727 = vsub.f32 %v3725, %v3726
    %v3728 = vand.u32 %v3727, 4294901760
    %3729 = vmatpush1.msra.mxu0 %v3728
    %3730 = vmatprep.subr.mxu0 0.0
    %v3731 = vand.u32 %v93, 4294901760
    %v3732 = vsub.f32 %v93, %v3731
    %v3733 = vand.u32 %v3732, 4294901760
    %v3734 = vsub.f32 %v3732, %v3733
    %v3735 = vand.u32 %v3734, 4294901760
    %3736 = vmatpush1.msra.mxu0 %v3735
    %3737 = vmatprep.subr.mxu0 0.0
    %v3738 = vand.u32 %v94, 4294901760
    %v3739 = vsub.f32 %v94, %v3738
    %v3740 = vand.u32 %v3739, 4294901760
    %v3741 = vsub.f32 %v3739, %v3740
    %v3742 = vand.u32 %v3741, 4294901760
    %3743 = vmatpush1.msra.mxu0 %v3742
    %3744 = vmatprep.subr.mxu0 0.0
    %v3745 = vand.u32 %v95, 4294901760
    %v3746 = vsub.f32 %v95, %v3745
    %v3747 = vand.u32 %v3746, 4294901760
    %v3748 = vsub.f32 %v3746, %v3747
    %v3749 = vand.u32 %v3748, 4294901760
    %3750 = vmatpush1.msra.mxu0 %v3749
    %3751 = vmatprep.subr.mxu0 0.0
    %v3752 = vand.u32 %v96, 4294901760
    %v3753 = vsub.f32 %v96, %v3752
    %v3754 = vand.u32 %v3753, 4294901760
    %v3755 = vsub.f32 %v3753, %v3754
    %v3756 = vand.u32 %v3755, 4294901760
    %3757 = vmatpush1.msra.mxu0 %v3756
    %3758 = vmatprep.subr.mxu0 0.0
    %3759 = vmatpush1.msra.mxu0 0.0
    %3760 = vmatprep.subr.mxu0 0.0
    %3761 = vmatpush1.msra.mxu0 0.0
    %3762 = vmatprep.subr.mxu0 0.0
    %3763 = vmatpush1.msra.mxu0 0.0
    %3764 = vmatprep.subr.mxu0 0.0
    %3765 = vmatpush1.msra.mxu0 0.0
    %3766 = vmatprep.subr.mxu0 0.0
    %3767 = vmatpush1.msra.mxu0 0.0
    %3768 = vmatprep.subr.mxu0 0.0
    %3769 = vmatpush1.msra.mxu0 0.0
    %3770 = vmatprep.subr.mxu0 0.0
    %3771 = vmatpush1.msra.mxu0 0.0
    %3772 = vmatprep.subr.mxu0 0.0
    %3773 = vmatpush1.msra.mxu0 0.0
    %3774 = vmatprep.subr.mxu0 0.0
    %3775 = vmatpush1.msra.mxu0 0.0
    %3776 = vmatprep.subr.mxu0 0.0
    %3777 = vmatpush1.msra.mxu0 0.0
    %3778 = vmatprep.subr.mxu0 0.0
    %3779 = vmatpush1.msra.mxu0 0.0
    %3780 = vmatprep.subr.mxu0 0.0
    %3781 = vmatpush1.msra.mxu0 0.0
    %3782 = vmatprep.subr.mxu0 0.0
    %3783 = vmatpush1.msra.mxu0 0.0
    %3784 = vmatprep.subr.mxu0 0.0
    %3785 = vmatpush1.msra.mxu0 0.0
    %3786 = vmatprep.subr.mxu0 0.0
    %3787 = vmatpush1.msra.mxu0 0.0
    %3788 = vmatprep.subr.mxu0 0.0
    %3789 = vmatpush1.msra.mxu0 0.0
    %3790 = vmatprep.mubr.f32.mxu0 0.0
    %v3791 = vand.u32 %v3554, 4294901760
    %3792 = vmatmul.mubr.f32.gmra.mrb[0].mxu0 %v3791
    %v3793 = vpop.f32.mrb[0].mxu0
    %v3794 = vadd.f32 %v3643, %v3793
    %v3795 = vpop.f32.mrb[0].mxu0
    %3796 = vdwg.mxu0
    %3797 = vmatprep.subr.mxu0 0.0
    %v3798 = vand.u32 %v81, 4294901760
    %v3799 = vsub.f32 %v81, %v3798
    %3800 = vmatpush1.msra.mxu0 %v3799
    %3801 = vmatprep.subr.mxu0 0.0
    %v3802 = vand.u32 %v82, 4294901760
    %v3803 = vsub.f32 %v82, %v3802
    %3804 = vmatpush1.msra.mxu0 %v3803
    %3805 = vmatprep.subr.mxu0 0.0
    %v3806 = vand.u32 %v83, 4294901760
    %v3807 = vsub.f32 %v83, %v3806
    %3808 = vmatpush1.msra.mxu0 %v3807
    %3809 = vmatprep.subr.mxu0 0.0
    %v3810 = vand.u32 %v84, 4294901760
    %v3811 = vsub.f32 %v84, %v3810
    %3812 = vmatpush1.msra.mxu0 %v3811
    %3813 = vmatprep.subr.mxu0 0.0
    %v3814 = vand.u32 %v85, 4294901760
    %v3815 = vsub.f32 %v85, %v3814
    %3816 = vmatpush1.msra.mxu0 %v3815
    %3817 = vmatprep.subr.mxu0 0.0
    %v3818 = vand.u32 %v86, 4294901760
    %v3819 = vsub.f32 %v86, %v3818
    %3820 = vmatpush1.msra.mxu0 %v3819
    %3821 = vmatprep.subr.mxu0 0.0
    %v3822 = vand.u32 %v87, 4294901760
    %v3823 = vsub.f32 %v87, %v3822
    %3824 = vmatpush1.msra.mxu0 %v3823
    %3825 = vmatprep.subr.mxu0 0.0
    %v3826 = vand.u32 %v88, 4294901760
    %v3827 = vsub.f32 %v88, %v3826
    %3828 = vmatpush1.msra.mxu0 %v3827
    %3829 = vmatprep.subr.mxu0 0.0
    %v3830 = vand.u32 %v89, 4294901760
    %v3831 = vsub.f32 %v89, %v3830
    %3832 = vmatpush1.msra.mxu0 %v3831
    %3833 = vmatprep.subr.mxu0 0.0
    %v3834 = vand.u32 %v90, 4294901760
    %v3835 = vsub.f32 %v90, %v3834
    %3836 = vmatpush1.msra.mxu0 %v3835
    %3837 = vmatprep.subr.mxu0 0.0
    %v3838 = vand.u32 %v91, 4294901760
    %v3839 = vsub.f32 %v91, %v3838
    %3840 = vmatpush1.msra.mxu0 %v3839
    %3841 = vmatprep.subr.mxu0 0.0
    %v3842 = vand.u32 %v92, 4294901760
    %v3843 = vsub.f32 %v92, %v3842
    %3844 = vmatpush1.msra.mxu0 %v3843
    %3845 = vmatprep.subr.mxu0 0.0
    %v3846 = vand.u32 %v93, 4294901760
    %v3847 = vsub.f32 %v93, %v3846
    %3848 = vmatpush1.msra.mxu0 %v3847
    %3849 = vmatprep.subr.mxu0 0.0
    %v3850 = vand.u32 %v94, 4294901760
    %v3851 = vsub.f32 %v94, %v3850
    %3852 = vmatpush1.msra.mxu0 %v3851
    %3853 = vmatprep.subr.mxu0 0.0
    %v3854 = vand.u32 %v95, 4294901760
    %v3855 = vsub.f32 %v95, %v3854
    %3856 = vmatpush1.msra.mxu0 %v3855
    %3857 = vmatprep.subr.mxu0 0.0
    %v3858 = vand.u32 %v96, 4294901760
    %v3859 = vsub.f32 %v96, %v3858
    %3860 = vmatpush1.msra.mxu0 %v3859
    %3861 = vmatprep.subr.mxu0 0.0
    %3862 = vmatpush1.msra.mxu0 0.0
    %3863 = vmatprep.subr.mxu0 0.0
    %3864 = vmatpush1.msra.mxu0 0.0
    %3865 = vmatprep.subr.mxu0 0.0
    %3866 = vmatpush1.msra.mxu0 0.0
    %3867 = vmatprep.subr.mxu0 0.0
    %3868 = vmatpush1.msra.mxu0 0.0
    %3869 = vmatprep.subr.mxu0 0.0
    %3870 = vmatpush1.msra.mxu0 0.0
    %3871 = vmatprep.subr.mxu0 0.0
    %3872 = vmatpush1.msra.mxu0 0.0
    %3873 = vmatprep.subr.mxu0 0.0
    %3874 = vmatpush1.msra.mxu0 0.0
    %3875 = vmatprep.subr.mxu0 0.0
    %3876 = vmatpush1.msra.mxu0 0.0
    %3877 = vmatprep.subr.mxu0 0.0
    %3878 = vmatpush1.msra.mxu0 0.0
    %3879 = vmatprep.subr.mxu0 0.0
    %3880 = vmatpush1.msra.mxu0 0.0
    %3881 = vmatprep.subr.mxu0 0.0
    %3882 = vmatpush1.msra.mxu0 0.0
    %3883 = vmatprep.subr.mxu0 0.0
    %3884 = vmatpush1.msra.mxu0 0.0
    %3885 = vmatprep.subr.mxu0 0.0
    %3886 = vmatpush1.msra.mxu0 0.0
    %3887 = vmatprep.subr.mxu0 0.0
    %3888 = vmatpush1.msra.mxu0 0.0
    %3889 = vmatprep.subr.mxu0 0.0
    %3890 = vmatpush1.msra.mxu0 0.0
    %3891 = vmatprep.subr.mxu0 0.0
    %3892 = vmatpush1.msra.mxu0 0.0
    %3893 = vmatprep.mubr.f32.mxu0 0.0
    %v3894 = vand.u32 %v3554, 4294901760
    %v3895 = vsub.f32 %v3554, %v3894
    %3896 = vmatmul.mubr.f32.gmra.mrb[0].mxu0 %v3895
    %v3897 = vpop.f32.mrb[0].mxu0
    %v3898 = vadd.f32 %v3794, %v3897
    %v3899 = vpop.f32.mrb[0].mxu0
    %3900 = vdwg.mxu0
    %3901 = vmatprep.subr.mxu0 0.0
    %v3902 = vand.u32 %v81, 4294901760
    %3903 = vmatpush1.msra.mxu0 %v3902
    %3904 = vmatprep.subr.mxu0 0.0
    %v3905 = vand.u32 %v82, 4294901760
    %3906 = vmatpush1.msra.mxu0 %v3905
    %3907 = vmatprep.subr.mxu0 0.0
    %v3908 = vand.u32 %v83, 4294901760
    %3909 = vmatpush1.msra.mxu0 %v3908
    %3910 = vmatprep.subr.mxu0 0.0
    %v3911 = vand.u32 %v84, 4294901760
    %3912 = vmatpush1.msra.mxu0 %v3911
    %3913 = vmatprep.subr.mxu0 0.0
    %v3914 = vand.u32 %v85, 4294901760
    %3915 = vmatpush1.msra.mxu0 %v3914
    %3916 = vmatprep.subr.mxu0 0.0
    %v3917 = vand.u32 %v86, 4294901760
    %3918 = vmatpush1.msra.mxu0 %v3917
    %3919 = vmatprep.subr.mxu0 0.0
    %v3920 = vand.u32 %v87, 4294901760
    %3921 = vmatpush1.msra.mxu0 %v3920
    %3922 = vmatprep.subr.mxu0 0.0
    %v3923 = vand.u32 %v88, 4294901760
    %3924 = vmatpush1.msra.mxu0 %v3923
    %3925 = vmatprep.subr.mxu0 0.0
    %v3926 = vand.u32 %v89, 4294901760
    %3927 = vmatpush1.msra.mxu0 %v3926
    %3928 = vmatprep.subr.mxu0 0.0
    %v3929 = vand.u32 %v90, 4294901760
    %3930 = vmatpush1.msra.mxu0 %v3929
    %3931 = vmatprep.subr.mxu0 0.0
    %v3932 = vand.u32 %v91, 4294901760
    %3933 = vmatpush1.msra.mxu0 %v3932
    %3934 = vmatprep.subr.mxu0 0.0
    %v3935 = vand.u32 %v92, 4294901760
    %3936 = vmatpush1.msra.mxu0 %v3935
    %3937 = vmatprep.subr.mxu0 0.0
    %v3938 = vand.u32 %v93, 4294901760
    %3939 = vmatpush1.msra.mxu0 %v3938
    %3940 = vmatprep.subr.mxu0 0.0
    %v3941 = vand.u32 %v94, 4294901760
    %3942 = vmatpush1.msra.mxu0 %v3941
    %3943 = vmatprep.subr.mxu0 0.0
    %v3944 = vand.u32 %v95, 4294901760
    %3945 = vmatpush1.msra.mxu0 %v3944
    %3946 = vmatprep.subr.mxu0 0.0
    %v3947 = vand.u32 %v96, 4294901760
    %3948 = vmatpush1.msra.mxu0 %v3947
    %3949 = vmatprep.subr.mxu0 0.0
    %3950 = vmatpush1.msra.mxu0 0.0
    %3951 = vmatprep.subr.mxu0 0.0
    %3952 = vmatpush1.msra.mxu0 0.0
    %3953 = vmatprep.subr.mxu0 0.0
    %3954 = vmatpush1.msra.mxu0 0.0
    %3955 = vmatprep.subr.mxu0 0.0
    %3956 = vmatpush1.msra.mxu0 0.0
    %3957 = vmatprep.subr.mxu0 0.0
    %3958 = vmatpush1.msra.mxu0 0.0
    %3959 = vmatprep.subr.mxu0 0.0
    %3960 = vmatpush1.msra.mxu0 0.0
    %3961 = vmatprep.subr.mxu0 0.0
    %3962 = vmatpush1.msra.mxu0 0.0
    %3963 = vmatprep.subr.mxu0 0.0
    %3964 = vmatpush1.msra.mxu0 0.0
    %3965 = vmatprep.subr.mxu0 0.0
    %3966 = vmatpush1.msra.mxu0 0.0
    %3967 = vmatprep.subr.mxu0 0.0
    %3968 = vmatpush1.msra.mxu0 0.0
    %3969 = vmatprep.subr.mxu0 0.0
    %3970 = vmatpush1.msra.mxu0 0.0
    %3971 = vmatprep.subr.mxu0 0.0
    %3972 = vmatpush1.msra.mxu0 0.0
    %3973 = vmatprep.subr.mxu0 0.0
    %3974 = vmatpush1.msra.mxu0 0.0
    %3975 = vmatprep.subr.mxu0 0.0
    %3976 = vmatpush1.msra.mxu0 0.0
    %3977 = vmatprep.subr.mxu0 0.0
    %3978 = vmatpush1.msra.mxu0 0.0
    %3979 = vmatprep.subr.mxu0 0.0
    %3980 = vmatpush1.msra.mxu0 0.0
    %3981 = vmatprep.mubr.f32.mxu0 0.0
    %v3982 = vand.u32 %v3554, 4294901760
    %v3983 = vsub.f32 %v3554, %v3982
    %v3984 = vand.u32 %v3983, 4294901760
    %3985 = vmatmul.mubr.f32.gmra.mrb[0].mxu0 %v3984
    %v3986 = vpop.f32.mrb[0].mxu0
    %v3987 = vadd.f32 %v3898, %v3986
    %v3988 = vpop.f32.mrb[0].mxu0
    %3989 = vdwg.mxu0
    %3990 = vmatprep.subr.mxu0 0.0
    %v3991 = vand.u32 %v81, 4294901760
    %v3992 = vsub.f32 %v81, %v3991
    %v3993 = vand.u32 %v3992, 4294901760
    %3994 = vmatpush1.msra.mxu0 %v3993
    %3995 = vmatprep.subr.mxu0 0.0
    %v3996 = vand.u32 %v82, 4294901760
    %v3997 = vsub.f32 %v82, %v3996
    %v3998 = vand.u32 %v3997, 4294901760
    %3999 = vmatpush1.msra.mxu0 %v3998
    %4000 = vmatprep.subr.mxu0 0.0
    %v4001 = vand.u32 %v83, 4294901760
    %v4002 = vsub.f32 %v83, %v4001
    %v4003 = vand.u32 %v4002, 4294901760
    %4004 = vmatpush1.msra.mxu0 %v4003
    %4005 = vmatprep.subr.mxu0 0.0
    %v4006 = vand.u32 %v84, 4294901760
    %v4007 = vsub.f32 %v84, %v4006
    %v4008 = vand.u32 %v4007, 4294901760
    %4009 = vmatpush1.msra.mxu0 %v4008
    %4010 = vmatprep.subr.mxu0 0.0
    %v4011 = vand.u32 %v85, 4294901760
    %v4012 = vsub.f32 %v85, %v4011
    %v4013 = vand.u32 %v4012, 4294901760
    %4014 = vmatpush1.msra.mxu0 %v4013
    %4015 = vmatprep.subr.mxu0 0.0
    %v4016 = vand.u32 %v86, 4294901760
    %v4017 = vsub.f32 %v86, %v4016
    %v4018 = vand.u32 %v4017, 4294901760
    %4019 = vmatpush1.msra.mxu0 %v4018
    %4020 = vmatprep.subr.mxu0 0.0
    %v4021 = vand.u32 %v87, 4294901760
    %v4022 = vsub.f32 %v87, %v4021
    %v4023 = vand.u32 %v4022, 4294901760
    %4024 = vmatpush1.msra.mxu0 %v4023
    %4025 = vmatprep.subr.mxu0 0.0
    %v4026 = vand.u32 %v88, 4294901760
    %v4027 = vsub.f32 %v88, %v4026
    %v4028 = vand.u32 %v4027, 4294901760
    %4029 = vmatpush1.msra.mxu0 %v4028
    %4030 = vmatprep.subr.mxu0 0.0
    %v4031 = vand.u32 %v89, 4294901760
    %v4032 = vsub.f32 %v89, %v4031
    %v4033 = vand.u32 %v4032, 4294901760
    %4034 = vmatpush1.msra.mxu0 %v4033
    %4035 = vmatprep.subr.mxu0 0.0
    %v4036 = vand.u32 %v90, 4294901760
    %v4037 = vsub.f32 %v90, %v4036
    %v4038 = vand.u32 %v4037, 4294901760
    %4039 = vmatpush1.msra.mxu0 %v4038
    %4040 = vmatprep.subr.mxu0 0.0
    %v4041 = vand.u32 %v91, 4294901760
    %v4042 = vsub.f32 %v91, %v4041
    %v4043 = vand.u32 %v4042, 4294901760
    %4044 = vmatpush1.msra.mxu0 %v4043
    %4045 = vmatprep.subr.mxu0 0.0
    %v4046 = vand.u32 %v92, 4294901760
    %v4047 = vsub.f32 %v92, %v4046
    %v4048 = vand.u32 %v4047, 4294901760
    %4049 = vmatpush1.msra.mxu0 %v4048
    %4050 = vmatprep.subr.mxu0 0.0
    %v4051 = vand.u32 %v93, 4294901760
    %v4052 = vsub.f32 %v93, %v4051
    %v4053 = vand.u32 %v4052, 4294901760
    %4054 = vmatpush1.msra.mxu0 %v4053
    %4055 = vmatprep.subr.mxu0 0.0
    %v4056 = vand.u32 %v94, 4294901760
    %v4057 = vsub.f32 %v94, %v4056
    %v4058 = vand.u32 %v4057, 4294901760
    %4059 = vmatpush1.msra.mxu0 %v4058
    %4060 = vmatprep.subr.mxu0 0.0
    %v4061 = vand.u32 %v95, 4294901760
    %v4062 = vsub.f32 %v95, %v4061
    %v4063 = vand.u32 %v4062, 4294901760
    %4064 = vmatpush1.msra.mxu0 %v4063
    %4065 = vmatprep.subr.mxu0 0.0
    %v4066 = vand.u32 %v96, 4294901760
    %v4067 = vsub.f32 %v96, %v4066
    %v4068 = vand.u32 %v4067, 4294901760
    %4069 = vmatpush1.msra.mxu0 %v4068
    %4070 = vmatprep.subr.mxu0 0.0
    %4071 = vmatpush1.msra.mxu0 0.0
    %4072 = vmatprep.subr.mxu0 0.0
    %4073 = vmatpush1.msra.mxu0 0.0
    %4074 = vmatprep.subr.mxu0 0.0
    %4075 = vmatpush1.msra.mxu0 0.0
    %4076 = vmatprep.subr.mxu0 0.0
    %4077 = vmatpush1.msra.mxu0 0.0
    %4078 = vmatprep.subr.mxu0 0.0
    %4079 = vmatpush1.msra.mxu0 0.0
    %4080 = vmatprep.subr.mxu0 0.0
    %4081 = vmatpush1.msra.mxu0 0.0
    %4082 = vmatprep.subr.mxu0 0.0
    %4083 = vmatpush1.msra.mxu0 0.0
    %4084 = vmatprep.subr.mxu0 0.0
    %4085 = vmatpush1.msra.mxu0 0.0
    %4086 = vmatprep.subr.mxu0 0.0
    %4087 = vmatpush1.msra.mxu0 0.0
    %4088 = vmatprep.subr.mxu0 0.0
    %4089 = vmatpush1.msra.mxu0 0.0
    %4090 = vmatprep.subr.mxu0 0.0
    %4091 = vmatpush1.msra.mxu0 0.0
    %4092 = vmatprep.subr.mxu0 0.0
    %4093 = vmatpush1.msra.mxu0 0.0
    %4094 = vmatprep.subr.mxu0 0.0
    %4095 = vmatpush1.msra.mxu0 0.0
    %4096 = vmatprep.subr.mxu0 0.0
    %4097 = vmatpush1.msra.mxu0 0.0
    %4098 = vmatprep.subr.mxu0 0.0
    %4099 = vmatpush1.msra.mxu0 0.0
    %4100 = vmatprep.subr.mxu0 0.0
    %4101 = vmatpush1.msra.mxu0 0.0
    %4102 = vmatprep.mubr.f32.mxu0 0.0
    %v4103 = vand.u32 %v3554, 4294901760
    %4104 = vmatmul.mubr.f32.gmra.mrb[0].mxu0 %v4103
    %v4105 = vpop.f32.mrb[0].mxu0
    %v4106 = vadd.f32 %v3987, %v4105
    %v4107 = vpop.f32.mrb[0].mxu0
    %4108 = vdwg.mxu0
    %4109 = vmatprep.subr.mxu0 0.0
    %v4110 = vand.u32 %v81, 4294901760
    %4111 = vmatpush1.msra.mxu0 %v4110
    %4112 = vmatprep.subr.mxu0 0.0
    %v4113 = vand.u32 %v82, 4294901760
    %4114 = vmatpush1.msra.mxu0 %v4113
    %4115 = vmatprep.subr.mxu0 0.0
    %v4116 = vand.u32 %v83, 4294901760
    %4117 = vmatpush1.msra.mxu0 %v4116
    %4118 = vmatprep.subr.mxu0 0.0
    %v4119 = vand.u32 %v84, 4294901760
    %4120 = vmatpush1.msra.mxu0 %v4119
    %4121 = vmatprep.subr.mxu0 0.0
    %v4122 = vand.u32 %v85, 4294901760
    %4123 = vmatpush1.msra.mxu0 %v4122
    %4124 = vmatprep.subr.mxu0 0.0
    %v4125 = vand.u32 %v86, 4294901760
    %4126 = vmatpush1.msra.mxu0 %v4125
    %4127 = vmatprep.subr.mxu0 0.0
    %v4128 = vand.u32 %v87, 4294901760
    %4129 = vmatpush1.msra.mxu0 %v4128
    %4130 = vmatprep.subr.mxu0 0.0
    %v4131 = vand.u32 %v88, 4294901760
    %4132 = vmatpush1.msra.mxu0 %v4131
    %4133 = vmatprep.subr.mxu0 0.0
    %v4134 = vand.u32 %v89, 4294901760
    %4135 = vmatpush1.msra.mxu0 %v4134
    %4136 = vmatprep.subr.mxu0 0.0
    %v4137 = vand.u32 %v90, 4294901760
    %4138 = vmatpush1.msra.mxu0 %v4137
    %4139 = vmatprep.subr.mxu0 0.0
    %v4140 = vand.u32 %v91, 4294901760
    %4141 = vmatpush1.msra.mxu0 %v4140
    %4142 = vmatprep.subr.mxu0 0.0
    %v4143 = vand.u32 %v92, 4294901760
    %4144 = vmatpush1.msra.mxu0 %v4143
    %4145 = vmatprep.subr.mxu0 0.0
    %v4146 = vand.u32 %v93, 4294901760
    %4147 = vmatpush1.msra.mxu0 %v4146
    %4148 = vmatprep.subr.mxu0 0.0
    %v4149 = vand.u32 %v94, 4294901760
    %4150 = vmatpush1.msra.mxu0 %v4149
    %4151 = vmatprep.subr.mxu0 0.0
    %v4152 = vand.u32 %v95, 4294901760
    %4153 = vmatpush1.msra.mxu0 %v4152
    %4154 = vmatprep.subr.mxu0 0.0
    %v4155 = vand.u32 %v96, 4294901760
    %4156 = vmatpush1.msra.mxu0 %v4155
    %4157 = vmatprep.subr.mxu0 0.0
    %4158 = vmatpush1.msra.mxu0 0.0
    %4159 = vmatprep.subr.mxu0 0.0
    %4160 = vmatpush1.msra.mxu0 0.0
    %4161 = vmatprep.subr.mxu0 0.0
    %4162 = vmatpush1.msra.mxu0 0.0
    %4163 = vmatprep.subr.mxu0 0.0
    %4164 = vmatpush1.msra.mxu0 0.0
    %4165 = vmatprep.subr.mxu0 0.0
    %4166 = vmatpush1.msra.mxu0 0.0
    %4167 = vmatprep.subr.mxu0 0.0
    %4168 = vmatpush1.msra.mxu0 0.0
    %4169 = vmatprep.subr.mxu0 0.0
    %4170 = vmatpush1.msra.mxu0 0.0
    %4171 = vmatprep.subr.mxu0 0.0
    %4172 = vmatpush1.msra.mxu0 0.0
    %4173 = vmatprep.subr.mxu0 0.0
    %4174 = vmatpush1.msra.mxu0 0.0
    %4175 = vmatprep.subr.mxu0 0.0
    %4176 = vmatpush1.msra.mxu0 0.0
    %4177 = vmatprep.subr.mxu0 0.0
    %4178 = vmatpush1.msra.mxu0 0.0
    %4179 = vmatprep.subr.mxu0 0.0
    %4180 = vmatpush1.msra.mxu0 0.0
    %4181 = vmatprep.subr.mxu0 0.0
    %4182 = vmatpush1.msra.mxu0 0.0
    %4183 = vmatprep.subr.mxu0 0.0
    %4184 = vmatpush1.msra.mxu0 0.0
    %4185 = vmatprep.subr.mxu0 0.0
    %4186 = vmatpush1.msra.mxu0 0.0
    %4187 = vmatprep.subr.mxu0 0.0
    %4188 = vmatpush1.msra.mxu0 0.0
    %4189 = vmatprep.mubr.f32.mxu0 0.0
    %v4190 = vand.u32 %v3554, 4294901760
    %4191 = vmatmul.mubr.f32.gmra.mrb[0].mxu0 %v4190
    %v4192 = vpop.f32.mrb[0].mxu0
    %v4193 = vadd.f32 %v4106, %v4192
    %v4194 = vpop.f32.mrb[0].mxu0
    %4195 = vdwg.mxu0
    %4196 = vmatprep.subr.mxu0 0.0
    %v4197 = vand.u32 %v4193, 4294901760
    %4198 = vmatpush1.xpose.msra.mxu0 %v4197
    %4199 = vmatprep.subr.mxu0 0.0
    %4200 = vmatpush1.xpose.msra.mxu0 0.0
    %4201 = vmatprep.subr.mxu0 0.0
    %4202 = vmatpush1.xpose.msra.mxu0 0.0
    %4203 = vmatprep.subr.mxu0 0.0
    %4204 = vmatpush1.xpose.msra.mxu0 0.0
    %4205 = vmatprep.subr.mxu0 0.0
    %4206 = vmatpush1.xpose.msra.mxu0 0.0
    %4207 = vmatprep.subr.mxu0 0.0
    %4208 = vmatpush1.xpose.msra.mxu0 0.0
    %4209 = vmatprep.subr.mxu0 0.0
    %4210 = vmatpush1.xpose.msra.mxu0 0.0
    %4211 = vmatprep.subr.mxu0 0.0
    %4212 = vmatpush1.xpose.msra.mxu0 0.0
    %4213 = vmatprep.subr.mxu0 0.0
    %4214 = vmatpush1.xpose.msra.mxu0 0.0
    %4215 = vmatprep.subr.mxu0 0.0
    %4216 = vmatpush1.xpose.msra.mxu0 0.0
    %4217 = vmatprep.subr.mxu0 0.0
    %4218 = vmatpush1.xpose.msra.mxu0 0.0
    %4219 = vmatprep.subr.mxu0 0.0
    %4220 = vmatpush1.xpose.msra.mxu0 0.0
    %4221 = vmatprep.subr.mxu0 0.0
    %4222 = vmatpush1.xpose.msra.mxu0 0.0
    %4223 = vmatprep.subr.mxu0 0.0
    %4224 = vmatpush1.xpose.msra.mxu0 0.0
    %4225 = vmatprep.subr.mxu0 0.0
    %4226 = vmatpush1.xpose.msra.mxu0 0.0
    %4227 = vmatprep.subr.mxu0 0.0
    %4228 = vmatpush1.xpose.msra.mxu0 0.0
    %4229 = vmatprep.subr.mxu0 0.0
    %4230 = vmatpush1.xpose.msra.mxu0 0.0
    %4231 = vmatprep.subr.mxu0 0.0
    %4232 = vmatpush1.xpose.msra.mxu0 0.0
    %4233 = vmatprep.subr.mxu0 0.0
    %4234 = vmatpush1.xpose.msra.mxu0 0.0
    %4235 = vmatprep.subr.mxu0 0.0
    %4236 = vmatpush1.xpose.msra.mxu0 0.0
    %4237 = vmatprep.subr.mxu0 0.0
    %4238 = vmatpush1.xpose.msra.mxu0 0.0
    %4239 = vmatprep.subr.mxu0 0.0
    %4240 = vmatpush1.xpose.msra.mxu0 0.0
    %4241 = vmatprep.subr.mxu0 0.0
    %4242 = vmatpush1.xpose.msra.mxu0 0.0
    %4243 = vmatprep.subr.mxu0 0.0
    %4244 = vmatpush1.xpose.msra.mxu0 0.0
    %4245 = vmatprep.subr.mxu0 0.0
    %4246 = vmatpush1.xpose.msra.mxu0 0.0
    %4247 = vmatprep.subr.mxu0 0.0
    %4248 = vmatpush1.xpose.msra.mxu0 0.0
    %4249 = vmatprep.subr.mxu0 0.0
    %4250 = vmatpush1.xpose.msra.mxu0 0.0
    %4251 = vmatprep.subr.mxu0 0.0
    %4252 = vmatpush1.xpose.msra.mxu0 0.0
    %4253 = vmatprep.subr.mxu0 0.0
    %4254 = vmatpush1.xpose.msra.mxu0 0.0
    %4255 = vmatprep.subr.mxu0 0.0
    %4256 = vmatpush1.xpose.msra.mxu0 0.0
    %4257 = vmatprep.subr.mxu0 0.0
    %4258 = vmatpush1.xpose.msra.mxu0 0.0
    %4259 = vmatprep.subr.mxu0 0.0
    %4260 = vmatpush1.xpose.msra.mxu0 0.0
    %4261 = vmatprep.mubr.f32.mxu0 0.0
    %v4262 = vand.u32 %v2146, 4294901760
    %v4263 = vsub.f32 %v2146, %v4262
    %v4264 = vand.u32 %v4263, 4294901760
    %v4265 = vsub.f32 %v4263, %v4264
    %v4266 = vand.u32 %v4265, 4294901760
    %4267 = vmatmul.mubr.f32.gmra.mrb[0].mxu0 %v4266
    %v4268 = vpop.f32.mrb[0].mxu0
    %v4269 = vadd.f32 0.0, %v4268
    %v4270 = vpop.f32.mrb[0].mxu0
    %4271 = vdwg.mxu0
    %4272 = vmatprep.subr.mxu0 0.0
    %v4273 = vand.u32 %v4193, 4294901760
    %v4274 = vsub.f32 %v4193, %v4273
    %v4275 = vand.u32 %v4274, 4294901760
    %v4276 = vsub.f32 %v4274, %v4275
    %v4277 = vand.u32 %v4276, 4294901760
    %4278 = vmatpush1.xpose.msra.mxu0 %v4277
    %4279 = vmatprep.subr.mxu0 0.0
    %4280 = vmatpush1.xpose.msra.mxu0 0.0
    %4281 = vmatprep.subr.mxu0 0.0
    %4282 = vmatpush1.xpose.msra.mxu0 0.0
    %4283 = vmatprep.subr.mxu0 0.0
    %4284 = vmatpush1.xpose.msra.mxu0 0.0
    %4285 = vmatprep.subr.mxu0 0.0
    %4286 = vmatpush1.xpose.msra.mxu0 0.0
    %4287 = vmatprep.subr.mxu0 0.0
    %4288 = vmatpush1.xpose.msra.mxu0 0.0
    %4289 = vmatprep.subr.mxu0 0.0
    %4290 = vmatpush1.xpose.msra.mxu0 0.0
    %4291 = vmatprep.subr.mxu0 0.0
    %4292 = vmatpush1.xpose.msra.mxu0 0.0
    %4293 = vmatprep.subr.mxu0 0.0
    %4294 = vmatpush1.xpose.msra.mxu0 0.0
    %4295 = vmatprep.subr.mxu0 0.0
    %4296 = vmatpush1.xpose.msra.mxu0 0.0
    %4297 = vmatprep.subr.mxu0 0.0
    %4298 = vmatpush1.xpose.msra.mxu0 0.0
    %4299 = vmatprep.subr.mxu0 0.0
    %4300 = vmatpush1.xpose.msra.mxu0 0.0
    %4301 = vmatprep.subr.mxu0 0.0
    %4302 = vmatpush1.xpose.msra.mxu0 0.0
    %4303 = vmatprep.subr.mxu0 0.0
    %4304 = vmatpush1.xpose.msra.mxu0 0.0
    %4305 = vmatprep.subr.mxu0 0.0
    %4306 = vmatpush1.xpose.msra.mxu0 0.0
    %4307 = vmatprep.subr.mxu0 0.0
    %4308 = vmatpush1.xpose.msra.mxu0 0.0
    %4309 = vmatprep.subr.mxu0 0.0
    %4310 = vmatpush1.xpose.msra.mxu0 0.0
    %4311 = vmatprep.subr.mxu0 0.0
    %4312 = vmatpush1.xpose.msra.mxu0 0.0
    %4313 = vmatprep.subr.mxu0 0.0
    %4314 = vmatpush1.xpose.msra.mxu0 0.0
    %4315 = vmatprep.subr.mxu0 0.0
    %4316 = vmatpush1.xpose.msra.mxu0 0.0
    %4317 = vmatprep.subr.mxu0 0.0
    %4318 = vmatpush1.xpose.msra.mxu0 0.0
    %4319 = vmatprep.subr.mxu0 0.0
    %4320 = vmatpush1.xpose.msra.mxu0 0.0
    %4321 = vmatprep.subr.mxu0 0.0
    %4322 = vmatpush1.xpose.msra.mxu0 0.0
    %4323 = vmatprep.subr.mxu0 0.0
    %4324 = vmatpush1.xpose.msra.mxu0 0.0
    %4325 = vmatprep.subr.mxu0 0.0
    %4326 = vmatpush1.xpose.msra.mxu0 0.0
    %4327 = vmatprep.subr.mxu0 0.0
    %4328 = vmatpush1.xpose.msra.mxu0 0.0
    %4329 = vmatprep.subr.mxu0 0.0
    %4330 = vmatpush1.xpose.msra.mxu0 0.0
    %4331 = vmatprep.subr.mxu0 0.0
    %4332 = vmatpush1.xpose.msra.mxu0 0.0
    %4333 = vmatprep.subr.mxu0 0.0
    %4334 = vmatpush1.xpose.msra.mxu0 0.0
    %4335 = vmatprep.subr.mxu0 0.0
    %4336 = vmatpush1.xpose.msra.mxu0 0.0
    %4337 = vmatprep.subr.mxu0 0.0
    %4338 = vmatpush1.xpose.msra.mxu0 0.0
    %4339 = vmatprep.subr.mxu0 0.0
    %4340 = vmatpush1.xpose.msra.mxu0 0.0
    %4341 = vmatprep.mubr.f32.mxu0 0.0
    %v4342 = vand.u32 %v2146, 4294901760
    %4343 = vmatmul.mubr.f32.gmra.mrb[0].mxu0 %v4342
    %v4344 = vpop.f32.mrb[0].mxu0
    %v4345 = vadd.f32 %v4269, %v4344
    %v4346 = vpop.f32.mrb[0].mxu0
    %4347 = vdwg.mxu0
    %4348 = vmatprep.subr.mxu0 0.0
    %v4349 = vand.u32 %v4193, 4294901760
    %v4350 = vsub.f32 %v4193, %v4349
    %4351 = vmatpush1.xpose.msra.mxu0 %v4350
    %4352 = vmatprep.subr.mxu0 0.0
    %4353 = vmatpush1.xpose.msra.mxu0 0.0
    %4354 = vmatprep.subr.mxu0 0.0
    %4355 = vmatpush1.xpose.msra.mxu0 0.0
    %4356 = vmatprep.subr.mxu0 0.0
    %4357 = vmatpush1.xpose.msra.mxu0 0.0
    %4358 = vmatprep.subr.mxu0 0.0
    %4359 = vmatpush1.xpose.msra.mxu0 0.0
    %4360 = vmatprep.subr.mxu0 0.0
    %4361 = vmatpush1.xpose.msra.mxu0 0.0
    %4362 = vmatprep.subr.mxu0 0.0
    %4363 = vmatpush1.xpose.msra.mxu0 0.0
    %4364 = vmatprep.subr.mxu0 0.0
    %4365 = vmatpush1.xpose.msra.mxu0 0.0
    %4366 = vmatprep.subr.mxu0 0.0
    %4367 = vmatpush1.xpose.msra.mxu0 0.0
    %4368 = vmatprep.subr.mxu0 0.0
    %4369 = vmatpush1.xpose.msra.mxu0 0.0
    %4370 = vmatprep.subr.mxu0 0.0
    %4371 = vmatpush1.xpose.msra.mxu0 0.0
    %4372 = vmatprep.subr.mxu0 0.0
    %4373 = vmatpush1.xpose.msra.mxu0 0.0
    %4374 = vmatprep.subr.mxu0 0.0
    %4375 = vmatpush1.xpose.msra.mxu0 0.0
    %4376 = vmatprep.subr.mxu0 0.0
    %4377 = vmatpush1.xpose.msra.mxu0 0.0
    %4378 = vmatprep.subr.mxu0 0.0
    %4379 = vmatpush1.xpose.msra.mxu0 0.0
    %4380 = vmatprep.subr.mxu0 0.0
    %4381 = vmatpush1.xpose.msra.mxu0 0.0
    %4382 = vmatprep.subr.mxu0 0.0
    %4383 = vmatpush1.xpose.msra.mxu0 0.0
    %4384 = vmatprep.subr.mxu0 0.0
    %4385 = vmatpush1.xpose.msra.mxu0 0.0
    %4386 = vmatprep.subr.mxu0 0.0
    %4387 = vmatpush1.xpose.msra.mxu0 0.0
    %4388 = vmatprep.subr.mxu0 0.0
    %4389 = vmatpush1.xpose.msra.mxu0 0.0
    %4390 = vmatprep.subr.mxu0 0.0
    %4391 = vmatpush1.xpose.msra.mxu0 0.0
    %4392 = vmatprep.subr.mxu0 0.0
    %4393 = vmatpush1.xpose.msra.mxu0 0.0
    %4394 = vmatprep.subr.mxu0 0.0
    %4395 = vmatpush1.xpose.msra.mxu0 0.0
    %4396 = vmatprep.subr.mxu0 0.0
    %4397 = vmatpush1.xpose.msra.mxu0 0.0
    %4398 = vmatprep.subr.mxu0 0.0
    %4399 = vmatpush1.xpose.msra.mxu0 0.0
    %4400 = vmatprep.subr.mxu0 0.0
    %4401 = vmatpush1.xpose.msra.mxu0 0.0
    %4402 = vmatprep.subr.mxu0 0.0
    %4403 = vmatpush1.xpose.msra.mxu0 0.0
    %4404 = vmatprep.subr.mxu0 0.0
    %4405 = vmatpush1.xpose.msra.mxu0 0.0
    %4406 = vmatprep.subr.mxu0 0.0
    %4407 = vmatpush1.xpose.msra.mxu0 0.0
    %4408 = vmatprep.subr.mxu0 0.0
    %4409 = vmatpush1.xpose.msra.mxu0 0.0
    %4410 = vmatprep.subr.mxu0 0.0
    %4411 = vmatpush1.xpose.msra.mxu0 0.0
    %4412 = vmatprep.subr.mxu0 0.0
    %4413 = vmatpush1.xpose.msra.mxu0 0.0
    %4414 = vmatprep.mubr.f32.mxu0 0.0
    %v4415 = vand.u32 %v2146, 4294901760
    %v4416 = vsub.f32 %v2146, %v4415
    %4417 = vmatmul.mubr.f32.gmra.mrb[0].mxu0 %v4416
    %v4418 = vpop.f32.mrb[0].mxu0
    %v4419 = vadd.f32 %v4345, %v4418
    %v4420 = vpop.f32.mrb[0].mxu0
    %4421 = vdwg.mxu0
    %4422 = vmatprep.subr.mxu0 0.0
    %v4423 = vand.u32 %v4193, 4294901760
    %4424 = vmatpush1.xpose.msra.mxu0 %v4423
    %4425 = vmatprep.subr.mxu0 0.0
    %4426 = vmatpush1.xpose.msra.mxu0 0.0
    %4427 = vmatprep.subr.mxu0 0.0
    %4428 = vmatpush1.xpose.msra.mxu0 0.0
    %4429 = vmatprep.subr.mxu0 0.0
    %4430 = vmatpush1.xpose.msra.mxu0 0.0
    %4431 = vmatprep.subr.mxu0 0.0
    %4432 = vmatpush1.xpose.msra.mxu0 0.0
    %4433 = vmatprep.subr.mxu0 0.0
    %4434 = vmatpush1.xpose.msra.mxu0 0.0
    %4435 = vmatprep.subr.mxu0 0.0
    %4436 = vmatpush1.xpose.msra.mxu0 0.0
    %4437 = vmatprep.subr.mxu0 0.0
    %4438 = vmatpush1.xpose.msra.mxu0 0.0
    %4439 = vmatprep.subr.mxu0 0.0
    %4440 = vmatpush1.xpose.msra.mxu0 0.0
    %4441 = vmatprep.subr.mxu0 0.0
    %4442 = vmatpush1.xpose.msra.mxu0 0.0
    %4443 = vmatprep.subr.mxu0 0.0
    %4444 = vmatpush1.xpose.msra.mxu0 0.0
    %4445 = vmatprep.subr.mxu0 0.0
    %4446 = vmatpush1.xpose.msra.mxu0 0.0
    %4447 = vmatprep.subr.mxu0 0.0
    %4448 = vmatpush1.xpose.msra.mxu0 0.0
    %4449 = vmatprep.subr.mxu0 0.0
    %4450 = vmatpush1.xpose.msra.mxu0 0.0
    %4451 = vmatprep.subr.mxu0 0.0
    %4452 = vmatpush1.xpose.msra.mxu0 0.0
    %4453 = vmatprep.subr.mxu0 0.0
    %4454 = vmatpush1.xpose.msra.mxu0 0.0
    %4455 = vmatprep.subr.mxu0 0.0
    %4456 = vmatpush1.xpose.msra.mxu0 0.0
    %4457 = vmatprep.subr.mxu0 0.0
    %4458 = vmatpush1.xpose.msra.mxu0 0.0
    %4459 = vmatprep.subr.mxu0 0.0
    %4460 = vmatpush1.xpose.msra.mxu0 0.0
    %4461 = vmatprep.subr.mxu0 0.0
    %4462 = vmatpush1.xpose.msra.mxu0 0.0
    %4463 = vmatprep.subr.mxu0 0.0
    %4464 = vmatpush1.xpose.msra.mxu0 0.0
    %4465 = vmatprep.subr.mxu0 0.0
    %4466 = vmatpush1.xpose.msra.mxu0 0.0
    %4467 = vmatprep.subr.mxu0 0.0
    %4468 = vmatpush1.xpose.msra.mxu0 0.0
    %4469 = vmatprep.subr.mxu0 0.0
    %4470 = vmatpush1.xpose.msra.mxu0 0.0
    %4471 = vmatprep.subr.mxu0 0.0
    %4472 = vmatpush1.xpose.msra.mxu0 0.0
    %4473 = vmatprep.subr.mxu0 0.0
    %4474 = vmatpush1.xpose.msra.mxu0 0.0
    %4475 = vmatprep.subr.mxu0 0.0
    %4476 = vmatpush1.xpose.msra.mxu0 0.0
    %4477 = vmatprep.subr.mxu0 0.0
    %4478 = vmatpush1.xpose.msra.mxu0 0.0
    %4479 = vmatprep.subr.mxu0 0.0
    %4480 = vmatpush1.xpose.msra.mxu0 0.0
    %4481 = vmatprep.subr.mxu0 0.0
    %4482 = vmatpush1.xpose.msra.mxu0 0.0
    %4483 = vmatprep.subr.mxu0 0.0
    %4484 = vmatpush1.xpose.msra.mxu0 0.0
    %4485 = vmatprep.subr.mxu0 0.0
    %4486 = vmatpush1.xpose.msra.mxu0 0.0
    %4487 = vmatprep.mubr.f32.mxu0 0.0
    %v4488 = vand.u32 %v2146, 4294901760
    %v4489 = vsub.f32 %v2146, %v4488
    %v4490 = vand.u32 %v4489, 4294901760
    %4491 = vmatmul.mubr.f32.gmra.mrb[0].mxu0 %v4490
    %v4492 = vpop.f32.mrb[0].mxu0
    %v4493 = vadd.f32 %v4419, %v4492
    %v4494 = vpop.f32.mrb[0].mxu0
    %4495 = vdwg.mxu0
    %4496 = vmatprep.subr.mxu0 0.0
    %v4497 = vand.u32 %v4193, 4294901760
    %v4498 = vsub.f32 %v4193, %v4497
    %v4499 = vand.u32 %v4498, 4294901760
    %4500 = vmatpush1.xpose.msra.mxu0 %v4499
    %4501 = vmatprep.subr.mxu0 0.0
    %4502 = vmatpush1.xpose.msra.mxu0 0.0
    %4503 = vmatprep.subr.mxu0 0.0
    %4504 = vmatpush1.xpose.msra.mxu0 0.0
    %4505 = vmatprep.subr.mxu0 0.0
    %4506 = vmatpush1.xpose.msra.mxu0 0.0
    %4507 = vmatprep.subr.mxu0 0.0
    %4508 = vmatpush1.xpose.msra.mxu0 0.0
    %4509 = vmatprep.subr.mxu0 0.0
    %4510 = vmatpush1.xpose.msra.mxu0 0.0
    %4511 = vmatprep.subr.mxu0 0.0
    %4512 = vmatpush1.xpose.msra.mxu0 0.0
    %4513 = vmatprep.subr.mxu0 0.0
    %4514 = vmatpush1.xpose.msra.mxu0 0.0
    %4515 = vmatprep.subr.mxu0 0.0
    %4516 = vmatpush1.xpose.msra.mxu0 0.0
    %4517 = vmatprep.subr.mxu0 0.0
    %4518 = vmatpush1.xpose.msra.mxu0 0.0
    %4519 = vmatprep.subr.mxu0 0.0
    %4520 = vmatpush1.xpose.msra.mxu0 0.0
    %4521 = vmatprep.subr.mxu0 0.0
    %4522 = vmatpush1.xpose.msra.mxu0 0.0
    %4523 = vmatprep.subr.mxu0 0.0
    %4524 = vmatpush1.xpose.msra.mxu0 0.0
    %4525 = vmatprep.subr.mxu0 0.0
    %4526 = vmatpush1.xpose.msra.mxu0 0.0
    %4527 = vmatprep.subr.mxu0 0.0
    %4528 = vmatpush1.xpose.msra.mxu0 0.0
    %4529 = vmatprep.subr.mxu0 0.0
    %4530 = vmatpush1.xpose.msra.mxu0 0.0
    %4531 = vmatprep.subr.mxu0 0.0
    %4532 = vmatpush1.xpose.msra.mxu0 0.0
    %4533 = vmatprep.subr.mxu0 0.0
    %4534 = vmatpush1.xpose.msra.mxu0 0.0
    %4535 = vmatprep.subr.mxu0 0.0
    %4536 = vmatpush1.xpose.msra.mxu0 0.0
    %4537 = vmatprep.subr.mxu0 0.0
    %4538 = vmatpush1.xpose.msra.mxu0 0.0
    %4539 = vmatprep.subr.mxu0 0.0
    %4540 = vmatpush1.xpose.msra.mxu0 0.0
    %4541 = vmatprep.subr.mxu0 0.0
    %4542 = vmatpush1.xpose.msra.mxu0 0.0
    %4543 = vmatprep.subr.mxu0 0.0
    %4544 = vmatpush1.xpose.msra.mxu0 0.0
    %4545 = vmatprep.subr.mxu0 0.0
    %4546 = vmatpush1.xpose.msra.mxu0 0.0
    %4547 = vmatprep.subr.mxu0 0.0
    %4548 = vmatpush1.xpose.msra.mxu0 0.0
    %4549 = vmatprep.subr.mxu0 0.0
    %4550 = vmatpush1.xpose.msra.mxu0 0.0
    %4551 = vmatprep.subr.mxu0 0.0
    %4552 = vmatpush1.xpose.msra.mxu0 0.0
    %4553 = vmatprep.subr.mxu0 0.0
    %4554 = vmatpush1.xpose.msra.mxu0 0.0
    %4555 = vmatprep.subr.mxu0 0.0
    %4556 = vmatpush1.xpose.msra.mxu0 0.0
    %4557 = vmatprep.subr.mxu0 0.0
    %4558 = vmatpush1.xpose.msra.mxu0 0.0
    %4559 = vmatprep.subr.mxu0 0.0
    %4560 = vmatpush1.xpose.msra.mxu0 0.0
    %4561 = vmatprep.subr.mxu0 0.0
    %4562 = vmatpush1.xpose.msra.mxu0 0.0
    %4563 = vmatprep.mubr.f32.mxu0 0.0
    %v4564 = vand.u32 %v2146, 4294901760
    %4565 = vmatmul.mubr.f32.gmra.mrb[0].mxu0 %v4564
    %v4566 = vpop.f32.mrb[0].mxu0
    %v4567 = vadd.f32 %v4493, %v4566
    %v4568 = vpop.f32.mrb[0].mxu0
    %4569 = vdwg.mxu0
    %4570 = vmatprep.subr.mxu0 0.0
    %v4571 = vand.u32 %v4193, 4294901760
    %4572 = vmatpush1.xpose.msra.mxu0 %v4571
    %4573 = vmatprep.subr.mxu0 0.0
    %4574 = vmatpush1.xpose.msra.mxu0 0.0
    %4575 = vmatprep.subr.mxu0 0.0
    %4576 = vmatpush1.xpose.msra.mxu0 0.0
    %4577 = vmatprep.subr.mxu0 0.0
    %4578 = vmatpush1.xpose.msra.mxu0 0.0
    %4579 = vmatprep.subr.mxu0 0.0
    %4580 = vmatpush1.xpose.msra.mxu0 0.0
    %4581 = vmatprep.subr.mxu0 0.0
    %4582 = vmatpush1.xpose.msra.mxu0 0.0
    %4583 = vmatprep.subr.mxu0 0.0
    %4584 = vmatpush1.xpose.msra.mxu0 0.0
    %4585 = vmatprep.subr.mxu0 0.0
    %4586 = vmatpush1.xpose.msra.mxu0 0.0
    %4587 = vmatprep.subr.mxu0 0.0
    %4588 = vmatpush1.xpose.msra.mxu0 0.0
    %4589 = vmatprep.subr.mxu0 0.0
    %4590 = vmatpush1.xpose.msra.mxu0 0.0
    %4591 = vmatprep.subr.mxu0 0.0
    %4592 = vmatpush1.xpose.msra.mxu0 0.0
    %4593 = vmatprep.subr.mxu0 0.0
    %4594 = vmatpush1.xpose.msra.mxu0 0.0
    %4595 = vmatprep.subr.mxu0 0.0
    %4596 = vmatpush1.xpose.msra.mxu0 0.0
    %4597 = vmatprep.subr.mxu0 0.0
    %4598 = vmatpush1.xpose.msra.mxu0 0.0
    %4599 = vmatprep.subr.mxu0 0.0
    %4600 = vmatpush1.xpose.msra.mxu0 0.0
    %4601 = vmatprep.subr.mxu0 0.0
    %4602 = vmatpush1.xpose.msra.mxu0 0.0
    %4603 = vmatprep.subr.mxu0 0.0
    %4604 = vmatpush1.xpose.msra.mxu0 0.0
    %4605 = vmatprep.subr.mxu0 0.0
    %4606 = vmatpush1.xpose.msra.mxu0 0.0
    %4607 = vmatprep.subr.mxu0 0.0
    %4608 = vmatpush1.xpose.msra.mxu0 0.0
    %4609 = vmatprep.subr.mxu0 0.0
    %4610 = vmatpush1.xpose.msra.mxu0 0.0
    %4611 = vmatprep.subr.mxu0 0.0
    %4612 = vmatpush1.xpose.msra.mxu0 0.0
    %4613 = vmatprep.subr.mxu0 0.0
    %4614 = vmatpush1.xpose.msra.mxu0 0.0
    %4615 = vmatprep.subr.mxu0 0.0
    %4616 = vmatpush1.xpose.msra.mxu0 0.0
    %4617 = vmatprep.subr.mxu0 0.0
    %4618 = vmatpush1.xpose.msra.mxu0 0.0
    %4619 = vmatprep.subr.mxu0 0.0
    %4620 = vmatpush1.xpose.msra.mxu0 0.0
    %4621 = vmatprep.subr.mxu0 0.0
    %4622 = vmatpush1.xpose.msra.mxu0 0.0
    %4623 = vmatprep.subr.mxu0 0.0
    %4624 = vmatpush1.xpose.msra.mxu0 0.0
    %4625 = vmatprep.subr.mxu0 0.0
    %4626 = vmatpush1.xpose.msra.mxu0 0.0
    %4627 = vmatprep.subr.mxu0 0.0
    %4628 = vmatpush1.xpose.msra.mxu0 0.0
    %4629 = vmatprep.subr.mxu0 0.0
    %4630 = vmatpush1.xpose.msra.mxu0 0.0
    %4631 = vmatprep.subr.mxu0 0.0
    %4632 = vmatpush1.xpose.msra.mxu0 0.0
    %4633 = vmatprep.subr.mxu0 0.0
    %4634 = vmatpush1.xpose.msra.mxu0 0.0
    %4635 = vmatprep.mubr.f32.mxu0 0.0
    %v4636 = vand.u32 %v2146, 4294901760
    %4637 = vmatmul.mubr.f32.gmra.mrb[0].mxu0 %v4636
    %v4638 = vpop.f32.mrb[0].mxu0
    %v4639 = vadd.f32 %v4567, %v4638
    %v4640 = vpop.f32.mrb[0].mxu0
    %4641 = vdwg.mxu0
    %v4642 = vmul.f32 %v2146, %v2146
    %4643 = vmatprep.subr.mxu0 0.0
    %4644 = vmatpush1.msra.mxu0 1.0
    %4645 = vmatprep.subr.mxu0 0.0
    %4646 = vmatpush1.msra.mxu0 1.0
    %4647 = vmatprep.subr.mxu0 0.0
    %4648 = vmatpush1.msra.mxu0 1.0
    %4649 = vmatprep.subr.mxu0 0.0
    %4650 = vmatpush1.msra.mxu0 1.0
    %4651 = vmatprep.subr.mxu0 0.0
    %4652 = vmatpush1.msra.mxu0 1.0
    %4653 = vmatprep.subr.mxu0 0.0
    %4654 = vmatpush1.msra.mxu0 1.0
    %4655 = vmatprep.subr.mxu0 0.0
    %4656 = vmatpush1.msra.mxu0 1.0
    %4657 = vmatprep.subr.mxu0 0.0
    %4658 = vmatpush1.msra.mxu0 1.0
    %4659 = vmatprep.subr.mxu0 0.0
    %4660 = vmatpush1.msra.mxu0 1.0
    %4661 = vmatprep.subr.mxu0 0.0
    %4662 = vmatpush1.msra.mxu0 1.0
    %4663 = vmatprep.subr.mxu0 0.0
    %4664 = vmatpush1.msra.mxu0 1.0
    %4665 = vmatprep.subr.mxu0 0.0
    %4666 = vmatpush1.msra.mxu0 1.0
    %4667 = vmatprep.subr.mxu0 0.0
    %4668 = vmatpush1.msra.mxu0 1.0
    %4669 = vmatprep.subr.mxu0 0.0
    %4670 = vmatpush1.msra.mxu0 1.0
    %4671 = vmatprep.subr.mxu0 0.0
    %4672 = vmatpush1.msra.mxu0 1.0
    %4673 = vmatprep.subr.mxu0 0.0
    %4674 = vmatpush1.msra.mxu0 1.0
    %4675 = vmatprep.subr.mxu0 0.0
    %4676 = vmatpush1.msra.mxu0 0.0
    %4677 = vmatprep.subr.mxu0 0.0
    %4678 = vmatpush1.msra.mxu0 0.0
    %4679 = vmatprep.subr.mxu0 0.0
    %4680 = vmatpush1.msra.mxu0 0.0
    %4681 = vmatprep.subr.mxu0 0.0
    %4682 = vmatpush1.msra.mxu0 0.0
    %4683 = vmatprep.subr.mxu0 0.0
    %4684 = vmatpush1.msra.mxu0 0.0
    %4685 = vmatprep.subr.mxu0 0.0
    %4686 = vmatpush1.msra.mxu0 0.0
    %4687 = vmatprep.subr.mxu0 0.0
    %4688 = vmatpush1.msra.mxu0 0.0
    %4689 = vmatprep.subr.mxu0 0.0
    %4690 = vmatpush1.msra.mxu0 0.0
    %4691 = vmatprep.subr.mxu0 0.0
    %4692 = vmatpush1.msra.mxu0 0.0
    %4693 = vmatprep.subr.mxu0 0.0
    %4694 = vmatpush1.msra.mxu0 0.0
    %4695 = vmatprep.subr.mxu0 0.0
    %4696 = vmatpush1.msra.mxu0 0.0
    %4697 = vmatprep.subr.mxu0 0.0
    %4698 = vmatpush1.msra.mxu0 0.0
    %4699 = vmatprep.subr.mxu0 0.0
    %4700 = vmatpush1.msra.mxu0 0.0
    %4701 = vmatprep.subr.mxu0 0.0
    %4702 = vmatpush1.msra.mxu0 0.0
    %4703 = vmatprep.subr.mxu0 0.0
    %4704 = vmatpush1.msra.mxu0 0.0
    %4705 = vmatprep.subr.mxu0 0.0
    %4706 = vmatpush1.msra.mxu0 0.0
    %4707 = vmatprep.mubr.f32.mxu0 0.0
    %v4708 = vand.u32 %v4642, 4294901760
    %v4709 = vsub.f32 %v4642, %v4708
    %v4710 = vand.u32 %v4709, 4294901760
    %v4711 = vsub.f32 %v4709, %v4710
    %v4712 = vand.u32 %v4711, 4294901760
    %4713 = vmatmul.mubr.f32.gmra.mrb[0].mxu0 %v4712
    %v4714 = vpop.f32.mrb[0].mxu0
    %v4715 = vadd.f32 0.0, %v4714
    %v4716 = vpop.f32.mrb[0].mxu0
    %4717 = vdwg.mxu0
    %4718 = vmatprep.subr.mxu0 0.0
    %4719 = vmatpush1.msra.mxu0 0.0
    %4720 = vmatprep.subr.mxu0 0.0
    %4721 = vmatpush1.msra.mxu0 0.0
    %4722 = vmatprep.subr.mxu0 0.0
    %4723 = vmatpush1.msra.mxu0 0.0
    %4724 = vmatprep.subr.mxu0 0.0
    %4725 = vmatpush1.msra.mxu0 0.0
    %4726 = vmatprep.subr.mxu0 0.0
    %4727 = vmatpush1.msra.mxu0 0.0
    %4728 = vmatprep.subr.mxu0 0.0
    %4729 = vmatpush1.msra.mxu0 0.0
    %4730 = vmatprep.subr.mxu0 0.0
    %4731 = vmatpush1.msra.mxu0 0.0
    %4732 = vmatprep.subr.mxu0 0.0
    %4733 = vmatpush1.msra.mxu0 0.0
    %4734 = vmatprep.subr.mxu0 0.0
    %4735 = vmatpush1.msra.mxu0 0.0
    %4736 = vmatprep.subr.mxu0 0.0
    %4737 = vmatpush1.msra.mxu0 0.0
    %4738 = vmatprep.subr.mxu0 0.0
    %4739 = vmatpush1.msra.mxu0 0.0
    %4740 = vmatprep.subr.mxu0 0.0
    %4741 = vmatpush1.msra.mxu0 0.0
    %4742 = vmatprep.subr.mxu0 0.0
    %4743 = vmatpush1.msra.mxu0 0.0
    %4744 = vmatprep.subr.mxu0 0.0
    %4745 = vmatpush1.msra.mxu0 0.0
    %4746 = vmatprep.subr.mxu0 0.0
    %4747 = vmatpush1.msra.mxu0 0.0
    %4748 = vmatprep.subr.mxu0 0.0
    %4749 = vmatpush1.msra.mxu0 0.0
    %4750 = vmatprep.subr.mxu0 0.0
    %4751 = vmatpush1.msra.mxu0 0.0
    %4752 = vmatprep.subr.mxu0 0.0
    %4753 = vmatpush1.msra.mxu0 0.0
    %4754 = vmatprep.subr.mxu0 0.0
    %4755 = vmatpush1.msra.mxu0 0.0
    %4756 = vmatprep.subr.mxu0 0.0
    %4757 = vmatpush1.msra.mxu0 0.0
    %4758 = vmatprep.subr.mxu0 0.0
    %4759 = vmatpush1.msra.mxu0 0.0
    %4760 = vmatprep.subr.mxu0 0.0
    %4761 = vmatpush1.msra.mxu0 0.0
    %4762 = vmatprep.subr.mxu0 0.0
    %4763 = vmatpush1.msra.mxu0 0.0
    %4764 = vmatprep.subr.mxu0 0.0
    %4765 = vmatpush1.msra.mxu0 0.0
    %4766 = vmatprep.subr.mxu0 0.0
    %4767 = vmatpush1.msra.mxu0 0.0
    %4768 = vmatprep.subr.mxu0 0.0
    %4769 = vmatpush1.msra.mxu0 0.0
    %4770 = vmatprep.subr.mxu0 0.0
    %4771 = vmatpush1.msra.mxu0 0.0
    %4772 = vmatprep.subr.mxu0 0.0
    %4773 = vmatpush1.msra.mxu0 0.0
    %4774 = vmatprep.subr.mxu0 0.0
    %4775 = vmatpush1.msra.mxu0 0.0
    %4776 = vmatprep.subr.mxu0 0.0
    %4777 = vmatpush1.msra.mxu0 0.0
    %4778 = vmatprep.subr.mxu0 0.0
    %4779 = vmatpush1.msra.mxu0 0.0
    %4780 = vmatprep.subr.mxu0 0.0
    %4781 = vmatpush1.msra.mxu0 0.0
    %4782 = vmatprep.mubr.f32.mxu0 0.0
    %v4783 = vand.u32 %v4642, 4294901760
    %4784 = vmatmul.mubr.f32.gmra.mrb[0].mxu0 %v4783
    %v4785 = vpop.f32.mrb[0].mxu0
    %v4786 = vadd.f32 %v4715, %v4785
    %v4787 = vpop.f32.mrb[0].mxu0
    %4788 = vdwg.mxu0
    %4789 = vmatprep.subr.mxu0 0.0
    %4790 = vmatpush1.msra.mxu0 0.0
    %4791 = vmatprep.subr.mxu0 0.0
    %4792 = vmatpush1.msra.mxu0 0.0
    %4793 = vmatprep.subr.mxu0 0.0
    %4794 = vmatpush1.msra.mxu0 0.0
    %4795 = vmatprep.subr.mxu0 0.0
    %4796 = vmatpush1.msra.mxu0 0.0
    %4797 = vmatprep.subr.mxu0 0.0
    %4798 = vmatpush1.msra.mxu0 0.0
    %4799 = vmatprep.subr.mxu0 0.0
    %4800 = vmatpush1.msra.mxu0 0.0
    %4801 = vmatprep.subr.mxu0 0.0
    %4802 = vmatpush1.msra.mxu0 0.0
    %4803 = vmatprep.subr.mxu0 0.0
    %4804 = vmatpush1.msra.mxu0 0.0
    %4805 = vmatprep.subr.mxu0 0.0
    %4806 = vmatpush1.msra.mxu0 0.0
    %4807 = vmatprep.subr.mxu0 0.0
    %4808 = vmatpush1.msra.mxu0 0.0
    %4809 = vmatprep.subr.mxu0 0.0
    %4810 = vmatpush1.msra.mxu0 0.0
    %4811 = vmatprep.subr.mxu0 0.0
    %4812 = vmatpush1.msra.mxu0 0.0
    %4813 = vmatprep.subr.mxu0 0.0
    %4814 = vmatpush1.msra.mxu0 0.0
    %4815 = vmatprep.subr.mxu0 0.0
    %4816 = vmatpush1.msra.mxu0 0.0
    %4817 = vmatprep.subr.mxu0 0.0
    %4818 = vmatpush1.msra.mxu0 0.0
    %4819 = vmatprep.subr.mxu0 0.0
    %4820 = vmatpush1.msra.mxu0 0.0
    %4821 = vmatprep.subr.mxu0 0.0
    %4822 = vmatpush1.msra.mxu0 0.0
    %4823 = vmatprep.subr.mxu0 0.0
    %4824 = vmatpush1.msra.mxu0 0.0
    %4825 = vmatprep.subr.mxu0 0.0
    %4826 = vmatpush1.msra.mxu0 0.0
    %4827 = vmatprep.subr.mxu0 0.0
    %4828 = vmatpush1.msra.mxu0 0.0
    %4829 = vmatprep.subr.mxu0 0.0
    %4830 = vmatpush1.msra.mxu0 0.0
    %4831 = vmatprep.subr.mxu0 0.0
    %4832 = vmatpush1.msra.mxu0 0.0
    %4833 = vmatprep.subr.mxu0 0.0
    %4834 = vmatpush1.msra.mxu0 0.0
    %4835 = vmatprep.subr.mxu0 0.0
    %4836 = vmatpush1.msra.mxu0 0.0
    %4837 = vmatprep.subr.mxu0 0.0
    %4838 = vmatpush1.msra.mxu0 0.0
    %4839 = vmatprep.subr.mxu0 0.0
    %4840 = vmatpush1.msra.mxu0 0.0
    %4841 = vmatprep.subr.mxu0 0.0
    %4842 = vmatpush1.msra.mxu0 0.0
    %4843 = vmatprep.subr.mxu0 0.0
    %4844 = vmatpush1.msra.mxu0 0.0
    %4845 = vmatprep.subr.mxu0 0.0
    %4846 = vmatpush1.msra.mxu0 0.0
    %4847 = vmatprep.subr.mxu0 0.0
    %4848 = vmatpush1.msra.mxu0 0.0
    %4849 = vmatprep.subr.mxu0 0.0
    %4850 = vmatpush1.msra.mxu0 0.0
    %4851 = vmatprep.subr.mxu0 0.0
    %4852 = vmatpush1.msra.mxu0 0.0
    %4853 = vmatprep.mubr.f32.mxu0 0.0
    %v4854 = vand.u32 %v4642, 4294901760
    %v4855 = vsub.f32 %v4642, %v4854
    %4856 = vmatmul.mubr.f32.gmra.mrb[0].mxu0 %v4855
    %v4857 = vpop.f32.mrb[0].mxu0
    %v4858 = vadd.f32 %v4786, %v4857
    %v4859 = vpop.f32.mrb[0].mxu0
    %4860 = vdwg.mxu0
    %4861 = vmatprep.subr.mxu0 0.0
    %4862 = vmatpush1.msra.mxu0 1.0
    %4863 = vmatprep.subr.mxu0 0.0
    %4864 = vmatpush1.msra.mxu0 1.0
    %4865 = vmatprep.subr.mxu0 0.0
    %4866 = vmatpush1.msra.mxu0 1.0
    %4867 = vmatprep.subr.mxu0 0.0
    %4868 = vmatpush1.msra.mxu0 1.0
    %4869 = vmatprep.subr.mxu0 0.0
    %4870 = vmatpush1.msra.mxu0 1.0
    %4871 = vmatprep.subr.mxu0 0.0
    %4872 = vmatpush1.msra.mxu0 1.0
    %4873 = vmatprep.subr.mxu0 0.0
    %4874 = vmatpush1.msra.mxu0 1.0
    %4875 = vmatprep.subr.mxu0 0.0
    %4876 = vmatpush1.msra.mxu0 1.0
    %4877 = vmatprep.subr.mxu0 0.0
    %4878 = vmatpush1.msra.mxu0 1.0
    %4879 = vmatprep.subr.mxu0 0.0
    %4880 = vmatpush1.msra.mxu0 1.0
    %4881 = vmatprep.subr.mxu0 0.0
    %4882 = vmatpush1.msra.mxu0 1.0
    %4883 = vmatprep.subr.mxu0 0.0
    %4884 = vmatpush1.msra.mxu0 1.0
    %4885 = vmatprep.subr.mxu0 0.0
    %4886 = vmatpush1.msra.mxu0 1.0
    %4887 = vmatprep.subr.mxu0 0.0
    %4888 = vmatpush1.msra.mxu0 1.0
    %4889 = vmatprep.subr.mxu0 0.0
    %4890 = vmatpush1.msra.mxu0 1.0
    %4891 = vmatprep.subr.mxu0 0.0
    %4892 = vmatpush1.msra.mxu0 1.0
    %4893 = vmatprep.subr.mxu0 0.0
    %4894 = vmatpush1.msra.mxu0 0.0
    %4895 = vmatprep.subr.mxu0 0.0
    %4896 = vmatpush1.msra.mxu0 0.0
    %4897 = vmatprep.subr.mxu0 0.0
    %4898 = vmatpush1.msra.mxu0 0.0
    %4899 = vmatprep.subr.mxu0 0.0
    %4900 = vmatpush1.msra.mxu0 0.0
    %4901 = vmatprep.subr.mxu0 0.0
    %4902 = vmatpush1.msra.mxu0 0.0
    %4903 = vmatprep.subr.mxu0 0.0
    %4904 = vmatpush1.msra.mxu0 0.0
    %4905 = vmatprep.subr.mxu0 0.0
    %4906 = vmatpush1.msra.mxu0 0.0
    %4907 = vmatprep.subr.mxu0 0.0
    %4908 = vmatpush1.msra.mxu0 0.0
    %4909 = vmatprep.subr.mxu0 0.0
    %4910 = vmatpush1.msra.mxu0 0.0
    %4911 = vmatprep.subr.mxu0 0.0
    %4912 = vmatpush1.msra.mxu0 0.0
    %4913 = vmatprep.subr.mxu0 0.0
    %4914 = vmatpush1.msra.mxu0 0.0
    %4915 = vmatprep.subr.mxu0 0.0
    %4916 = vmatpush1.msra.mxu0 0.0
    %4917 = vmatprep.subr.mxu0 0.0
    %4918 = vmatpush1.msra.mxu0 0.0
    %4919 = vmatprep.subr.mxu0 0.0
    %4920 = vmatpush1.msra.mxu0 0.0
    %4921 = vmatprep.subr.mxu0 0.0
    %4922 = vmatpush1.msra.mxu0 0.0
    %4923 = vmatprep.subr.mxu0 0.0
    %4924 = vmatpush1.msra.mxu0 0.0
    %4925 = vmatprep.mubr.f32.mxu0 0.0
    %v4926 = vand.u32 %v4642, 4294901760
    %v4927 = vsub.f32 %v4642, %v4926
    %v4928 = vand.u32 %v4927, 4294901760
    %4929 = vmatmul.mubr.f32.gmra.mrb[0].mxu0 %v4928
    %v4930 = vpop.f32.mrb[0].mxu0
    %v4931 = vadd.f32 %v4858, %v4930
    %v4932 = vpop.f32.mrb[0].mxu0
    %4933 = vdwg.mxu0
    %4934 = vmatprep.subr.mxu0 0.0
    %4935 = vmatpush1.msra.mxu0 0.0
    %4936 = vmatprep.subr.mxu0 0.0
    %4937 = vmatpush1.msra.mxu0 0.0
    %4938 = vmatprep.subr.mxu0 0.0
    %4939 = vmatpush1.msra.mxu0 0.0
    %4940 = vmatprep.subr.mxu0 0.0
    %4941 = vmatpush1.msra.mxu0 0.0
    %4942 = vmatprep.subr.mxu0 0.0
    %4943 = vmatpush1.msra.mxu0 0.0
    %4944 = vmatprep.subr.mxu0 0.0
    %4945 = vmatpush1.msra.mxu0 0.0
    %4946 = vmatprep.subr.mxu0 0.0
    %4947 = vmatpush1.msra.mxu0 0.0
    %4948 = vmatprep.subr.mxu0 0.0
    %4949 = vmatpush1.msra.mxu0 0.0
    %4950 = vmatprep.subr.mxu0 0.0
    %4951 = vmatpush1.msra.mxu0 0.0
    %4952 = vmatprep.subr.mxu0 0.0
    %4953 = vmatpush1.msra.mxu0 0.0
    %4954 = vmatprep.subr.mxu0 0.0
    %4955 = vmatpush1.msra.mxu0 0.0
    %4956 = vmatprep.subr.mxu0 0.0
    %4957 = vmatpush1.msra.mxu0 0.0
    %4958 = vmatprep.subr.mxu0 0.0
    %4959 = vmatpush1.msra.mxu0 0.0
    %4960 = vmatprep.subr.mxu0 0.0
    %4961 = vmatpush1.msra.mxu0 0.0
    %4962 = vmatprep.subr.mxu0 0.0
    %4963 = vmatpush1.msra.mxu0 0.0
    %4964 = vmatprep.subr.mxu0 0.0
    %4965 = vmatpush1.msra.mxu0 0.0
    %4966 = vmatprep.subr.mxu0 0.0
    %4967 = vmatpush1.msra.mxu0 0.0
    %4968 = vmatprep.subr.mxu0 0.0
    %4969 = vmatpush1.msra.mxu0 0.0
    %4970 = vmatprep.subr.mxu0 0.0
    %4971 = vmatpush1.msra.mxu0 0.0
    %4972 = vmatprep.subr.mxu0 0.0
    %4973 = vmatpush1.msra.mxu0 0.0
    %4974 = vmatprep.subr.mxu0 0.0
    %4975 = vmatpush1.msra.mxu0 0.0
    %4976 = vmatprep.subr.mxu0 0.0
    %4977 = vmatpush1.msra.mxu0 0.0
    %4978 = vmatprep.subr.mxu0 0.0
    %4979 = vmatpush1.msra.mxu0 0.0
    %4980 = vmatprep.subr.mxu0 0.0
    %4981 = vmatpush1.msra.mxu0 0.0
    %4982 = vmatprep.subr.mxu0 0.0
    %4983 = vmatpush1.msra.mxu0 0.0
    %4984 = vmatprep.subr.mxu0 0.0
    %4985 = vmatpush1.msra.mxu0 0.0
    %4986 = vmatprep.subr.mxu0 0.0
    %4987 = vmatpush1.msra.mxu0 0.0
    %4988 = vmatprep.subr.mxu0 0.0
    %4989 = vmatpush1.msra.mxu0 0.0
    %4990 = vmatprep.subr.mxu0 0.0
    %4991 = vmatpush1.msra.mxu0 0.0
    %4992 = vmatprep.subr.mxu0 0.0
    %4993 = vmatpush1.msra.mxu0 0.0
    %4994 = vmatprep.subr.mxu0 0.0
    %4995 = vmatpush1.msra.mxu0 0.0
    %4996 = vmatprep.subr.mxu0 0.0
    %4997 = vmatpush1.msra.mxu0 0.0
    %4998 = vmatprep.mubr.f32.mxu0 0.0
    %v4999 = vand.u32 %v4642, 4294901760
    %5000 = vmatmul.mubr.f32.gmra.mrb[0].mxu0 %v4999
    %v5001 = vpop.f32.mrb[0].mxu0
    %v5002 = vadd.f32 %v4931, %v5001
    %v5003 = vpop.f32.mrb[0].mxu0
    %5004 = vdwg.mxu0
    %5005 = vmatprep.subr.mxu0 0.0
    %5006 = vmatpush1.msra.mxu0 1.0
    %5007 = vmatprep.subr.mxu0 0.0
    %5008 = vmatpush1.msra.mxu0 1.0
    %5009 = vmatprep.subr.mxu0 0.0
    %5010 = vmatpush1.msra.mxu0 1.0
    %5011 = vmatprep.subr.mxu0 0.0
    %5012 = vmatpush1.msra.mxu0 1.0
    %5013 = vmatprep.subr.mxu0 0.0
    %5014 = vmatpush1.msra.mxu0 1.0
    %5015 = vmatprep.subr.mxu0 0.0
    %5016 = vmatpush1.msra.mxu0 1.0
    %5017 = vmatprep.subr.mxu0 0.0
    %5018 = vmatpush1.msra.mxu0 1.0
    %5019 = vmatprep.subr.mxu0 0.0
    %5020 = vmatpush1.msra.mxu0 1.0
    %5021 = vmatprep.subr.mxu0 0.0
    %5022 = vmatpush1.msra.mxu0 1.0
    %5023 = vmatprep.subr.mxu0 0.0
    %5024 = vmatpush1.msra.mxu0 1.0
    %5025 = vmatprep.subr.mxu0 0.0
    %5026 = vmatpush1.msra.mxu0 1.0
    %5027 = vmatprep.subr.mxu0 0.0
    %5028 = vmatpush1.msra.mxu0 1.0
    %5029 = vmatprep.subr.mxu0 0.0
    %5030 = vmatpush1.msra.mxu0 1.0
    %5031 = vmatprep.subr.mxu0 0.0
    %5032 = vmatpush1.msra.mxu0 1.0
    %5033 = vmatprep.subr.mxu0 0.0
    %5034 = vmatpush1.msra.mxu0 1.0
    %5035 = vmatprep.subr.mxu0 0.0
    %5036 = vmatpush1.msra.mxu0 1.0
    %5037 = vmatprep.subr.mxu0 0.0
    %5038 = vmatpush1.msra.mxu0 0.0
    %5039 = vmatprep.subr.mxu0 0.0
    %5040 = vmatpush1.msra.mxu0 0.0
    %5041 = vmatprep.subr.mxu0 0.0
    %5042 = vmatpush1.msra.mxu0 0.0
    %5043 = vmatprep.subr.mxu0 0.0
    %5044 = vmatpush1.msra.mxu0 0.0
    %5045 = vmatprep.subr.mxu0 0.0
    %5046 = vmatpush1.msra.mxu0 0.0
    %5047 = vmatprep.subr.mxu0 0.0
    %5048 = vmatpush1.msra.mxu0 0.0
    %5049 = vmatprep.subr.mxu0 0.0
    %5050 = vmatpush1.msra.mxu0 0.0
    %5051 = vmatprep.subr.mxu0 0.0
    %5052 = vmatpush1.msra.mxu0 0.0
    %5053 = vmatprep.subr.mxu0 0.0
    %5054 = vmatpush1.msra.mxu0 0.0
    %5055 = vmatprep.subr.mxu0 0.0
    %5056 = vmatpush1.msra.mxu0 0.0
    %5057 = vmatprep.subr.mxu0 0.0
    %5058 = vmatpush1.msra.mxu0 0.0
    %5059 = vmatprep.subr.mxu0 0.0
    %5060 = vmatpush1.msra.mxu0 0.0
    %5061 = vmatprep.subr.mxu0 0.0
    %5062 = vmatpush1.msra.mxu0 0.0
    %5063 = vmatprep.subr.mxu0 0.0
    %5064 = vmatpush1.msra.mxu0 0.0
    %5065 = vmatprep.subr.mxu0 0.0
    %5066 = vmatpush1.msra.mxu0 0.0
    %5067 = vmatprep.subr.mxu0 0.0
    %5068 = vmatpush1.msra.mxu0 0.0
    %5069 = vmatprep.mubr.f32.mxu0 0.0
    %v5070 = vand.u32 %v4642, 4294901760
    %5071 = vmatmul.mubr.f32.gmra.mrb[0].mxu0 %v5070
    %v5072 = vpop.f32.mrb[0].mxu0
    %v5073 = vadd.f32 %v5002, %v5072
    %v5074 = vpop.f32.mrb[0].mxu0
    %5075 = vdwg.mxu0
    %v5076 = vmul.f32 %v4193, %v4193
    %5077 = vmatprep.subr.mxu0 0.0
    %v5078 = vand.u32 %v5076, 4294901760
    %5079 = vmatpush1.xpose.msra.mxu0 %v5078
    %5080 = vmatprep.subr.mxu0 0.0
    %5081 = vmatpush1.xpose.msra.mxu0 0.0
    %5082 = vmatprep.subr.mxu0 0.0
    %5083 = vmatpush1.xpose.msra.mxu0 0.0
    %5084 = vmatprep.subr.mxu0 0.0
    %5085 = vmatpush1.xpose.msra.mxu0 0.0
    %5086 = vmatprep.subr.mxu0 0.0
    %5087 = vmatpush1.xpose.msra.mxu0 0.0
    %5088 = vmatprep.subr.mxu0 0.0
    %5089 = vmatpush1.xpose.msra.mxu0 0.0
    %5090 = vmatprep.subr.mxu0 0.0
    %5091 = vmatpush1.xpose.msra.mxu0 0.0
    %5092 = vmatprep.subr.mxu0 0.0
    %5093 = vmatpush1.xpose.msra.mxu0 0.0
    %5094 = vmatprep.subr.mxu0 0.0
    %5095 = vmatpush1.xpose.msra.mxu0 0.0
    %5096 = vmatprep.subr.mxu0 0.0
    %5097 = vmatpush1.xpose.msra.mxu0 0.0
    %5098 = vmatprep.subr.mxu0 0.0
    %5099 = vmatpush1.xpose.msra.mxu0 0.0
    %5100 = vmatprep.subr.mxu0 0.0
    %5101 = vmatpush1.xpose.msra.mxu0 0.0
    %5102 = vmatprep.subr.mxu0 0.0
    %5103 = vmatpush1.xpose.msra.mxu0 0.0
    %5104 = vmatprep.subr.mxu0 0.0
    %5105 = vmatpush1.xpose.msra.mxu0 0.0
    %5106 = vmatprep.subr.mxu0 0.0
    %5107 = vmatpush1.xpose.msra.mxu0 0.0
    %5108 = vmatprep.subr.mxu0 0.0
    %5109 = vmatpush1.xpose.msra.mxu0 0.0
    %5110 = vmatprep.subr.mxu0 0.0
    %5111 = vmatpush1.xpose.msra.mxu0 0.0
    %5112 = vmatprep.subr.mxu0 0.0
    %5113 = vmatpush1.xpose.msra.mxu0 0.0
    %5114 = vmatprep.subr.mxu0 0.0
    %5115 = vmatpush1.xpose.msra.mxu0 0.0
    %5116 = vmatprep.subr.mxu0 0.0
    %5117 = vmatpush1.xpose.msra.mxu0 0.0
    %5118 = vmatprep.subr.mxu0 0.0
    %5119 = vmatpush1.xpose.msra.mxu0 0.0
    %5120 = vmatprep.subr.mxu0 0.0
    %5121 = vmatpush1.xpose.msra.mxu0 0.0
    %5122 = vmatprep.subr.mxu0 0.0
    %5123 = vmatpush1.xpose.msra.mxu0 0.0
    %5124 = vmatprep.subr.mxu0 0.0
    %5125 = vmatpush1.xpose.msra.mxu0 0.0
    %5126 = vmatprep.subr.mxu0 0.0
    %5127 = vmatpush1.xpose.msra.mxu0 0.0
    %5128 = vmatprep.subr.mxu0 0.0
    %5129 = vmatpush1.xpose.msra.mxu0 0.0
    %5130 = vmatprep.subr.mxu0 0.0
    %5131 = vmatpush1.xpose.msra.mxu0 0.0
    %5132 = vmatprep.subr.mxu0 0.0
    %5133 = vmatpush1.xpose.msra.mxu0 0.0
    %5134 = vmatprep.subr.mxu0 0.0
    %5135 = vmatpush1.xpose.msra.mxu0 0.0
    %5136 = vmatprep.subr.mxu0 0.0
    %5137 = vmatpush1.xpose.msra.mxu0 0.0
    %5138 = vmatprep.subr.mxu0 0.0
    %5139 = vmatpush1.xpose.msra.mxu0 0.0
    %5140 = vmatprep.subr.mxu0 0.0
    %5141 = vmatpush1.xpose.msra.mxu0 0.0
    %5142 = vmatprep.mubr.f32.mxu0 0.0
    %5143 = vmatmul.mubr.f32.gmra.mrb[0].mxu0 0.0
    %v5144 = vpop.f32.mrb[0].mxu0
    %v5145 = vadd.f32 0.0, %v5144
    %v5146 = vpop.f32.mrb[0].mxu0
    %5147 = vdwg.mxu0
    %5148 = vmatprep.subr.mxu0 0.0
    %v5149 = vand.u32 %v5076, 4294901760
    %v5150 = vsub.f32 %v5076, %v5149
    %v5151 = vand.u32 %v5150, 4294901760
    %v5152 = vsub.f32 %v5150, %v5151
    %v5153 = vand.u32 %v5152, 4294901760
    %5154 = vmatpush1.xpose.msra.mxu0 %v5153
    %5155 = vmatprep.subr.mxu0 0.0
    %5156 = vmatpush1.xpose.msra.mxu0 0.0
    %5157 = vmatprep.subr.mxu0 0.0
    %5158 = vmatpush1.xpose.msra.mxu0 0.0
    %5159 = vmatprep.subr.mxu0 0.0
    %5160 = vmatpush1.xpose.msra.mxu0 0.0
    %5161 = vmatprep.subr.mxu0 0.0
    %5162 = vmatpush1.xpose.msra.mxu0 0.0
    %5163 = vmatprep.subr.mxu0 0.0
    %5164 = vmatpush1.xpose.msra.mxu0 0.0
    %5165 = vmatprep.subr.mxu0 0.0
    %5166 = vmatpush1.xpose.msra.mxu0 0.0
    %5167 = vmatprep.subr.mxu0 0.0
    %5168 = vmatpush1.xpose.msra.mxu0 0.0
    %5169 = vmatprep.subr.mxu0 0.0
    %5170 = vmatpush1.xpose.msra.mxu0 0.0
    %5171 = vmatprep.subr.mxu0 0.0
    %5172 = vmatpush1.xpose.msra.mxu0 0.0
    %5173 = vmatprep.subr.mxu0 0.0
    %5174 = vmatpush1.xpose.msra.mxu0 0.0
    %5175 = vmatprep.subr.mxu0 0.0
    %5176 = vmatpush1.xpose.msra.mxu0 0.0
    %5177 = vmatprep.subr.mxu0 0.0
    %5178 = vmatpush1.xpose.msra.mxu0 0.0
    %5179 = vmatprep.subr.mxu0 0.0
    %5180 = vmatpush1.xpose.msra.mxu0 0.0
    %5181 = vmatprep.subr.mxu0 0.0
    %5182 = vmatpush1.xpose.msra.mxu0 0.0
    %5183 = vmatprep.subr.mxu0 0.0
    %5184 = vmatpush1.xpose.msra.mxu0 0.0
    %5185 = vmatprep.subr.mxu0 0.0
    %5186 = vmatpush1.xpose.msra.mxu0 0.0
    %5187 = vmatprep.subr.mxu0 0.0
    %5188 = vmatpush1.xpose.msra.mxu0 0.0
    %5189 = vmatprep.subr.mxu0 0.0
    %5190 = vmatpush1.xpose.msra.mxu0 0.0
    %5191 = vmatprep.subr.mxu0 0.0
    %5192 = vmatpush1.xpose.msra.mxu0 0.0
    %5193 = vmatprep.subr.mxu0 0.0
    %5194 = vmatpush1.xpose.msra.mxu0 0.0
    %5195 = vmatprep.subr.mxu0 0.0
    %5196 = vmatpush1.xpose.msra.mxu0 0.0
    %5197 = vmatprep.subr.mxu0 0.0
    %5198 = vmatpush1.xpose.msra.mxu0 0.0
    %5199 = vmatprep.subr.mxu0 0.0
    %5200 = vmatpush1.xpose.msra.mxu0 0.0
    %5201 = vmatprep.subr.mxu0 0.0
    %5202 = vmatpush1.xpose.msra.mxu0 0.0
    %5203 = vmatprep.subr.mxu0 0.0
    %5204 = vmatpush1.xpose.msra.mxu0 0.0
    %5205 = vmatprep.subr.mxu0 0.0
    %5206 = vmatpush1.xpose.msra.mxu0 0.0
    %5207 = vmatprep.subr.mxu0 0.0
    %5208 = vmatpush1.xpose.msra.mxu0 0.0
    %5209 = vmatprep.subr.mxu0 0.0
    %5210 = vmatpush1.xpose.msra.mxu0 0.0
    %5211 = vmatprep.subr.mxu0 0.0
    %5212 = vmatpush1.xpose.msra.mxu0 0.0
    %5213 = vmatprep.subr.mxu0 0.0
    %5214 = vmatpush1.xpose.msra.mxu0 0.0
    %5215 = vmatprep.subr.mxu0 0.0
    %5216 = vmatpush1.xpose.msra.mxu0 0.0
    %5217 = vmatprep.mubr.f32.mxu0 0.0
    %5218 = vmatmul.mubr.f32.gmra.mrb[0].mxu0 1.0
    %v5219 = vpop.f32.mrb[0].mxu0
    %v5220 = vadd.f32 %v5145, %v5219
    %v5221 = vpop.f32.mrb[0].mxu0
    %5222 = vdwg.mxu0
    %5223 = vmatprep.subr.mxu0 0.0
    %v5224 = vand.u32 %v5076, 4294901760
    %v5225 = vsub.f32 %v5076, %v5224
    %5226 = vmatpush1.xpose.msra.mxu0 %v5225
    %5227 = vmatprep.subr.mxu0 0.0
    %5228 = vmatpush1.xpose.msra.mxu0 0.0
    %5229 = vmatprep.subr.mxu0 0.0
    %5230 = vmatpush1.xpose.msra.mxu0 0.0
    %5231 = vmatprep.subr.mxu0 0.0
    %5232 = vmatpush1.xpose.msra.mxu0 0.0
    %5233 = vmatprep.subr.mxu0 0.0
    %5234 = vmatpush1.xpose.msra.mxu0 0.0
    %5235 = vmatprep.subr.mxu0 0.0
    %5236 = vmatpush1.xpose.msra.mxu0 0.0
    %5237 = vmatprep.subr.mxu0 0.0
    %5238 = vmatpush1.xpose.msra.mxu0 0.0
    %5239 = vmatprep.subr.mxu0 0.0
    %5240 = vmatpush1.xpose.msra.mxu0 0.0
    %5241 = vmatprep.subr.mxu0 0.0
    %5242 = vmatpush1.xpose.msra.mxu0 0.0
    %5243 = vmatprep.subr.mxu0 0.0
    %5244 = vmatpush1.xpose.msra.mxu0 0.0
    %5245 = vmatprep.subr.mxu0 0.0
    %5246 = vmatpush1.xpose.msra.mxu0 0.0
    %5247 = vmatprep.subr.mxu0 0.0
    %5248 = vmatpush1.xpose.msra.mxu0 0.0
    %5249 = vmatprep.subr.mxu0 0.0
    %5250 = vmatpush1.xpose.msra.mxu0 0.0
    %5251 = vmatprep.subr.mxu0 0.0
    %5252 = vmatpush1.xpose.msra.mxu0 0.0
    %5253 = vmatprep.subr.mxu0 0.0
    %5254 = vmatpush1.xpose.msra.mxu0 0.0
    %5255 = vmatprep.subr.mxu0 0.0
    %5256 = vmatpush1.xpose.msra.mxu0 0.0
    %5257 = vmatprep.subr.mxu0 0.0
    %5258 = vmatpush1.xpose.msra.mxu0 0.0
    %5259 = vmatprep.subr.mxu0 0.0
    %5260 = vmatpush1.xpose.msra.mxu0 0.0
    %5261 = vmatprep.subr.mxu0 0.0
    %5262 = vmatpush1.xpose.msra.mxu0 0.0
    %5263 = vmatprep.subr.mxu0 0.0
    %5264 = vmatpush1.xpose.msra.mxu0 0.0
    %5265 = vmatprep.subr.mxu0 0.0
    %5266 = vmatpush1.xpose.msra.mxu0 0.0
    %5267 = vmatprep.subr.mxu0 0.0
    %5268 = vmatpush1.xpose.msra.mxu0 0.0
    %5269 = vmatprep.subr.mxu0 0.0
    %5270 = vmatpush1.xpose.msra.mxu0 0.0
    %5271 = vmatprep.subr.mxu0 0.0
    %5272 = vmatpush1.xpose.msra.mxu0 0.0
    %5273 = vmatprep.subr.mxu0 0.0
    %5274 = vmatpush1.xpose.msra.mxu0 0.0
    %5275 = vmatprep.subr.mxu0 0.0
    %5276 = vmatpush1.xpose.msra.mxu0 0.0
    %5277 = vmatprep.subr.mxu0 0.0
    %5278 = vmatpush1.xpose.msra.mxu0 0.0
    %5279 = vmatprep.subr.mxu0 0.0
    %5280 = vmatpush1.xpose.msra.mxu0 0.0
    %5281 = vmatprep.subr.mxu0 0.0
    %5282 = vmatpush1.xpose.msra.mxu0 0.0
    %5283 = vmatprep.subr.mxu0 0.0
    %5284 = vmatpush1.xpose.msra.mxu0 0.0
    %5285 = vmatprep.subr.mxu0 0.0
    %5286 = vmatpush1.xpose.msra.mxu0 0.0
    %5287 = vmatprep.subr.mxu0 0.0
    %5288 = vmatpush1.xpose.msra.mxu0 0.0
    %5289 = vmatprep.mubr.f32.mxu0 0.0
    %5290 = vmatmul.mubr.f32.gmra.mrb[0].mxu0 0.0
    %v5291 = vpop.f32.mrb[0].mxu0
    %v5292 = vadd.f32 %v5220, %v5291
    %v5293 = vpop.f32.mrb[0].mxu0
    %5294 = vdwg.mxu0
    %5295 = vmatprep.subr.mxu0 0.0
    %v5296 = vand.u32 %v5076, 4294901760
    %5297 = vmatpush1.xpose.msra.mxu0 %v5296
    %5298 = vmatprep.subr.mxu0 0.0
    %5299 = vmatpush1.xpose.msra.mxu0 0.0
    %5300 = vmatprep.subr.mxu0 0.0
    %5301 = vmatpush1.xpose.msra.mxu0 0.0
    %5302 = vmatprep.subr.mxu0 0.0
    %5303 = vmatpush1.xpose.msra.mxu0 0.0
    %5304 = vmatprep.subr.mxu0 0.0
    %5305 = vmatpush1.xpose.msra.mxu0 0.0
    %5306 = vmatprep.subr.mxu0 0.0
    %5307 = vmatpush1.xpose.msra.mxu0 0.0
    %5308 = vmatprep.subr.mxu0 0.0
    %5309 = vmatpush1.xpose.msra.mxu0 0.0
    %5310 = vmatprep.subr.mxu0 0.0
    %5311 = vmatpush1.xpose.msra.mxu0 0.0
    %5312 = vmatprep.subr.mxu0 0.0
    %5313 = vmatpush1.xpose.msra.mxu0 0.0
    %5314 = vmatprep.subr.mxu0 0.0
    %5315 = vmatpush1.xpose.msra.mxu0 0.0
    %5316 = vmatprep.subr.mxu0 0.0
    %5317 = vmatpush1.xpose.msra.mxu0 0.0
    %5318 = vmatprep.subr.mxu0 0.0
    %5319 = vmatpush1.xpose.msra.mxu0 0.0
    %5320 = vmatprep.subr.mxu0 0.0
    %5321 = vmatpush1.xpose.msra.mxu0 0.0
    %5322 = vmatprep.subr.mxu0 0.0
    %5323 = vmatpush1.xpose.msra.mxu0 0.0
    %5324 = vmatprep.subr.mxu0 0.0
    %5325 = vmatpush1.xpose.msra.mxu0 0.0
    %5326 = vmatprep.subr.mxu0 0.0
    %5327 = vmatpush1.xpose.msra.mxu0 0.0
    %5328 = vmatprep.subr.mxu0 0.0
    %5329 = vmatpush1.xpose.msra.mxu0 0.0
    %5330 = vmatprep.subr.mxu0 0.0
    %5331 = vmatpush1.xpose.msra.mxu0 0.0
    %5332 = vmatprep.subr.mxu0 0.0
    %5333 = vmatpush1.xpose.msra.mxu0 0.0
    %5334 = vmatprep.subr.mxu0 0.0
    %5335 = vmatpush1.xpose.msra.mxu0 0.0
    %5336 = vmatprep.subr.mxu0 0.0
    %5337 = vmatpush1.xpose.msra.mxu0 0.0
    %5338 = vmatprep.subr.mxu0 0.0
    %5339 = vmatpush1.xpose.msra.mxu0 0.0
    %5340 = vmatprep.subr.mxu0 0.0
    %5341 = vmatpush1.xpose.msra.mxu0 0.0
    %5342 = vmatprep.subr.mxu0 0.0
    %5343 = vmatpush1.xpose.msra.mxu0 0.0
    %5344 = vmatprep.subr.mxu0 0.0
    %5345 = vmatpush1.xpose.msra.mxu0 0.0
    %5346 = vmatprep.subr.mxu0 0.0
    %5347 = vmatpush1.xpose.msra.mxu0 0.0
    %5348 = vmatprep.subr.mxu0 0.0
    %5349 = vmatpush1.xpose.msra.mxu0 0.0
    %5350 = vmatprep.subr.mxu0 0.0
    %5351 = vmatpush1.xpose.msra.mxu0 0.0
    %5352 = vmatprep.subr.mxu0 0.0
    %5353 = vmatpush1.xpose.msra.mxu0 0.0
    %5354 = vmatprep.subr.mxu0 0.0
    %5355 = vmatpush1.xpose.msra.mxu0 0.0
    %5356 = vmatprep.subr.mxu0 0.0
    %5357 = vmatpush1.xpose.msra.mxu0 0.0
    %5358 = vmatprep.subr.mxu0 0.0
    %5359 = vmatpush1.xpose.msra.mxu0 0.0
    %5360 = vmatprep.mubr.f32.mxu0 0.0
    %5361 = vmatmul.mubr.f32.gmra.mrb[0].mxu0 0.0
    %v5362 = vpop.f32.mrb[0].mxu0
    %v5363 = vadd.f32 %v5292, %v5362
    %v5364 = vpop.f32.mrb[0].mxu0
    %5365 = vdwg.mxu0
    %5366 = vmatprep.subr.mxu0 0.0
    %v5367 = vand.u32 %v5076, 4294901760
    %v5368 = vsub.f32 %v5076, %v5367
    %v5369 = vand.u32 %v5368, 4294901760
    %5370 = vmatpush1.xpose.msra.mxu0 %v5369
    %5371 = vmatprep.subr.mxu0 0.0
    %5372 = vmatpush1.xpose.msra.mxu0 0.0
    %5373 = vmatprep.subr.mxu0 0.0
    %5374 = vmatpush1.xpose.msra.mxu0 0.0
    %5375 = vmatprep.subr.mxu0 0.0
    %5376 = vmatpush1.xpose.msra.mxu0 0.0
    %5377 = vmatprep.subr.mxu0 0.0
    %5378 = vmatpush1.xpose.msra.mxu0 0.0
    %5379 = vmatprep.subr.mxu0 0.0
    %5380 = vmatpush1.xpose.msra.mxu0 0.0
    %5381 = vmatprep.subr.mxu0 0.0
    %5382 = vmatpush1.xpose.msra.mxu0 0.0
    %5383 = vmatprep.subr.mxu0 0.0
    %5384 = vmatpush1.xpose.msra.mxu0 0.0
    %5385 = vmatprep.subr.mxu0 0.0
    %5386 = vmatpush1.xpose.msra.mxu0 0.0
    %5387 = vmatprep.subr.mxu0 0.0
    %5388 = vmatpush1.xpose.msra.mxu0 0.0
    %5389 = vmatprep.subr.mxu0 0.0
    %5390 = vmatpush1.xpose.msra.mxu0 0.0
    %5391 = vmatprep.subr.mxu0 0.0
    %5392 = vmatpush1.xpose.msra.mxu0 0.0
    %5393 = vmatprep.subr.mxu0 0.0
    %5394 = vmatpush1.xpose.msra.mxu0 0.0
    %5395 = vmatprep.subr.mxu0 0.0
    %5396 = vmatpush1.xpose.msra.mxu0 0.0
    %5397 = vmatprep.subr.mxu0 0.0
    %5398 = vmatpush1.xpose.msra.mxu0 0.0
    %5399 = vmatprep.subr.mxu0 0.0
    %5400 = vmatpush1.xpose.msra.mxu0 0.0
    %5401 = vmatprep.subr.mxu0 0.0
    %5402 = vmatpush1.xpose.msra.mxu0 0.0
    %5403 = vmatprep.subr.mxu0 0.0
    %5404 = vmatpush1.xpose.msra.mxu0 0.0
    %5405 = vmatprep.subr.mxu0 0.0
    %5406 = vmatpush1.xpose.msra.mxu0 0.0
    %5407 = vmatprep.subr.mxu0 0.0
    %5408 = vmatpush1.xpose.msra.mxu0 0.0
    %5409 = vmatprep.subr.mxu0 0.0
    %5410 = vmatpush1.xpose.msra.mxu0 0.0
    %5411 = vmatprep.subr.mxu0 0.0
    %5412 = vmatpush1.xpose.msra.mxu0 0.0
    %5413 = vmatprep.subr.mxu0 0.0
    %5414 = vmatpush1.xpose.msra.mxu0 0.0
    %5415 = vmatprep.subr.mxu0 0.0
    %5416 = vmatpush1.xpose.msra.mxu0 0.0
    %5417 = vmatprep.subr.mxu0 0.0
    %5418 = vmatpush1.xpose.msra.mxu0 0.0
    %5419 = vmatprep.subr.mxu0 0.0
    %5420 = vmatpush1.xpose.msra.mxu0 0.0
    %5421 = vmatprep.subr.mxu0 0.0
    %5422 = vmatpush1.xpose.msra.mxu0 0.0
    %5423 = vmatprep.subr.mxu0 0.0
    %5424 = vmatpush1.xpose.msra.mxu0 0.0
    %5425 = vmatprep.subr.mxu0 0.0
    %5426 = vmatpush1.xpose.msra.mxu0 0.0
    %5427 = vmatprep.subr.mxu0 0.0
    %5428 = vmatpush1.xpose.msra.mxu0 0.0
    %5429 = vmatprep.subr.mxu0 0.0
    %5430 = vmatpush1.xpose.msra.mxu0 0.0
    %5431 = vmatprep.subr.mxu0 0.0
    %5432 = vmatpush1.xpose.msra.mxu0 0.0
    %5433 = vmatprep.mubr.f32.mxu0 0.0
    %5434 = vmatmul.mubr.f32.gmra.mrb[0].mxu0 1.0
    %v5435 = vpop.f32.mrb[0].mxu0
    %v5436 = vadd.f32 %v5363, %v5435
    %v5437 = vpop.f32.mrb[0].mxu0
    %5438 = vdwg.mxu0
    %5439 = vmatprep.subr.mxu0 0.0
    %v5440 = vand.u32 %v5076, 4294901760
    %5441 = vmatpush1.xpose.msra.mxu0 %v5440
    %5442 = vmatprep.subr.mxu0 0.0
    %5443 = vmatpush1.xpose.msra.mxu0 0.0
    %5444 = vmatprep.subr.mxu0 0.0
    %5445 = vmatpush1.xpose.msra.mxu0 0.0
    %5446 = vmatprep.subr.mxu0 0.0
    %5447 = vmatpush1.xpose.msra.mxu0 0.0
    %5448 = vmatprep.subr.mxu0 0.0
    %5449 = vmatpush1.xpose.msra.mxu0 0.0
    %5450 = vmatprep.subr.mxu0 0.0
    %5451 = vmatpush1.xpose.msra.mxu0 0.0
    %5452 = vmatprep.subr.mxu0 0.0
    %5453 = vmatpush1.xpose.msra.mxu0 0.0
    %5454 = vmatprep.subr.mxu0 0.0
    %5455 = vmatpush1.xpose.msra.mxu0 0.0
    %5456 = vmatprep.subr.mxu0 0.0
    %5457 = vmatpush1.xpose.msra.mxu0 0.0
    %5458 = vmatprep.subr.mxu0 0.0
    %5459 = vmatpush1.xpose.msra.mxu0 0.0
    %5460 = vmatprep.subr.mxu0 0.0
    %5461 = vmatpush1.xpose.msra.mxu0 0.0
    %5462 = vmatprep.subr.mxu0 0.0
    %5463 = vmatpush1.xpose.msra.mxu0 0.0
    %5464 = vmatprep.subr.mxu0 0.0
    %5465 = vmatpush1.xpose.msra.mxu0 0.0
    %5466 = vmatprep.subr.mxu0 0.0
    %5467 = vmatpush1.xpose.msra.mxu0 0.0
    %5468 = vmatprep.subr.mxu0 0.0
    %5469 = vmatpush1.xpose.msra.mxu0 0.0
    %5470 = vmatprep.subr.mxu0 0.0
    %5471 = vmatpush1.xpose.msra.mxu0 0.0
    %5472 = vmatprep.subr.mxu0 0.0
    %5473 = vmatpush1.xpose.msra.mxu0 0.0
    %5474 = vmatprep.subr.mxu0 0.0
    %5475 = vmatpush1.xpose.msra.mxu0 0.0
    %5476 = vmatprep.subr.mxu0 0.0
    %5477 = vmatpush1.xpose.msra.mxu0 0.0
    %5478 = vmatprep.subr.mxu0 0.0
    %5479 = vmatpush1.xpose.msra.mxu0 0.0
    %5480 = vmatprep.subr.mxu0 0.0
    %5481 = vmatpush1.xpose.msra.mxu0 0.0
    %5482 = vmatprep.subr.mxu0 0.0
    %5483 = vmatpush1.xpose.msra.mxu0 0.0
    %5484 = vmatprep.subr.mxu0 0.0
    %5485 = vmatpush1.xpose.msra.mxu0 0.0
    %5486 = vmatprep.subr.mxu0 0.0
    %5487 = vmatpush1.xpose.msra.mxu0 0.0
    %5488 = vmatprep.subr.mxu0 0.0
    %5489 = vmatpush1.xpose.msra.mxu0 0.0
    %5490 = vmatprep.subr.mxu0 0.0
    %5491 = vmatpush1.xpose.msra.mxu0 0.0
    %5492 = vmatprep.subr.mxu0 0.0
    %5493 = vmatpush1.xpose.msra.mxu0 0.0
    %5494 = vmatprep.subr.mxu0 0.0
    %5495 = vmatpush1.xpose.msra.mxu0 0.0
    %5496 = vmatprep.subr.mxu0 0.0
    %5497 = vmatpush1.xpose.msra.mxu0 0.0
    %5498 = vmatprep.subr.mxu0 0.0
    %5499 = vmatpush1.xpose.msra.mxu0 0.0
    %5500 = vmatprep.subr.mxu0 0.0
    %5501 = vmatpush1.xpose.msra.mxu0 0.0
    %5502 = vmatprep.subr.mxu0 0.0
    %5503 = vmatpush1.xpose.msra.mxu0 0.0
    %5504 = vmatprep.mubr.f32.mxu0 0.0
    %5505 = vmatmul.mubr.f32.gmra.mrb[0].mxu0 1.0
    %v5506 = vpop.f32.mrb[0].mxu0
    %v5507 = vadd.f32 %v5436, %v5506
    %v5508 = vpop.f32.mrb[0].mxu0
    %5509 = vdwg.mxu0
    %5511 = vset.pattern.permute.xlu0 0
    %5512 = vperm.xlu0 %5511, %v5073
    %v5513 = vpop.permute.xlu0 %5512
    %v5515 = vlaneseq
    %v5516 = vshrl.u32 %v5515, 7
    %v5517 = vsub.s32 0, %v5516
    %v5518 = vrot.slane %v5507, %v5517
    %v5519 = vadd.f32 %v5513, %v5518
    %v5520 = vmul.f32 %v4639, 2.0
    %v5521 = vsub.f32 %v5519, %v5520
    %v5522 = vmax.f32 %v5521, 0.0
    %5523 = vst.msk [vmem:[#allocation10] sm:$0xff] %vm587, %v5522
    // Predicated region
    $region42: #{tpu_custom_call.1} parent=1 // pred_check
      _
    $region43: #{tpu_custom_call.1} parent=1 // pred_check_branch
      %5525 = sbr.rel (0) target = $region45
    $region44: #{tpu_custom_call.1} parent=1 // pred_region
      %s5527 = ssub.s32 128, 128
      %5528 = vsyncadd [#allocation4], %s5527
      %s5530 = sshll.u32 [#allocation10], 4
      %s5531 = int_to_ptr.vmem [resolvable:$true] %s5530
      %5533 = dma.vmem_to_hbm [thread:$0]  %s5531, 128, %s6, [#allocation4]
    $region45: #{tpu_custom_call.1} parent=1 // pred_fallthru
      _
    // Predicated region
    $region46: #{tpu_custom_call.1} parent=1 // pred_check
      _
    $region47: #{tpu_custom_call.1} parent=1 // pred_check_branch
      %5535 = sbr.rel (0) target = $region49
    $region48: #{tpu_custom_call.1} parent=1 // pred_region
      %5536 = dma.done [#allocation4], 128
    $region49: #{tpu_custom_call.1} parent=1 // pred_fallthru
      _
    %5537 = vsyncpa [#allocation3], 1
    %5538 = vsyncpa [#allocation6], 1
    %5539 = vsyncpa [#allocation9], 1
    %5540 = vsyncpa [#allocation4], 1

</llo_original>
